<compile_context>
chip_gen: v7x
topology: tpu7x:2x2x1
jax: 0.10.0
libtpu: 0.0.40
codegen_flags: <defaults>
</compile_context>

<pallas_src>
import functools

import numpy as np
import jax
import jax.numpy as jnp
from jax.experimental import pallas as pl
from jax.experimental.pallas import tpu as pltpu


# ----------------------------- Pallas kernels -----------------------------

def _global_head_kernel(n_batch, s_sp, p1_ref, m_ref, w1_ref, b1_ref,
                        w2_ref, b2_ref, sw_ref, sb_ref, sal_ref, gv_ref):
    """Fused: conv1 -> conv2 -> saliency 1x1 conv (sigmoid) -> per-image spatial max of h_g.

    p1_ref is the offset-expanded conv1 im2col matrix (9, 9 * N * S) with columns ordered
    (conv2_offset, batch, spatial); m_ref zeroes the conv2 zero-padding positions.
    """
    # conv1 (im2col matmul), ReLU, then mask out positions that are conv2 zero-padding.
    a1 = jnp.dot(w1_ref[...], p1_ref[...], preferred_element_type=jnp.float32) + b1_ref[...]
    a1 = jnp.maximum(a1, 0.0) * m_ref[...]                                   # (C1, 9*N*S)
    nl = n_batch * s_sp
    # Rebuild the conv2 im2col matrix with aligned lane slices + one sublane concat (f32,
    # 8-row pieces -> native sublane tiles), then a single K=72 MXU matmul.
    p2 = jnp.concatenate([a1[:, o * nl:(o + 1) * nl] for o in range(9)], axis=0)     # (72, N*S)
    hg = jnp.dot(w2_ref[...], p2.astype(jnp.bfloat16),
                 preferred_element_type=jnp.float32) + b2_ref[...]
    hg = jnp.maximum(hg, 0.0)                                                 # (Cg, N*S)
    sal = jnp.dot(sw_ref[...], hg.astype(jnp.bfloat16),
                  preferred_element_type=jnp.float32) + sb_ref[...]
    sal_ref[...] = jax.nn.sigmoid(sal)                                        # (ncls, N*S) lane-dense
    for b in range(n_batch):                                                  # spatial max of h_g
        gv_ref[:, b:b + 1] = jnp.max(hg[:, b * s_sp:(b + 1) * s_sp], axis=1, keepdims=True)


def pallas_global_head(p1x, mask, w1, b1, w2p, b2, sw, sb, n_batch, s_sp):
    ncls, cg = sw.shape[0], w2p.shape[0]

    def fs(shape):
        return pl.BlockSpec(shape, lambda i: (0,) * len(shape))

    return pl.pallas_call(
        functools.partial(_global_head_kernel, n_batch, s_sp),
        out_shape=(jax.ShapeDtypeStruct((ncls, n_batch * s_sp), jnp.float32),
                   jax.ShapeDtypeStruct((cg, n_batch), jnp.float32)),
        grid=(1,),
        in_specs=[fs(p1x.shape), fs(mask.shape), fs(w1.shape), fs(b1.shape),
                  fs(w2p.shape), fs(b2.shape), fs(sw.shape), fs(sb.shape)],
        out_specs=(fs((ncls, n_batch * s_sp)), fs((cg, n_batch))),
        compiler_params=pltpu.CompilerParams(dimension_semantics=("arbitrary",)),
    )(p1x, mask, w1, b1, w2p, b2, sw, sb)


def _local_attn_kernel(latent, pb_ref, wsp_ref, blf_ref, wfc_ref, bfc_ref,
                       uv_ref, wa_ref, bm_ref, bmt_ref, gv_ref,
                       wpg_ref, wpz_ref, bpk_ref, out_ref, attn_ref):
    """Fused: local conv+flatten+fc (all crops batched into M) + gated MIL attention
    (vectorized over batch via block-diagonal mask matmuls) + classifier + fusion linear."""
    # Local conv + PyTorch CHW flatten as ONE matmul (weight is kron(Wl^T, I_S)).
    lc = jnp.dot(pb_ref[...], wsp_ref[...], preferred_element_type=jnp.float32) + blf_ref[...]
    lc = jnp.maximum(lc, 0.0)                                                 # (NK, Cl*S)
    # fc to 512: single K=1024 matmul, M=NK.
    h = jnp.dot(lc.astype(jnp.bfloat16), wfc_ref[...],
                preferred_element_type=jnp.float32) + bfc_ref[...]
    h = jnp.maximum(h, 0.0)                                                   # (NK, 512)
    # Gated attention: one MXU pass over the concatenated U|V weight.
    gp = jnp.dot(h.astype(jnp.bfloat16), uv_ref[...], preferred_element_type=jnp.float32)
    gated = jax.nn.sigmoid(gp[:, :latent]) * jnp.tanh(gp[:, latent:])         # (NK, L)
    logits = jnp.dot(gated, wa_ref[...], preferred_element_type=jnp.float32)  # (NK, 1)
    # Global max shift (softmax is invariant to any constant shift -> per-group softmax intact).
    logits = logits - jnp.max(logits, axis=0, keepdims=True)
    e = jnp.exp(logits)                                                       # (NK, 1)
    gsum = jnp.dot(bm_ref[...], e, preferred_element_type=jnp.float32)        # (N, 1) group sums
    inv = 1.0 / gsum
    attn = e * jnp.dot(bmt_ref[...], inv, preferred_element_type=jnp.float32)  # (NK, 1)
    attn_ref[...] = attn
    z = jnp.dot(bm_ref[...], attn * h, preferred_element_type=jnp.float32)    # (N, 512)
    # Packed classifier + fusion: columns [y_fusion | y_local], single store.
    out = (jnp.dot(gv_ref[...], wpg_ref[...], preferred_element_type=jnp.float32)
           + jnp.dot(z.astype(jnp.bfloat16), wpz_ref[...], preferred_element_type=jnp.float32)
           + bpk_ref[...])
    out_ref[...] = jax.nn.sigmoid(out)                                        # (N, 2*nb)


def pallas_local_attn(pb, wsp, blf, wfc, bfc, uv, wa, bm, bmt, gv, wpg, wpz, bpk, latent):
    nk = pb.shape[0]
    n_batch = gv.shape[0]
    nout = wpz.shape[1]
    args = (pb, wsp, blf, wfc, bfc, uv, wa, bm, bmt, gv, wpg, wpz, bpk)

    def fs(shape):
        return pl.BlockSpec(shape, lambda i: (0,) * len(shape))

    return pl.pallas_call(
        functools.partial(_local_attn_kernel, latent),
        out_shape=(jax.ShapeDtypeStruct((n_batch, nout), jnp.float32),
                   jax.ShapeDtypeStruct((nk, 1), jnp.float32)),
        grid=(1,),
        in_specs=[fs(a.shape) for a in args],
        out_specs=(fs((n_batch, nout)), fs((nk, 1))),
        compiler_params=pltpu.CompilerParams(dimension_semantics=("arbitrary",)),
    )(*args)


# ----------------------------- JAX glue (patches, ROI, crops) -----------------------------

def im2col_t(x_nchw, kh, kw, stride, pad):
    """NCHW -> (Cin*kh*kw, N*Ho*Wo) patch matrix (PyTorch weight-flatten order), transposed."""
    n, c, h, w = x_nchw.shape
    xp = jnp.pad(x_nchw, ((0, 0), (0, 0), (pad, pad), (pad, pad)))
    ho = (h + 2 * pad - kh) // stride + 1
    wo = (w + 2 * pad - kw) // stride + 1
    rows = []
    for ci in range(c):
        for i in range(kh):
            for j in range(kw):
                rows.append(xp[:, ci, i:i + stride * ho:stride, j:j + stride * wo:stride])
    col = jnp.stack(rows, axis=0)                       # (C*kh*kw, N, Ho, Wo)
    return col.reshape(c * kh * kw, n * ho * wo), ho, wo


def build_global_patches(x):
    """Offset-expanded conv1 im2col matrix + validity mask for the fused global head.

    Columns ordered (conv2_offset, batch, conv2_spatial); invalid columns correspond to conv2
    zero-padding positions and are zeroed by the mask inside the kernel.
    """
    n = x.shape[0]
    p1, h1, w1 = im2col_t(x, 3, 3, 2, 1)                # conv1 patches, (9, N*h1*w1)
    p1 = p1.reshape(9, n, h1, w1)
    hh = (h1 + 2 - 3) // 2 + 1                          # conv2 output size (3x3, stride 2, pad 1)
    ww = (w1 + 2 - 3) // 2 + 1
    yy, xx = np.meshgrid(np.arange(hh), np.arange(ww), indexing="ij")
    di = (np.arange(9) // 3)[:, None, None]
    dj = (np.arange(9) % 3)[:, None, None]
    ay = 2 * yy[None] + di - 1                          # conv1-output row needed per (offset, y, x)
    ax = 2 * xx[None] + dj - 1
    valid = ((ay >= 0) & (ax >= 0)).astype(np.float32)  # out-of-range only on the -1 side
    ayc = np.clip(ay, 0, h1 - 1)
    axc = np.clip(ax, 0, w1 - 1)
    p1x = p1[:, :, ayc, axc]                            # (9, N, 9, hh, ww)
    p1x = p1x.transpose(0, 2, 1, 3, 4).reshape(9, 9 * n * hh * ww)
    mask = np.broadcast_to(valid[:, None], (9, n, hh, ww)).reshape(1, -1)
    return p1x, jnp.asarray(mask, jnp.float32), hh, ww


def top_t_percent_aggregation(saliency, percent_t):
    # TODO(synk): top-k selection has no clean Pallas lowering; done in plain JAX.
    n, c, h, w = saliency.shape
    flat = saliency.reshape(n, c, h * w)
    top_t = max(1, int(round(h * w * percent_t)))       # clamp >= 1
    vals, _ = jax.lax.top_k(flat, top_t)
    return vals.mean(axis=2)                            # (N, C)


def retrieve_roi_crops(saliency, crop_shape_cam, num_crops):
    """Greedy argmax-of-window ROI selection (RetrieveROIModule.forward)."""
    n, _, h, w = saliency.shape
    flat = saliency.reshape(n, saliency.shape[1], -1)
    mx = flat.max(axis=2)[:, :, None, None]
    mn = flat.min(axis=2)[:, :, None, None]
    rng = jnp.where(mx - mn > 0, mx - mn, 1.0)
    norm = (saliency - mn) / rng
    current = norm.sum(axis=1)                          # (N, h, w)
    ch, cw = crop_shape_cam
    hp, wp = h - ch + 1, w - cw + 1
    yy = jnp.arange(h)[None, :, None]
    xx = jnp.arange(w)[None, None, :]
    positions = []
    for _ in range(num_crops):
        pooled = jnp.zeros((n, hp, wp), dtype=current.dtype)
        for di in range(ch):
            for dj in range(cw):
                pooled = pooled + current[:, di:di + hp, dj:dj + wp]
        pooled = pooled / float(ch * cw)
        idx = jnp.argmax(pooled.reshape(n, -1), axis=1)
        py = (idx // wp).astype(jnp.int32)
        px = (idx % wp).astype(jnp.int32)
        positions.append(jnp.stack([py, px], axis=1))
        mask = ~((yy >= py[:, None, None]) & (yy < py[:, None, None] + ch) &
                 (xx >= px[:, None, None]) & (xx < px[:, None, None] + cw))
        current = current * mask.astype(current.dtype)
    return jnp.stack(positions, axis=1)                 # (N, num_crops, 2)


def convert_crop_position(crops_small, cam_size, x_shape):
    h, w = cam_size
    big_h, big_w = x_shape[2], x_shape[3]
    prop_y = crops_small[:, :, 0].astype(jnp.float32) / h
    prop_x = crops_small[:, :, 1].astype(jnp.float32) / w
    return jnp.stack([jnp.round(prop_y * big_h), jnp.round(prop_x * big_w)], axis=-1)


def retrieve_crop(x, crop_positions, crop_shape):
    """Upper-left crops clipped to image bounds (crops channel 0, matching the PyTorch module)."""
    _, _, big_h, big_w = x.shape
    ch, cw = crop_shape
    pos = crop_positions.astype(jnp.int32)
    py = jnp.clip(pos[:, :, 0], 0, big_h - ch)
    px = jnp.clip(pos[:, :, 1], 0, big_w - cw)

    def crop_one(img, y, xx):
        return jax.lax.dynamic_slice(img, (y, xx), (ch, cw))

    def per_batch(img, ys, xs):
        return jax.vmap(lambda y, xx: crop_one(img, y, xx))(ys, xs)

    return jax.vmap(per_batch)(x[:, 0], py, px)         # (N, K, ch, cw)


# ----------------------------- GMIC forward -----------------------------

def gmic_forward(x, params, config):
    n = x.shape[0]
    f32, bf16 = jnp.float32, jnp.bfloat16

    # --- Fused global head K1: conv1 + conv2 + saliency + spatial-max ---
    p1x, mask, hh, ww = build_global_patches(x)                         # (9, 9*N*64), (1, ...)
    w1 = params["gconv1_w"].reshape(params["gconv1_w"].shape[0], -1).astype(bf16)     # (8, 9)
    b1 = params["gconv1_b"].reshape(-1, 1)
    # conv2 weight permuted so columns are (offset, in_channel), matching in-kernel concat order.
    w2p = params["gconv2_w"].transpose(0, 2, 3, 1).reshape(params["gconv2_w"].shape[0], -1).astype(bf16)
    b2 = params["gconv2_b"].reshape(-1, 1)
    sw = params["sal_w"].T.astype(bf16)                                 # (ncls, 32)
    sb = params["sal_b"].reshape(-1, 1)
    s_sp = hh * ww
    sal_t, gv_t = pallas_global_head(p1x.astype(bf16), mask, w1, b1, w2p, b2, sw, sb, n, s_sp)
    n_cls = params["sal_w"].shape[1]
    saliency_map = sal_t.reshape(n_cls, n, hh, ww).transpose(1, 0, 2, 3)  # (N, ncls, 8, 8)
    global_vec = gv_t.T                                                 # (N, 32)

    # --- TopTPercentAggregation (JAX glue) ---
    y_global = top_t_percent_aggregation(saliency_map, config["percent_t"])

    # --- ROI retrieval + crop position conversion + cropping (JAX glue) ---
    crop_h, crop_w = config["crop_shape"]
    ch_cam = int(round(crop_h * hh / x.shape[2]))
    cw_cam = int(round(crop_w * ww / x.shape[3]))
    small_x_locations = retrieve_roi_crops(saliency_map, (ch_cam, cw_cam), config["K"])
    patch_locations = convert_crop_position(small_x_locations, (hh, ww), x.shape)
    crops = retrieve_crop(x, patch_locations, config["crop_shape"])     # (N, K, ch, cw)
    k_crops = crops.shape[1]
    nk = n * k_crops

    # --- Local + attention + classifier/fusion inputs (all layout prep in glue) ---
    crops_var = crops.reshape(nk, 1, crop_h, crop_w)
    plt_, lho, lwo = im2col_t(crops_var, 3, 3, 1, 1)                    # (9, NK*64)
    s_loc = lho * lwo
    p_big = plt_.reshape(9, nk, s_loc).transpose(1, 0, 2).reshape(nk, 9 * s_loc).astype(bf16)
    cl = params["lconv_w"].shape[0]
    wl2d = params["lconv_w"].reshape(cl, 9)
    # Kronecker-expanded conv weight: row (p*S+s), col (c*S+t) = Wl[c,p] * delta(s,t)
    # -> conv + CHW flatten become one matmul, no in-kernel relayout.
    w_sp = jnp.einsum("cp,st->psct", wl2d,
                      jnp.eye(s_loc, dtype=f32)).reshape(9 * s_loc, cl * s_loc).astype(bf16)
    blf = jnp.repeat(params["lconv_b"], s_loc)[None, :]                 # (1, cl*S)
    d_local = params["lfc_w"].shape[1]
    wfc = params["lfc_w"].astype(bf16)                                  # (cl*S, 512)
    bfc = params["lfc_b"][None, :]
    uv = jnp.concatenate([params["U"], params["V"]], axis=1).astype(bf16)   # (512, 2L)
    wa = params["w_attn"]                                               # (L, 1)
    latent = params["w_attn"].shape[0]
    # Block-diagonal group masks for the batch-vectorized MIL softmax / weighted sum.
    grp = jnp.arange(nk) // k_crops
    bm = (jnp.arange(n)[:, None] == grp[None, :]).astype(f32)           # (N, NK)
    bmt = bm.T                                                          # (NK, N)
    cg = global_vec.shape[1]
    nb = params["Wc"].shape[1]
    wpg = jnp.concatenate([params["fusion_w"][:cg], jnp.zeros((cg, nb), f32)], axis=1)   # (32, 2nb)
    wpz = jnp.concatenate([params["fusion_w"][cg:], params["Wc"]], axis=1).astype(bf16)  # (512, 2nb)
    bpk = jnp.concatenate([params["fusion_b"], jnp.zeros((nb,), f32)])[None, :]          # (1, 2nb)

    # --- Fused K2: local net + gated MIL attention + classifier + fusion ---
    out_probs, attn_col = pallas_local_attn(
        p_big, w_sp, blf, wfc, bfc, uv, wa, bm, bmt, global_vec, wpg, wpz, bpk, latent)
    y_fusion = out_probs[:, :nb]
    y_local = out_probs[:, nb:]
    patch_attns = attn_col.reshape(n, k_crops)

    return y_fusion, y_global, y_local, patch_attns, saliency_map


# ----------------------------- deterministic parameter init -----------------------------

def init_params(key):
    ks = jax.random.split(key, 10)

    def w(k, shape, scale=0.1):
        return jax.random.normal(k, shape, jnp.float32) * scale

    d_local = 512           # local feature dim (as in GMIC)
    n_birads = 3
    return {
        "gconv1_w": w(ks[0], (8, 1, 3, 3)),
        "gconv1_b": jnp.zeros((8,), jnp.float32),
        "gconv2_w": w(ks[1], (32, 8, 3, 3)),
        "gconv2_b": jnp.zeros((32,), jnp.float32),
        "sal_w": w(ks[2], (32, 1)),                        # 1x1 saliency conv
        "sal_b": jnp.zeros((1,), jnp.float32),
        "lconv_w": w(ks[3], (16, 1, 3, 3)),
        "lconv_b": jnp.zeros((16,), jnp.float32),
        "lfc_w": w(ks[4], (16 * 8 * 8, d_local), scale=0.05),
        "lfc_b": jnp.zeros((d_local,), jnp.float32),
        "U": w(ks[5], (d_local, 128), scale=0.05),         # mil_attn_U (no bias)
        "V": w(ks[6], (d_local, 128), scale=0.05),         # mil_attn_V (no bias)
        "w_attn": w(ks[7], (128, 1), scale=0.05),          # mil_attn_w (no bias)
        "Wc": w(ks[8], (d_local, n_birads), scale=0.05),   # classifier_linear (no bias)
        "fusion_w": w(ks[9], (32 + d_local, n_birads), scale=0.05),
        "fusion_b": jnp.zeros((n_birads,), jnp.float32),
    }


if __name__ == "__main__":
    key = jax.random.PRNGKey(0)
    kx, kp = jax.random.split(key)
    x = jax.random.uniform(kx, (2, 1, 32, 32), jnp.float32)   # N, C, H, W
    params = init_params(kp)
    config = {"percent_t": 0.2, "crop_shape": (8, 8), "K": 2}

    @jax.jit
    def run(x_in, p_in):
        return gmic_forward(x_in, p_in, config)

    y_fusion, y_global, y_local, patch_attns, saliency = run(x, params)
    jax.block_until_ready(y_fusion)

    assert y_fusion.shape == (2, 3)
    assert y_global.shape == (2, 1)
    assert y_local.shape == (2, 3)
    assert patch_attns.shape == (2, 2)
    assert saliency.shape == (2, 1, 8, 8)
    assert bool(jnp.all(jnp.isfinite(y_fusion)))
    assert bool(jnp.all(jnp.isfinite(patch_attns)))
    print("KERNEL_OK")
</pallas_src>

<mosaic_0001>
module attributes {stable_mosaic.version = 11 : i64} {
  func.func @_global_head_kernel(%arg0: i32, %arg1: memref<9x1152xbf16, #tpu.memory_space<vmem>>, %arg2: memref<1x1152xf32, #tpu.memory_space<vmem>>, %arg3: memref<8x9xbf16, #tpu.memory_space<vmem>>, %arg4: memref<8x1xf32, #tpu.memory_space<vmem>>, %arg5: memref<32x72xbf16, #tpu.memory_space<vmem>>, %arg6: memref<32x1xf32, #tpu.memory_space<vmem>>, %arg7: memref<1x32xbf16, #tpu.memory_space<vmem>>, %arg8: memref<1x1xf32, #tpu.memory_space<vmem>>, %arg9: memref<1x128xf32, #tpu.memory_space<vmem>>, %arg10: memref<32x2xf32, #tpu.memory_space<vmem>>) attributes {dimension_semantics = [#tpu.dimension_semantics<arbitrary>], iteration_bounds = array<i64: 1>, scalar_prefetch = 0 : i64, scratch_operands = 0 : i64, tpu.core_type = #tpu.core_type<tc>, window_params = [{pipeline_mode = #tpu.pipeline_mode<synchronous>, transform_indices = @transform_0, window_bounds = array<i64: 9, 1152>}, {pipeline_mode = #tpu.pipeline_mode<synchronous>, transform_indices = @transform_1, window_bounds = array<i64: 1, 1152>}, {pipeline_mode = #tpu.pipeline_mode<synchronous>, transform_indices = @transform_2, window_bounds = array<i64: 8, 9>}, {pipeline_mode = #tpu.pipeline_mode<synchronous>, transform_indices = @transform_3, window_bounds = array<i64: 8, 1>}, {pipeline_mode = #tpu.pipeline_mode<synchronous>, transform_indices = @transform_4, window_bounds = array<i64: 32, 72>}, {pipeline_mode = #tpu.pipeline_mode<synchronous>, transform_indices = @transform_5, window_bounds = array<i64: 32, 1>}, {pipeline_mode = #tpu.pipeline_mode<synchronous>, transform_indices = @transform_6, window_bounds = array<i64: 1, 32>}, {pipeline_mode = #tpu.pipeline_mode<synchronous>, transform_indices = @transform_7, window_bounds = array<i64: 1, 1>}, {pipeline_mode = #tpu.pipeline_mode<synchronous>, transform_indices = @transform_8, window_bounds = array<i64: 1, 128>}, {pipeline_mode = #tpu.pipeline_mode<synchronous>, transform_indices = @transform_9, window_bounds = array<i64: 32, 2>}]} {
    %c0 = arith.constant 0 : index
    %c0_0 = arith.constant 0 : index
    %0 = vector.load %arg3[%c0, %c0_0] : memref<8x9xbf16, #tpu.memory_space<vmem>>, vector<8x9xbf16>
    %c0_1 = arith.constant 0 : index
    %c0_2 = arith.constant 0 : index
    %1 = vector.load %arg1[%c0_1, %c0_2] : memref<9x1152xbf16, #tpu.memory_space<vmem>>, vector<9x1152xbf16>
    %cst = arith.constant dense<0.000000e+00> : vector<8x1152xf32>
    %2 = tpu.matmul %0, %1, %cst {dimension_numbers = #tpu.dot_dimension_numbers<[1], [0], [0], [1], [0, 0, 1, 1], [], []>} : vector<8x9xbf16>, vector<9x1152xbf16>, vector<8x1152xf32> -> vector<8x1152xf32>
    %c0_3 = arith.constant 0 : index
    %c0_4 = arith.constant 0 : index
    %3 = vector.load %arg4[%c0_3, %c0_4] : memref<8x1xf32, #tpu.memory_space<vmem>>, vector<8x1xf32>
    %4 = vector.broadcast %3 : vector<8x1xf32> to vector<8x1152xf32>
    %5 = arith.addf %2, %4 : vector<8x1152xf32>
    %cst_5 = arith.constant 0.000000e+00 : f32
    %6 = vector.broadcast %cst_5 : f32 to vector<8x1152xf32>
    %7 = arith.maximumf %5, %6 : vector<8x1152xf32>
    %c0_6 = arith.constant 0 : index
    %c0_7 = arith.constant 0 : index
    %8 = vector.load %arg2[%c0_6, %c0_7] : memref<1x1152xf32, #tpu.memory_space<vmem>>, vector<1x1152xf32>
    %9 = vector.broadcast %8 : vector<1x1152xf32> to vector<8x1152xf32>
    %10 = arith.mulf %7, %9 : vector<8x1152xf32>
    %11 = vector.extract_strided_slice %10 {offsets = [0, 0], sizes = [8, 128], strides = [1, 1]} : vector<8x1152xf32> to vector<8x128xf32>
    %12 = vector.extract_strided_slice %10 {offsets = [0, 128], sizes = [8, 128], strides = [1, 1]} : vector<8x1152xf32> to vector<8x128xf32>
    %13 = vector.extract_strided_slice %10 {offsets = [0, 256], sizes = [8, 128], strides = [1, 1]} : vector<8x1152xf32> to vector<8x128xf32>
    %14 = vector.extract_strided_slice %10 {offsets = [0, 384], sizes = [8, 128], strides = [1, 1]} : vector<8x1152xf32> to vector<8x128xf32>
    %15 = vector.extract_strided_slice %10 {offsets = [0, 512], sizes = [8, 128], strides = [1, 1]} : vector<8x1152xf32> to vector<8x128xf32>
    %16 = vector.extract_strided_slice %10 {offsets = [0, 640], sizes = [8, 128], strides = [1, 1]} : vector<8x1152xf32> to vector<8x128xf32>
    %17 = vector.extract_strided_slice %10 {offsets = [0, 768], sizes = [8, 128], strides = [1, 1]} : vector<8x1152xf32> to vector<8x128xf32>
    %18 = vector.extract_strided_slice %10 {offsets = [0, 896], sizes = [8, 128], strides = [1, 1]} : vector<8x1152xf32> to vector<8x128xf32>
    %19 = vector.extract_strided_slice %10 {offsets = [0, 1024], sizes = [8, 128], strides = [1, 1]} : vector<8x1152xf32> to vector<8x128xf32>
    %20 = tpu.concatenate %11, %12, %13, %14, %15, %16, %17, %18, %19 in 0 : vector<8x128xf32>, vector<8x128xf32>, vector<8x128xf32>, vector<8x128xf32>, vector<8x128xf32>, vector<8x128xf32>, vector<8x128xf32>, vector<8x128xf32>, vector<8x128xf32> -> vector<72x128xf32>
    %c0_8 = arith.constant 0 : index
    %c0_9 = arith.constant 0 : index
    %21 = vector.load %arg5[%c0_8, %c0_9] : memref<32x72xbf16, #tpu.memory_space<vmem>>, vector<32x72xbf16>
    %22 = arith.truncf %20 : vector<72x128xf32> to vector<72x128xbf16>
    %cst_10 = arith.constant dense<0.000000e+00> : vector<32x128xf32>
    %23 = tpu.matmul %21, %22, %cst_10 {dimension_numbers = #tpu.dot_dimension_numbers<[1], [0], [0], [1], [0, 0, 1, 1], [], []>} : vector<32x72xbf16>, vector<72x128xbf16>, vector<32x128xf32> -> vector<32x128xf32>
    %c0_11 = arith.constant 0 : index
    %c0_12 = arith.constant 0 : index
    %24 = vector.load %arg6[%c0_11, %c0_12] : memref<32x1xf32, #tpu.memory_space<vmem>>, vector<32x1xf32>
    %25 = vector.broadcast %24 : vector<32x1xf32> to vector<32x128xf32>
    %26 = arith.addf %23, %25 : vector<32x128xf32>
    %cst_13 = arith.constant 0.000000e+00 : f32
    %27 = vector.broadcast %cst_13 : f32 to vector<32x128xf32>
    %28 = arith.maximumf %26, %27 : vector<32x128xf32>
    %c0_14 = arith.constant 0 : index
    %c0_15 = arith.constant 0 : index
    %29 = vector.load %arg7[%c0_14, %c0_15] : memref<1x32xbf16, #tpu.memory_space<vmem>>, vector<1x32xbf16>
    %30 = arith.truncf %28 : vector<32x128xf32> to vector<32x128xbf16>
    %cst_16 = arith.constant dense<0.000000e+00> : vector<1x128xf32>
    %31 = tpu.matmul %29, %30, %cst_16 {dimension_numbers = #tpu.dot_dimension_numbers<[1], [0], [0], [1], [0, 0, 1, 1], [], []>} : vector<1x32xbf16>, vector<32x128xbf16>, vector<1x128xf32> -> vector<1x128xf32>
    %c0_17 = arith.constant 0 : index
    %c0_18 = arith.constant 0 : index
    %32 = vector.load %arg8[%c0_17, %c0_18] : memref<1x1xf32, #tpu.memory_space<vmem>>, vector<1x1xf32>
    %33 = vector.broadcast %32 : vector<1x1xf32> to vector<1x128xf32>
    %34 = arith.addf %31, %33 : vector<1x128xf32>
    %35 = arith.negf %34 : vector<1x128xf32>
    %36 = math.exp %35 : vector<1x128xf32>
    %cst_19 = arith.constant 1.000000e+00 : f32
    %37 = vector.broadcast %cst_19 : f32 to vector<1x128xf32>
    %38 = arith.addf %37, %36 : vector<1x128xf32>
    %39 = arith.divf %37, %38 : vector<1x128xf32>
    %c0_20 = arith.constant 0 : index
    %c0_21 = arith.constant 0 : index
    %40 = vector.load %arg9[%c0_20, %c0_21] : memref<1x128xf32, #tpu.memory_space<vmem>>, vector<1x128xf32>
    tpu.vector_store %arg9[%c0_20, %c0_21], %39 {strides = array<i32>} : memref<1x128xf32, #tpu.memory_space<vmem>>, vector<1x128xf32>,
    %41 = vector.extract_strided_slice %28 {offsets = [0, 0], sizes = [32, 64], strides = [1, 1]} : vector<32x128xf32> to vector<32x64xf32>
    %cst_22 = arith.constant dense<0xFF800000> : vector<32xf32>
    %42 = vector.multi_reduction <maximumf>, %41, %cst_22 [1] : vector<32x64xf32> to vector<32xf32>
    %43 = vector.shape_cast %42 : vector<32xf32> to vector<32x1xf32>
    %c0_23 = arith.constant 0 : index
    %c0_24 = arith.constant 0 : index
    %44 = vector.load %arg10[%c0_23, %c0_24] : memref<32x2xf32, #tpu.memory_space<vmem>>, vector<32x1xf32>
    tpu.vector_store %arg10[%c0_23, %c0_24], %43 {strides = array<i32>} : memref<32x2xf32, #tpu.memory_space<vmem>>, vector<32x1xf32>,
    %45 = vector.extract_strided_slice %28 {offsets = [0, 64], sizes = [32, 64], strides = [1, 1]} : vector<32x128xf32> to vector<32x64xf32>
    %cst_25 = arith.constant dense<0xFF800000> : vector<32xf32>
    %46 = vector.multi_reduction <maximumf>, %45, %cst_25 [1] : vector<32x64xf32> to vector<32xf32>
    %47 = vector.shape_cast %46 : vector<32xf32> to vector<32x1xf32>
    %c0_26 = arith.constant 0 : index
    %c1 = arith.constant 1 : index
    %48 = vector.load %arg10[%c0_26, %c1] : memref<32x2xf32, #tpu.memory_space<vmem>>, vector<32x1xf32>
    tpu.vector_store %arg10[%c0_26, %c1], %47 {strides = array<i32>} : memref<32x2xf32, #tpu.memory_space<vmem>>, vector<32x1xf32>,
    return
  }
  func.func @transform_0(%arg0: i32) -> (i32, i32) {
    %c0_i32 = arith.constant 0 : i32
    %c0_i32_0 = arith.constant 0 : i32
    %c0_i32_1 = arith.constant 0 : i32
    return %c0_i32, %c0_i32_0 : i32, i32
  }
  func.func @transform_1(%arg0: i32) -> (i32, i32) {
    %c0_i32 = arith.constant 0 : i32
    %c0_i32_0 = arith.constant 0 : i32
    %c0_i32_1 = arith.constant 0 : i32
    return %c0_i32, %c0_i32_0 : i32, i32
  }
  func.func @transform_2(%arg0: i32) -> (i32, i32) {
    %c0_i32 = arith.constant 0 : i32
    %c0_i32_0 = arith.constant 0 : i32
    %c0_i32_1 = arith.constant 0 : i32
    return %c0_i32, %c0_i32_0 : i32, i32
  }
  func.func @transform_3(%arg0: i32) -> (i32, i32) {
    %c0_i32 = arith.constant 0 : i32
    %c0_i32_0 = arith.constant 0 : i32
    %c0_i32_1 = arith.constant 0 : i32
    return %c0_i32, %c0_i32_0 : i32, i32
  }
  func.func @transform_4(%arg0: i32) -> (i32, i32) {
    %c0_i32 = arith.constant 0 : i32
    %c0_i32_0 = arith.constant 0 : i32
    %c0_i32_1 = arith.constant 0 : i32
    return %c0_i32, %c0_i32_0 : i32, i32
  }
  func.func @transform_5(%arg0: i32) -> (i32, i32) {
    %c0_i32 = arith.constant 0 : i32
    %c0_i32_0 = arith.constant 0 : i32
    %c0_i32_1 = arith.constant 0 : i32
    return %c0_i32, %c0_i32_0 : i32, i32
  }
  func.func @transform_6(%arg0: i32) -> (i32, i32) {
    %c0_i32 = arith.constant 0 : i32
    %c0_i32_0 = arith.constant 0 : i32
    %c0_i32_1 = arith.constant 0 : i32
    return %c0_i32, %c0_i32_0 : i32, i32
  }
  func.func @transform_7(%arg0: i32) -> (i32, i32) {
    %c0_i32 = arith.constant 0 : i32
    %c0_i32_0 = arith.constant 0 : i32
    %c0_i32_1 = arith.constant 0 : i32
    return %c0_i32, %c0_i32_0 : i32, i32
  }
  func.func @transform_8(%arg0: i32) -> (i32, i32) {
    %c0_i32 = arith.constant 0 : i32
    %c0_i32_0 = arith.constant 0 : i32
    %c0_i32_1 = arith.constant 0 : i32
    return %c0_i32, %c0_i32_0 : i32, i32
  }
  func.func @transform_9(%arg0: i32) -> (i32, i32) {
    %c0_i32 = arith.constant 0 : i32
    %c0_i32_0 = arith.constant 0 : i32
    %c0_i32_1 = arith.constant 0 : i32
    return %c0_i32, %c0_i32_0 : i32, i32
  }
}

module attributes {stable_mosaic.version = 11 : i64} {
  func.func @_local_attn_kernel(%arg0: i32, %arg1: memref<4x576xbf16, #tpu.memory_space<vmem>>, %arg2: memref<576x1024xbf16, #tpu.memory_space<vmem>>, %arg3: memref<1x1024xf32, #tpu.memory_space<vmem>>, %arg4: memref<1024x512xbf16, #tpu.memory_space<vmem>>, %arg5: memref<1x512xf32, #tpu.memory_space<vmem>>, %arg6: memref<512x256xbf16, #tpu.memory_space<vmem>>, %arg7: memref<128x1xf32, #tpu.memory_space<vmem>>, %arg8: memref<2x4xf32, #tpu.memory_space<vmem>>, %arg9: memref<4x2xf32, #tpu.memory_space<vmem>>, %arg10: memref<2x32xf32, #tpu.memory_space<vmem>>, %arg11: memref<32x6xf32, #tpu.memory_space<vmem>>, %arg12: memref<512x6xbf16, #tpu.memory_space<vmem>>, %arg13: memref<1x6xf32, #tpu.memory_space<vmem>>, %arg14: memref<2x6xf32, #tpu.memory_space<vmem>>, %arg15: memref<4x1xf32, #tpu.memory_space<vmem>>) attributes {dimension_semantics = [#tpu.dimension_semantics<arbitrary>], iteration_bounds = array<i64: 1>, scalar_prefetch = 0 : i64, scratch_operands = 0 : i64, tpu.core_type = #tpu.core_type<tc>, window_params = [{pipeline_mode = #tpu.pipeline_mode<synchronous>, transform_indices = @transform_0, window_bounds = array<i64: 4, 576>}, {pipeline_mode = #tpu.pipeline_mode<synchronous>, transform_indices = @transform_1, window_bounds = array<i64: 576, 1024>}, {pipeline_mode = #tpu.pipeline_mode<synchronous>, transform_indices = @transform_2, window_bounds = array<i64: 1, 1024>}, {pipeline_mode = #tpu.pipeline_mode<synchronous>, transform_indices = @transform_3, window_bounds = array<i64: 1024, 512>}, {pipeline_mode = #tpu.pipeline_mode<synchronous>, transform_indices = @transform_4, window_bounds = array<i64: 1, 512>}, {pipeline_mode = #tpu.pipeline_mode<synchronous>, transform_indices = @transform_5, window_bounds = array<i64: 512, 256>}, {pipeline_mode = #tpu.pipeline_mode<synchronous>, transform_indices = @transform_6, window_bounds = array<i64: 128, 1>}, {pipeline_mode = #tpu.pipeline_mode<synchronous>, transform_indices = @transform_7, window_bounds = array<i64: 2, 4>}, {pipeline_mode = #tpu.pipeline_mode<synchronous>, transform_indices = @transform_8, window_bounds = array<i64: 4, 2>}, {pipeline_mode = #tpu.pipeline_mode<synchronous>, transform_indices = @transform_9, window_bounds = array<i64: 2, 32>}, {pipeline_mode = #tpu.pipeline_mode<synchronous>, transform_indices = @transform_10, window_bounds = array<i64: 32, 6>}, {pipeline_mode = #tpu.pipeline_mode<synchronous>, transform_indices = @transform_11, window_bounds = array<i64: 512, 6>}, {pipeline_mode = #tpu.pipeline_mode<synchronous>, transform_indices = @transform_12, window_bounds = array<i64: 1, 6>}, {pipeline_mode = #tpu.pipeline_mode<synchronous>, transform_indices = @transform_13, window_bounds = array<i64: 2, 6>}, {pipeline_mode = #tpu.pipeline_mode<synchronous>, transform_indices = @transform_14, window_bounds = array<i64: 4, 1>}]} {
    %c0 = arith.constant 0 : index
    %c0_0 = arith.constant 0 : index
    %0 = vector.load %arg1[%c0, %c0_0] : memref<4x576xbf16, #tpu.memory_space<vmem>>, vector<4x576xbf16>
    %c0_1 = arith.constant 0 : index
    %c0_2 = arith.constant 0 : index
    %1 = vector.load %arg2[%c0_1, %c0_2] : memref<576x1024xbf16, #tpu.memory_space<vmem>>, vector<576x1024xbf16>
    %cst = arith.constant dense<0.000000e+00> : vector<4x1024xf32>
    %2 = tpu.matmul %0, %1, %cst {dimension_numbers = #tpu.dot_dimension_numbers<[1], [0], [0], [1], [0, 0, 1, 1], [], []>} : vector<4x576xbf16>, vector<576x1024xbf16>, vector<4x1024xf32> -> vector<4x1024xf32>
    %c0_3 = arith.constant 0 : index
    %c0_4 = arith.constant 0 : index
    %3 = vector.load %arg3[%c0_3, %c0_4] : memref<1x1024xf32, #tpu.memory_space<vmem>>, vector<1x1024xf32>
    %4 = vector.broadcast %3 : vector<1x1024xf32> to vector<4x1024xf32>
    %5 = arith.addf %2, %4 : vector<4x1024xf32>
    %cst_5 = arith.constant 0.000000e+00 : f32
    %6 = vector.broadcast %cst_5 : f32 to vector<4x1024xf32>
    %7 = arith.maximumf %5, %6 : vector<4x1024xf32>
    %8 = arith.truncf %7 : vector<4x1024xf32> to vector<4x1024xbf16>
    %c0_6 = arith.constant 0 : index
    %c0_7 = arith.constant 0 : index
    %9 = vector.load %arg4[%c0_6, %c0_7] : memref<1024x512xbf16, #tpu.memory_space<vmem>>, vector<1024x512xbf16>
    %cst_8 = arith.constant dense<0.000000e+00> : vector<4x512xf32>
    %10 = tpu.matmul %8, %9, %cst_8 {dimension_numbers = #tpu.dot_dimension_numbers<[1], [0], [0], [1], [0, 0, 1, 1], [], []>} : vector<4x1024xbf16>, vector<1024x512xbf16>, vector<4x512xf32> -> vector<4x512xf32>
    %c0_9 = arith.constant 0 : index
    %c0_10 = arith.constant 0 : index
    %11 = vector.load %arg5[%c0_9, %c0_10] : memref<1x512xf32, #tpu.memory_space<vmem>>, vector<1x512xf32>
    %12 = vector.broadcast %11 : vector<1x512xf32> to vector<4x512xf32>
    %13 = arith.addf %10, %12 : vector<4x512xf32>
    %cst_11 = arith.constant 0.000000e+00 : f32
    %14 = vector.broadcast %cst_11 : f32 to vector<4x512xf32>
    %15 = arith.maximumf %13, %14 : vector<4x512xf32>
    %16 = arith.truncf %15 : vector<4x512xf32> to vector<4x512xbf16>
    %c0_12 = arith.constant 0 : index
    %c0_13 = arith.constant 0 : index
    %17 = vector.load %arg6[%c0_12, %c0_13] : memref<512x256xbf16, #tpu.memory_space<vmem>>, vector<512x256xbf16>
    %cst_14 = arith.constant dense<0.000000e+00> : vector<4x256xf32>
    %18 = tpu.matmul %16, %17, %cst_14 {dimension_numbers = #tpu.dot_dimension_numbers<[1], [0], [0], [1], [0, 0, 1, 1], [], []>} : vector<4x512xbf16>, vector<512x256xbf16>, vector<4x256xf32> -> vector<4x256xf32>
    %19 = vector.extract_strided_slice %18 {offsets = [0, 0], sizes = [4, 128], strides = [1, 1]} : vector<4x256xf32> to vector<4x128xf32>
    %20 = arith.negf %19 : vector<4x128xf32>
    %21 = math.exp %20 : vector<4x128xf32>
    %cst_15 = arith.constant 1.000000e+00 : f32
    %22 = vector.broadcast %cst_15 : f32 to vector<4x128xf32>
    %23 = arith.addf %22, %21 : vector<4x128xf32>
    %24 = arith.divf %22, %23 : vector<4x128xf32>
    %25 = vector.extract_strided_slice %18 {offsets = [0, 128], sizes = [4, 128], strides = [1, 1]} : vector<4x256xf32> to vector<4x128xf32>
    %26 = math.tanh %25 : vector<4x128xf32>
    %27 = arith.mulf %24, %26 : vector<4x128xf32>
    %c0_16 = arith.constant 0 : index
    %c0_17 = arith.constant 0 : index
    %28 = vector.load %arg7[%c0_16, %c0_17] : memref<128x1xf32, #tpu.memory_space<vmem>>, vector<128x1xf32>
    %cst_18 = arith.constant dense<0.000000e+00> : vector<4x1xf32>
    %29 = tpu.matmul %27, %28, %cst_18 {dimension_numbers = #tpu.dot_dimension_numbers<[1], [0], [0], [1], [0, 0, 1, 1], [], []>} : vector<4x128xf32>, vector<128x1xf32>, vector<4x1xf32> -> vector<4x1xf32>
    %cst_19 = arith.constant dense<0xFF800000> : vector<1xf32>
    %30 = vector.multi_reduction <maximumf>, %29, %cst_19 [0] : vector<4x1xf32> to vector<1xf32>
    %31 = vector.shape_cast %30 : vector<1xf32> to vector<1x1xf32>
    %32 = vector.broadcast %31 : vector<1x1xf32> to vector<4x1xf32>
    %33 = arith.subf %29, %32 : vector<4x1xf32>
    %34 = math.exp %33 : vector<4x1xf32>
    %c0_20 = arith.constant 0 : index
    %c0_21 = arith.constant 0 : index
    %35 = vector.load %arg8[%c0_20, %c0_21] : memref<2x4xf32, #tpu.memory_space<vmem>>, vector<2x4xf32>
    %cst_22 = arith.constant dense<0.000000e+00> : vector<2x1xf32>
    %36 = tpu.matmul %35, %34, %cst_22 {dimension_numbers = #tpu.dot_dimension_numbers<[1], [0], [0], [1], [0, 0, 1, 1], [], []>} : vector<2x4xf32>, vector<4x1xf32>, vector<2x1xf32> -> vector<2x1xf32>
    %cst_23 = arith.constant 1.000000e+00 : f32
    %37 = vector.broadcast %cst_23 : f32 to vector<2x1xf32>
    %38 = arith.divf %37, %36 : vector<2x1xf32>
    %c0_24 = arith.constant 0 : index
    %c0_25 = arith.constant 0 : index
    %39 = vector.load %arg9[%c0_24, %c0_25] : memref<4x2xf32, #tpu.memory_space<vmem>>, vector<4x2xf32>
    %cst_26 = arith.constant dense<0.000000e+00> : vector<4x1xf32>
    %40 = tpu.matmul %39, %38, %cst_26 {dimension_numbers = #tpu.dot_dimension_numbers<[1], [0], [0], [1], [0, 0, 1, 1], [], []>} : vector<4x2xf32>, vector<2x1xf32>, vector<4x1xf32> -> vector<4x1xf32>
    %41 = arith.mulf %34, %40 : vector<4x1xf32>
    %c0_27 = arith.constant 0 : index
    %c0_28 = arith.constant 0 : index
    %42 = vector.load %arg15[%c0_27, %c0_28] : memref<4x1xf32, #tpu.memory_space<vmem>>, vector<4x1xf32>
    tpu.vector_store %arg15[%c0_27, %c0_28], %41 {strides = array<i32>} : memref<4x1xf32, #tpu.memory_space<vmem>>, vector<4x1xf32>,
    %c0_29 = arith.constant 0 : index
    %c0_30 = arith.constant 0 : index
    %43 = vector.load %arg8[%c0_29, %c0_30] : memref<2x4xf32, #tpu.memory_space<vmem>>, vector<2x4xf32>
    %44 = vector.broadcast %41 : vector<4x1xf32> to vector<4x512xf32>
    %45 = arith.mulf %44, %15 : vector<4x512xf32>
    %cst_31 = arith.constant dense<0.000000e+00> : vector<2x512xf32>
    %46 = tpu.matmul %43, %45, %cst_31 {dimension_numbers = #tpu.dot_dimension_numbers<[1], [0], [0], [1], [0, 0, 1, 1], [], []>} : vector<2x4xf32>, vector<4x512xf32>, vector<2x512xf32> -> vector<2x512xf32>
    %c0_32 = arith.constant 0 : index
    %c0_33 = arith.constant 0 : index
    %47 = vector.load %arg10[%c0_32, %c0_33] : memref<2x32xf32, #tpu.memory_space<vmem>>, vector<2x32xf32>
    %c0_34 = arith.constant 0 : index
    %c0_35 = arith.constant 0 : index
    %48 = vector.load %arg11[%c0_34, %c0_35] : memref<32x6xf32, #tpu.memory_space<vmem>>, vector<32x6xf32>
    %cst_36 = arith.constant dense<0.000000e+00> : vector<2x6xf32>
    %49 = tpu.matmul %47, %48, %cst_36 {dimension_numbers = #tpu.dot_dimension_numbers<[1], [0], [0], [1], [0, 0, 1, 1], [], []>} : vector<2x32xf32>, vector<32x6xf32>, vector<2x6xf32> -> vector<2x6xf32>
    %50 = arith.truncf %46 : vector<2x512xf32> to vector<2x512xbf16>
    %c0_37 = arith.constant 0 : index
    %c0_38 = arith.constant 0 : index
    %51 = vector.load %arg12[%c0_37, %c0_38] : memref<512x6xbf16, #tpu.memory_space<vmem>>, vector<512x6xbf16>
    %cst_39 = arith.constant dense<0.000000e+00> : vector<2x6xf32>
    %52 = tpu.matmul %50, %51, %cst_39 {dimension_numbers = #tpu.dot_dimension_numbers<[1], [0], [0], [1], [0, 0, 1, 1], [], []>} : vector<2x512xbf16>, vector<512x6xbf16>, vector<2x6xf32> -> vector<2x6xf32>
    %53 = arith.addf %49, %52 : vector<2x6xf32>
    %c0_40 = arith.constant 0 : index
    %c0_41 = arith.constant 0 : index
    %54 = vector.load %arg13[%c0_40, %c0_41] : memref<1x6xf32, #tpu.memory_space<vmem>>, vector<1x6xf32>
    %55 = vector.broadcast %54 : vector<1x6xf32> to vector<2x6xf32>
    %56 = arith.addf %53, %55 : vector<2x6xf32>
    %57 = arith.negf %56 : vector<2x6xf32>
    %58 = math.exp %57 : vector<2x6xf32>
    %cst_42 = arith.constant 1.000000e+00 : f32
    %59 = vector.broadcast %cst_42 : f32 to vector<2x6xf32>
    %60 = arith.addf %59, %58 : vector<2x6xf32>
    %61 = arith.divf %59, %60 : vector<2x6xf32>
    %c0_43 = arith.constant 0 : index
    %c0_44 = arith.constant 0 : index
    %62 = vector.load %arg14[%c0_43, %c0_44] : memref<2x6xf32, #tpu.memory_space<vmem>>, vector<2x6xf32>
    tpu.vector_store %arg14[%c0_43, %c0_44], %61 {strides = array<i32>} : memref<2x6xf32, #tpu.memory_space<vmem>>, vector<2x6xf32>,
    return
  }
  func.func @transform_0(%arg0: i32) -> (i32, i32) {
    %c0_i32 = arith.constant 0 : i32
    %c0_i32_0 = arith.constant 0 : i32
    %c0_i32_1 = arith.constant 0 : i32
    return %c0_i32, %c0_i32_0 : i32, i32
  }
  func.func @transform_1(%arg0: i32) -> (i32, i32) {
    %c0_i32 = arith.constant 0 : i32
    %c0_i32_0 = arith.constant 0 : i32
    %c0_i32_1 = arith.constant 0 : i32
    return %c0_i32, %c0_i32_0 : i32, i32
  }
  func.func @transform_2(%arg0: i32) -> (i32, i32) {
    %c0_i32 = arith.constant 0 : i32
    %c0_i32_0 = arith.constant 0 : i32
    %c0_i32_1 = arith.constant 0 : i32
    return %c0_i32, %c0_i32_0 : i32, i32
  }
  func.func @transform_3(%arg0: i32) -> (i32, i32) {
    %c0_i32 = arith.constant 0 : i32
    %c0_i32_0 = arith.constant 0 : i32
    %c0_i32_1 = arith.constant 0 : i32
    return %c0_i32, %c0_i32_0 : i32, i32
  }
  func.func @transform_4(%arg0: i32) -> (i32, i32) {
    %c0_i32 = arith.constant 0 : i32
    %c0_i32_0 = arith.constant 0 : i32
    %c0_i32_1 = arith.constant 0 : i32
    return %c0_i32, %c0_i32_0 : i32, i32
  }
  func.func @transform_5(%arg0: i32) -> (i32, i32) {
    %c0_i32 = arith.constant 0 : i32
    %c0_i32_0 = arith.constant 0 : i32
    %c0_i32_1 = arith.constant 0 : i32
    return %c0_i32, %c0_i32_0 : i32, i32
  }
  func.func @transform_6(%arg0: i32) -> (i32, i32) {
    %c0_i32 = arith.constant 0 : i32
    %c0_i32_0 = arith.constant 0 : i32
    %c0_i32_1 = arith.constant 0 : i32
    return %c0_i32, %c0_i32_0 : i32, i32
  }
  func.func @transform_7(%arg0: i32) -> (i32, i32) {
    %c0_i32 = arith.constant 0 : i32
    %c0_i32_0 = arith.constant 0 : i32
    %c0_i32_1 = arith.constant 0 : i32
    return %c0_i32, %c0_i32_0 : i32, i32
  }
  func.func @transform_8(%arg0: i32) -> (i32, i32) {
    %c0_i32 = arith.constant 0 : i32
    %c0_i32_0 = arith.constant 0 : i32
    %c0_i32_1 = arith.constant 0 : i32
    return %c0_i32, %c0_i32_0 : i32, i32
  }
  func.func @transform_9(%arg0: i32) -> (i32, i32) {
    %c0_i32 = arith.constant 0 : i32
    %c0_i32_0 = arith.constant 0 : i32
    %c0_i32_1 = arith.constant 0 : i32
    return %c0_i32, %c0_i32_0 : i32, i32
  }
  func.func @transform_10(%arg0: i32) -> (i32, i32) {
    %c0_i32 = arith.constant 0 : i32
    %c0_i32_0 = arith.constant 0 : i32
    %c0_i32_1 = arith.constant 0 : i32
    return %c0_i32, %c0_i32_0 : i32, i32
  }
  func.func @transform_11(%arg0: i32) -> (i32, i32) {
    %c0_i32 = arith.constant 0 : i32
    %c0_i32_0 = arith.constant 0 : i32
    %c0_i32_1 = arith.constant 0 : i32
    return %c0_i32, %c0_i32_0 : i32, i32
  }
  func.func @transform_12(%arg0: i32) -> (i32, i32) {
    %c0_i32 = arith.constant 0 : i32
    %c0_i32_0 = arith.constant 0 : i32
    %c0_i32_1 = arith.constant 0 : i32
    return %c0_i32, %c0_i32_0 : i32, i32
  }
  func.func @transform_13(%arg0: i32) -> (i32, i32) {
    %c0_i32 = arith.constant 0 : i32
    %c0_i32_0 = arith.constant 0 : i32
    %c0_i32_1 = arith.constant 0 : i32
    return %c0_i32, %c0_i32_0 : i32, i32
  }
  func.func @transform_14(%arg0: i32) -> (i32, i32) {
    %c0_i32 = arith.constant 0 : i32
    %c0_i32_0 = arith.constant 0 : i32
    %c0_i32_1 = arith.constant 0 : i32
    return %c0_i32, %c0_i32_0 : i32, i32
  }
}

</mosaic_0001>

<llo_original>
// kernel: run.2
$region0: #{run.2}
  #allocation0 [shape = 'u32[]', space=smem, size = 0x4, offset = 0x4, fixed_abs, tag = 'smem constant byte address 0x4 - core index']
  #allocation1 [shape = 'u32[144,128]{1,0:T(1,128)}', space=vmem, size = 0x12000, scoped, tag = 'internal scratch']
  #allocation2 [shape = 'f32[1,1]{1,0:T(1,128)S(1)}', space=vmem, size = 0x200, scoped, tag = 'scoped memory for run.2']
  %s0 = inlined_call_operand.vmem [shape: bf16[9,1152], index: 0, kind: input, shape index: {}]
  %s1 = inlined_call_operand.vmem [shape: f32[1,1152], index: 1, kind: input, shape index: {}]
  %s2 = inlined_call_operand.vmem [shape: bf16[8,9], index: 2, kind: input, shape index: {}]
  %s3 = inlined_call_operand.vmem [shape: f32[8,1], index: 3, kind: input, shape index: {}]
  %s4 = inlined_call_operand.vmem [shape: bf16[32,72], index: 4, kind: input, shape index: {}]
  %s5 = inlined_call_operand.vmem [shape: f32[32,1], index: 5, kind: input, shape index: {}]
  %s6 = inlined_call_operand.vmem [shape: bf16[1,32], index: 6, kind: input, shape index: {}]
  %s7 = inlined_call_operand.<no memory space> [shape: f32[1,1], index: 7, kind: input, shape index: {}]
  %s8 = inlined_call_operand.vmem [shape: f32[1,128], index: 8, kind: output, shape index: {0}]
  %s9 = inlined_call_operand.vmem [shape: f32[32,2], index: 9, kind: output, shape index: {1}]
  %10 = xla_tuple %s8, %s9
  %s11 = sld [smem:[#allocation0]]
  $region50: #{run.2} parent=0
    _
  %s13 = ssub.s32 1, %s11
  %s14 = scalar_select 0, %s13, %s11
  %v15 = vstv %s7
  %16 = vst [vmem:[#allocation2] sm:$0x1] %v15
  // Predicated region
  $region2: #{run.2} parent=0 // pred_check
    _
  $region3: #{run.2} parent=0 // pred_check_branch
    %18 = sbr.rel (0) target = $region5
  $region4: #{run.2} parent=0 // pred_region
    _
  $region5: #{run.2} parent=0 // pred_fallthru
    _
  // Predicated region
  $region6: #{run.2} parent=0 // pred_check
    _
  $region7: #{run.2} parent=0 // pred_check_branch
    %20 = sbr.rel (0) target = $region9
  $region8: #{run.2} parent=0 // pred_region
    _
  $region9: #{run.2} parent=0 // pred_fallthru
    _
  // Predicated region
  $region10: #{run.2} parent=0 // pred_check
    _
  $region11: #{run.2} parent=0 // pred_check_branch
    %22 = sbr.rel (0) target = $region13
  $region12: #{run.2} parent=0 // pred_region
    _
  $region13: #{run.2} parent=0 // pred_fallthru
    _
  // Predicated region
  $region14: #{run.2} parent=0 // pred_check
    _
  $region15: #{run.2} parent=0 // pred_check_branch
    %24 = sbr.rel (0) target = $region17
  $region16: #{run.2} parent=0 // pred_region
    _
  $region17: #{run.2} parent=0 // pred_fallthru
    _
  // Predicated region
  $region18: #{run.2} parent=0 // pred_check
    _
  $region19: #{run.2} parent=0 // pred_check_branch
    %26 = sbr.rel (0) target = $region21
  $region20: #{run.2} parent=0 // pred_region
    _
  $region21: #{run.2} parent=0 // pred_fallthru
    _
  // Predicated region
  $region22: #{run.2} parent=0 // pred_check
    _
  $region23: #{run.2} parent=0 // pred_check_branch
    %28 = sbr.rel (0) target = $region25
  $region24: #{run.2} parent=0 // pred_region
    _
  $region25: #{run.2} parent=0 // pred_fallthru
    _
  // Predicated region
  $region26: #{run.2} parent=0 // pred_check
    _
  $region27: #{run.2} parent=0 // pred_check_branch
    %30 = sbr.rel (0) target = $region29
  $region28: #{run.2} parent=0 // pred_region
    _
  $region29: #{run.2} parent=0 // pred_fallthru
    _
  // Predicated region
  $region30: #{run.2} parent=0 // pred_check
    _
  $region31: #{run.2} parent=0 // pred_check_branch
    %32 = sbr.rel (0) target = $region33
  $region32: #{run.2} parent=0 // pred_region
    _
  $region33: #{run.2} parent=0 // pred_fallthru
    _
  %v34 = vld [vmem:[%s2] sm:$0xf]
  %v35 = vld [vmem:[%s0] sm:$0xff]
  %v36 = vld [vmem:[%s0 + $0x8] sm:$0xff]
  %v37 = vld [vmem:[%s0 + $0x10] sm:$0xff]
  %v38 = vld [vmem:[%s0 + $0x18] sm:$0xff]
  %v39 = vld [vmem:[%s0 + $0x20] sm:$0xf]
  %v40 = vld [vmem:[%s0 + $0x24] sm:$0x11]
  %v41 = vld [vmem:[%s0 + $0x2c] sm:$0x11]
  %v42 = vld [vmem:[%s0 + $0x34] sm:$0x11]
  %v43 = vld [vmem:[%s0 + $0x3c] sm:$0x11]
  %v44 = vld [vmem:[%s0 + $0x44] sm:$0x1]
  %v45 = vld [vmem:[%s3] sm:$0xff]
  %47 = vset.pattern.permute.xlu0 0
  %48 = vperm.xlu0 %47, %v45
  %v49 = vpop.permute.xlu0 %48
  %v61 = vunpack.c.l.b16 %v35
  %v62 = vunpack.c.h.b16 %v35
  %v63 = vunpack.c.l.b16 %v36
  %v64 = vunpack.c.h.b16 %v36
  %v65 = vunpack.c.l.b16 %v37
  %v66 = vunpack.c.h.b16 %v37
  %v67 = vunpack.c.l.b16 %v38
  %v68 = vunpack.c.h.b16 %v38
  %v69 = vunpack.c.l.b16 %v39
  %v70 = vunpack.c.l.b16 %v40
  %v71 = vunpack.c.h.b16 %v40
  %v72 = vunpack.c.l.b16 %v41
  %v73 = vunpack.c.h.b16 %v41
  %v74 = vunpack.c.l.b16 %v42
  %v75 = vunpack.c.h.b16 %v42
  %v76 = vunpack.c.l.b16 %v43
  %v77 = vunpack.c.h.b16 %v43
  %v78 = vunpack.c.l.b16 %v44
  %v79 = vpack.c.b16 %v70, %v61
  %v80 = vpack.c.b16 %v71, %v62
  %v81 = vpack.c.b16 %v72, %v63
  %v82 = vpack.c.b16 %v73, %v64
  %v83 = vpack.c.b16 %v74, %v65
  %v84 = vpack.c.b16 %v75, %v66
  %v85 = vpack.c.b16 %v76, %v67
  %v86 = vpack.c.b16 %v77, %v68
  %v87 = vpack.c.b16 %v78, %v69
  %vm88 = vcmask 72704
  %v90 = vsel %vm88, %v34, 0
  %vm92 = vcmask 1043456
  %vm93 = vcmask 1044480
  %v94 = vsel %vm92, 4294967295, 65535
  %v95 = vsel %vm93, %v94, 0
  %v97 = vand.u32 %v79, %v95
  %v100 = vand.u32 %v80, %v95
  %v103 = vand.u32 %v81, %v95
  %v106 = vand.u32 %v82, %v95
  %v109 = vand.u32 %v83, %v95
  %v112 = vand.u32 %v84, %v95
  %v115 = vand.u32 %v85, %v95
  %v118 = vand.u32 %v86, %v95
  %v121 = vand.u32 %v87, %v95
  %123 = vmatprep.subr.bf16.mxu0 %v100
  %124 = vmatpush1.bf16.msra.mxu0 %v97
  %125 = vmatprep.subr.bf16.mxu0 0
  %126 = vmatpush1.bf16.msra.mxu0 0
  %127 = vmatprep.subr.bf16.mxu0 0
  %128 = vmatpush1.bf16.msra.mxu0 0
  %129 = vmatprep.subr.bf16.mxu0 0
  %130 = vmatpush1.bf16.msra.mxu0 0
  %131 = vmatprep.subr.bf16.mxu0 0
  %132 = vmatpush1.bf16.msra.mxu0 0
  %133 = vmatprep.subr.bf16.mxu0 0
  %134 = vmatpush1.bf16.msra.mxu0 0
  %135 = vmatprep.subr.bf16.mxu0 0
  %136 = vmatpush1.bf16.msra.mxu0 0
  %137 = vmatprep.subr.bf16.mxu0 0
  %138 = vmatpush1.bf16.msra.mxu0 0
  %139 = vmatprep.subr.bf16.mxu0 0
  %140 = vmatpush1.bf16.msra.mxu0 0
  %141 = vmatprep.subr.bf16.mxu0 0
  %142 = vmatpush1.bf16.msra.mxu0 0
  %143 = vmatprep.subr.bf16.mxu0 0
  %144 = vmatpush1.bf16.msra.mxu0 0
  %145 = vmatprep.subr.bf16.mxu0 0
  %146 = vmatpush1.bf16.msra.mxu0 0
  %147 = vmatprep.subr.bf16.mxu0 0
  %148 = vmatpush1.bf16.msra.mxu0 0
  %149 = vmatprep.subr.bf16.mxu0 0
  %150 = vmatpush1.bf16.msra.mxu0 0
  %151 = vmatprep.subr.bf16.mxu0 0
  %152 = vmatpush1.bf16.msra.mxu0 0
  %153 = vmatprep.subr.bf16.mxu0 0
  %154 = vmatpush1.bf16.msra.mxu0 0
  %155 = vmatprep.mubr.bf16.mxu0 0
  %156 = vmatmul.mubr.bf16.gmra.mrb[0].mxu0 %v90
  %v157 = vpop.f32.mrb[0].mxu0
  %v158 = vadd.f32 %v49, %v157
  %v159 = vpop.f32.mrb[0].mxu0
  %v160 = vadd.f32 %v49, %v159
  %v161 = vpop.f32.mrb[0].mxu0
  %v162 = vpop.f32.mrb[0].mxu0
  %163 = vdwg.mxu0
  %164 = vmatprep.subr.bf16.mxu0 %v106
  %165 = vmatpush1.bf16.msra.mxu0 %v103
  %166 = vmatprep.subr.bf16.mxu0 0
  %167 = vmatpush1.bf16.msra.mxu0 0
  %168 = vmatprep.subr.bf16.mxu0 0
  %169 = vmatpush1.bf16.msra.mxu0 0
  %170 = vmatprep.subr.bf16.mxu0 0
  %171 = vmatpush1.bf16.msra.mxu0 0
  %172 = vmatprep.subr.bf16.mxu0 0
  %173 = vmatpush1.bf16.msra.mxu0 0
  %174 = vmatprep.subr.bf16.mxu0 0
  %175 = vmatpush1.bf16.msra.mxu0 0
  %176 = vmatprep.subr.bf16.mxu0 0
  %177 = vmatpush1.bf16.msra.mxu0 0
  %178 = vmatprep.subr.bf16.mxu0 0
  %179 = vmatpush1.bf16.msra.mxu0 0
  %180 = vmatprep.subr.bf16.mxu0 0
  %181 = vmatpush1.bf16.msra.mxu0 0
  %182 = vmatprep.subr.bf16.mxu0 0
  %183 = vmatpush1.bf16.msra.mxu0 0
  %184 = vmatprep.subr.bf16.mxu0 0
  %185 = vmatpush1.bf16.msra.mxu0 0
  %186 = vmatprep.subr.bf16.mxu0 0
  %187 = vmatpush1.bf16.msra.mxu0 0
  %188 = vmatprep.subr.bf16.mxu0 0
  %189 = vmatpush1.bf16.msra.mxu0 0
  %190 = vmatprep.subr.bf16.mxu0 0
  %191 = vmatpush1.bf16.msra.mxu0 0
  %192 = vmatprep.subr.bf16.mxu0 0
  %193 = vmatpush1.bf16.msra.mxu0 0
  %194 = vmatprep.subr.bf16.mxu0 0
  %195 = vmatpush1.bf16.msra.mxu0 0
  %196 = vmatprep.mubr.bf16.mxu0 0
  %197 = vmatmul.mubr.bf16.gmra.mrb[0].mxu0 %v90
  %v198 = vpop.f32.mrb[0].mxu0
  %v199 = vadd.f32 %v49, %v198
  %v200 = vpop.f32.mrb[0].mxu0
  %v201 = vadd.f32 %v49, %v200
  %v202 = vpop.f32.mrb[0].mxu0
  %v203 = vpop.f32.mrb[0].mxu0
  %204 = vdwg.mxu0
  %205 = vmatprep.subr.bf16.mxu0 %v112
  %206 = vmatpush1.bf16.msra.mxu0 %v109
  %207 = vmatprep.subr.bf16.mxu0 0
  %208 = vmatpush1.bf16.msra.mxu0 0
  %209 = vmatprep.subr.bf16.mxu0 0
  %210 = vmatpush1.bf16.msra.mxu0 0
  %211 = vmatprep.subr.bf16.mxu0 0
  %212 = vmatpush1.bf16.msra.mxu0 0
  %213 = vmatprep.subr.bf16.mxu0 0
  %214 = vmatpush1.bf16.msra.mxu0 0
  %215 = vmatprep.subr.bf16.mxu0 0
  %216 = vmatpush1.bf16.msra.mxu0 0
  %217 = vmatprep.subr.bf16.mxu0 0
  %218 = vmatpush1.bf16.msra.mxu0 0
  %219 = vmatprep.subr.bf16.mxu0 0
  %220 = vmatpush1.bf16.msra.mxu0 0
  %221 = vmatprep.subr.bf16.mxu0 0
  %222 = vmatpush1.bf16.msra.mxu0 0
  %223 = vmatprep.subr.bf16.mxu0 0
  %224 = vmatpush1.bf16.msra.mxu0 0
  %225 = vmatprep.subr.bf16.mxu0 0
  %226 = vmatpush1.bf16.msra.mxu0 0
  %227 = vmatprep.subr.bf16.mxu0 0
  %228 = vmatpush1.bf16.msra.mxu0 0
  %229 = vmatprep.subr.bf16.mxu0 0
  %230 = vmatpush1.bf16.msra.mxu0 0
  %231 = vmatprep.subr.bf16.mxu0 0
  %232 = vmatpush1.bf16.msra.mxu0 0
  %233 = vmatprep.subr.bf16.mxu0 0
  %234 = vmatpush1.bf16.msra.mxu0 0
  %235 = vmatprep.subr.bf16.mxu0 0
  %236 = vmatpush1.bf16.msra.mxu0 0
  %237 = vmatprep.mubr.bf16.mxu0 0
  %238 = vmatmul.mubr.bf16.gmra.mrb[0].mxu0 %v90
  %v239 = vpop.f32.mrb[0].mxu0
  %v240 = vadd.f32 %v49, %v239
  %v241 = vpop.f32.mrb[0].mxu0
  %v242 = vadd.f32 %v49, %v241
  %v243 = vpop.f32.mrb[0].mxu0
  %v244 = vpop.f32.mrb[0].mxu0
  %245 = vdwg.mxu0
  %246 = vmatprep.subr.bf16.mxu0 %v118
  %247 = vmatpush1.bf16.msra.mxu0 %v115
  %248 = vmatprep.subr.bf16.mxu0 0
  %249 = vmatpush1.bf16.msra.mxu0 0
  %250 = vmatprep.subr.bf16.mxu0 0
  %251 = vmatpush1.bf16.msra.mxu0 0
  %252 = vmatprep.subr.bf16.mxu0 0
  %253 = vmatpush1.bf16.msra.mxu0 0
  %254 = vmatprep.subr.bf16.mxu0 0
  %255 = vmatpush1.bf16.msra.mxu0 0
  %256 = vmatprep.subr.bf16.mxu0 0
  %257 = vmatpush1.bf16.msra.mxu0 0
  %258 = vmatprep.subr.bf16.mxu0 0
  %259 = vmatpush1.bf16.msra.mxu0 0
  %260 = vmatprep.subr.bf16.mxu0 0
  %261 = vmatpush1.bf16.msra.mxu0 0
  %262 = vmatprep.subr.bf16.mxu0 0
  %263 = vmatpush1.bf16.msra.mxu0 0
  %264 = vmatprep.subr.bf16.mxu0 0
  %265 = vmatpush1.bf16.msra.mxu0 0
  %266 = vmatprep.subr.bf16.mxu0 0
  %267 = vmatpush1.bf16.msra.mxu0 0
  %268 = vmatprep.subr.bf16.mxu0 0
  %269 = vmatpush1.bf16.msra.mxu0 0
  %270 = vmatprep.subr.bf16.mxu0 0
  %271 = vmatpush1.bf16.msra.mxu0 0
  %272 = vmatprep.subr.bf16.mxu0 0
  %273 = vmatpush1.bf16.msra.mxu0 0
  %274 = vmatprep.subr.bf16.mxu0 0
  %275 = vmatpush1.bf16.msra.mxu0 0
  %276 = vmatprep.subr.bf16.mxu0 0
  %277 = vmatpush1.bf16.msra.mxu0 0
  %278 = vmatprep.mubr.bf16.mxu0 0
  %279 = vmatmul.mubr.bf16.gmra.mrb[0].mxu0 %v90
  %v280 = vpop.f32.mrb[0].mxu0
  %v281 = vadd.f32 %v49, %v280
  %v282 = vpop.f32.mrb[0].mxu0
  %v283 = vadd.f32 %v49, %v282
  %v284 = vpop.f32.mrb[0].mxu0
  %v285 = vpop.f32.mrb[0].mxu0
  %286 = vdwg.mxu0
  %287 = vmatprep.subr.bf16.mxu0 0
  %288 = vmatpush1.bf16.msra.mxu0 %v121
  %289 = vmatprep.subr.bf16.mxu0 0
  %290 = vmatpush1.bf16.msra.mxu0 0
  %291 = vmatprep.subr.bf16.mxu0 0
  %292 = vmatpush1.bf16.msra.mxu0 0
  %293 = vmatprep.subr.bf16.mxu0 0
  %294 = vmatpush1.bf16.msra.mxu0 0
  %295 = vmatprep.subr.bf16.mxu0 0
  %296 = vmatpush1.bf16.msra.mxu0 0
  %297 = vmatprep.subr.bf16.mxu0 0
  %298 = vmatpush1.bf16.msra.mxu0 0
  %299 = vmatprep.subr.bf16.mxu0 0
  %300 = vmatpush1.bf16.msra.mxu0 0
  %301 = vmatprep.subr.bf16.mxu0 0
  %302 = vmatpush1.bf16.msra.mxu0 0
  %303 = vmatprep.subr.bf16.mxu0 0
  %304 = vmatpush1.bf16.msra.mxu0 0
  %305 = vmatprep.subr.bf16.mxu0 0
  %306 = vmatpush1.bf16.msra.mxu0 0
  %307 = vmatprep.subr.bf16.mxu0 0
  %308 = vmatpush1.bf16.msra.mxu0 0
  %309 = vmatprep.subr.bf16.mxu0 0
  %310 = vmatpush1.bf16.msra.mxu0 0
  %311 = vmatprep.subr.bf16.mxu0 0
  %312 = vmatpush1.bf16.msra.mxu0 0
  %313 = vmatprep.subr.bf16.mxu0 0
  %314 = vmatpush1.bf16.msra.mxu0 0
  %315 = vmatprep.subr.bf16.mxu0 0
  %316 = vmatpush1.bf16.msra.mxu0 0
  %317 = vmatprep.subr.bf16.mxu0 0
  %318 = vmatpush1.bf16.msra.mxu0 0
  %319 = vmatprep.mubr.bf16.mxu0 0
  %320 = vmatmul.mubr.bf16.gmra.mrb[0].mxu0 %v90
  %v321 = vpop.f32.mrb[0].mxu0
  %v322 = vadd.f32 %v49, %v321
  %v323 = vpop.f32.mrb[0].mxu0
  %v324 = vpop.f32.mrb[0].mxu0
  %v325 = vpop.f32.mrb[0].mxu0
  %326 = vdwg.mxu0
  %v327 = vmax.f32 %v158, 0.0
  %v328 = vmax.f32 %v160, 0.0
  %v329 = vmax.f32 %v199, 0.0
  %v330 = vmax.f32 %v201, 0.0
  %v331 = vmax.f32 %v240, 0.0
  %v332 = vmax.f32 %v242, 0.0
  %v333 = vmax.f32 %v281, 0.0
  %v334 = vmax.f32 %v283, 0.0
  %v335 = vmax.f32 %v322, 0.0
  %v336 = vld [vmem:[%s1] sm:$0xff]
  %v337 = vld [vmem:[%s1 + $0x8] sm:$0x1]
  %v340 = vlaneseq
  %v341 = vshrl.u32 %v340, 7
  %v342 = vsub.s32 0, %v341
  %v343 = vrot.slane %v336, %v342
  %v344 = vlaneseq
  %v345 = vshrl.u32 %v344, 7
  %v346 = vsub.s32 1, %v345
  %v347 = vrot.slane %v336, %v346
  %v348 = vlaneseq
  %v349 = vshrl.u32 %v348, 7
  %v350 = vsub.s32 2, %v349
  %v351 = vrot.slane %v336, %v350
  %v352 = vlaneseq
  %v353 = vshrl.u32 %v352, 7
  %v354 = vsub.s32 3, %v353
  %v355 = vrot.slane %v336, %v354
  %v356 = vlaneseq
  %v357 = vshrl.u32 %v356, 7
  %v358 = vsub.s32 4, %v357
  %v359 = vrot.slane %v336, %v358
  %v360 = vlaneseq
  %v361 = vshrl.u32 %v360, 7
  %v362 = vsub.s32 5, %v361
  %v363 = vrot.slane %v336, %v362
  %v364 = vlaneseq
  %v365 = vshrl.u32 %v364, 7
  %v366 = vsub.s32 6, %v365
  %v367 = vrot.slane %v336, %v366
  %v368 = vlaneseq
  %v369 = vshrl.u32 %v368, 7
  %v370 = vsub.s32 7, %v369
  %v371 = vrot.slane %v336, %v370
  %v372 = vlaneseq
  %v373 = vshrl.u32 %v372, 7
  %v374 = vsub.s32 0, %v373
  %v375 = vrot.slane %v337, %v374
  %v385 = vmul.f32 %v327, %v343
  %v386 = vmul.f32 %v328, %v347
  %v387 = vmul.f32 %v329, %v351
  %v388 = vmul.f32 %v330, %v355
  %v389 = vmul.f32 %v331, %v359
  %v390 = vmul.f32 %v332, %v363
  %v391 = vmul.f32 %v333, %v367
  %v392 = vmul.f32 %v334, %v371
  %v393 = vmul.f32 %v335, %v375
  %v394 = vld [vmem:[%s4] sm:$0xf]
  %v395 = vld [vmem:[%s4 + $0x4] sm:$0xf]
  %v396 = vld [vmem:[%s4 + $0x8] sm:$0xf]
  %v397 = vld [vmem:[%s4 + $0xc] sm:$0xf]
  %v398 = vpack.c.bf16 %v386, %v385
  %v399 = vpack.c.bf16 %v388, %v387
  %v400 = vpack.c.bf16 %v390, %v389
  %v401 = vpack.c.bf16 %v392, %v391
  %v402 = vpack.c.bf16 %v393, %v393
  %v403 = vld [vmem:[%s5] sm:$0xff]
  %v404 = vld [vmem:[%s5 + $0x8] sm:$0xff]
  %v405 = vld [vmem:[%s5 + $0x10] sm:$0xff]
  %v406 = vld [vmem:[%s5 + $0x18] sm:$0xff]
  %408 = vset.pattern.permute.xlu0 0
  %409 = vperm.xlu0 %408, %v403
  %v410 = vpop.permute.xlu0 %409
  %413 = vset.pattern.permute.xlu0 0
  %414 = vperm.xlu0 %413, %v404
  %v415 = vpop.permute.xlu0 %414
  %418 = vset.pattern.permute.xlu0 0
  %419 = vperm.xlu0 %418, %v405
  %v420 = vpop.permute.xlu0 %419
  %423 = vset.pattern.permute.xlu0 0
  %424 = vperm.xlu0 %423, %v406
  %v425 = vpop.permute.xlu0 %424
  %v431 = vunpack.c.l.b16 %v394
  %v432 = vunpack.c.l.b16 %v395
  %v433 = vunpack.c.l.b16 %v396
  %v434 = vunpack.c.l.b16 %v397
  %v435 = vpack.c.b16 %v432, %v431
  %v436 = vpack.c.b16 %v434, %v433
  %vm437 = vcmask 588800
  %v439 = vsel %vm437, %v435, 0
  %v442 = vsel %vm437, %v436, 0
  %v445 = vsel %vm92, %v402, 0
  %447 = vmatprep.subr.bf16.mxu0 0
  %448 = vmatpush1.bf16.msra.mxu0 %v398
  %449 = vmatprep.subr.bf16.mxu0 0
  %450 = vmatpush1.bf16.msra.mxu0 %v399
  %451 = vmatprep.subr.bf16.mxu0 0
  %452 = vmatpush1.bf16.msra.mxu0 %v400
  %453 = vmatprep.subr.bf16.mxu0 0
  %454 = vmatpush1.bf16.msra.mxu0 %v401
  %455 = vmatprep.subr.bf16.mxu0 0
  %456 = vmatpush1.bf16.msra.mxu0 %v445
  %457 = vmatprep.subr.bf16.mxu0 0
  %458 = vmatpush1.bf16.msra.mxu0 0
  %459 = vmatprep.subr.bf16.mxu0 0
  %460 = vmatpush1.bf16.msra.mxu0 0
  %461 = vmatprep.subr.bf16.mxu0 0
  %462 = vmatpush1.bf16.msra.mxu0 0
  %463 = vmatprep.subr.bf16.mxu0 0
  %464 = vmatpush1.bf16.msra.mxu0 0
  %465 = vmatprep.subr.bf16.mxu0 0
  %466 = vmatpush1.bf16.msra.mxu0 0
  %467 = vmatprep.subr.bf16.mxu0 0
  %468 = vmatpush1.bf16.msra.mxu0 0
  %469 = vmatprep.subr.bf16.mxu0 0
  %470 = vmatpush1.bf16.msra.mxu0 0
  %471 = vmatprep.subr.bf16.mxu0 0
  %472 = vmatpush1.bf16.msra.mxu0 0
  %473 = vmatprep.subr.bf16.mxu0 0
  %474 = vmatpush1.bf16.msra.mxu0 0
  %475 = vmatprep.subr.bf16.mxu0 0
  %476 = vmatpush1.bf16.msra.mxu0 0
  %477 = vmatprep.subr.bf16.mxu0 0
  %478 = vmatpush1.bf16.msra.mxu0 0
  %479 = vmatprep.mubr.bf16.mxu0 0
  %480 = vmatmul.mubr.bf16.gmra.mrb[0].mxu0 %v439
  %v481 = vpop.f32.mrb[0].mxu0
  %v482 = vadd.f32 %v410, %v481
  %v483 = vpop.f32.mrb[0].mxu0
  %v484 = vpop.f32.mrb[0].mxu0
  %v485 = vadd.f32 %v415, %v484
  %v486 = vpop.f32.mrb[0].mxu0
  %487 = vmatprep.mubr.bf16.mxu0 0
  %488 = vmatmul.mubr.bf16.gmra.mrb[0].mxu0 %v442
  %v489 = vpop.f32.mrb[0].mxu0
  %v490 = vadd.f32 %v420, %v489
  %v491 = vpop.f32.mrb[0].mxu0
  %v492 = vpop.f32.mrb[0].mxu0
  %v493 = vadd.f32 %v425, %v492
  %v494 = vpop.f32.mrb[0].mxu0
  %495 = vdwg.mxu0
  %v496 = vmax.f32 %v482, 0.0
  %v497 = vmax.f32 %v485, 0.0
  %v498 = vmax.f32 %v490, 0.0
  %v499 = vmax.f32 %v493, 0.0
  %v500 = vld [vmem:[%s6] sm:$0x1]
  %v501 = vpack.c.bf16 %v497, %v496
  %v502 = vpack.c.bf16 %v499, %v498
  %v503 = vld [vmem:[#allocation2] sm:$0x1]
  %505 = vset.pattern.permute.xlu0 0
  %506 = vperm.xlu0 %505, %v503
  %v507 = vpop.permute.xlu0 %506
  %v509 = vlaneseq
  %v510 = vshrl.u32 %v509, 7
  %v511 = vsub.s32 0, %v510
  %v512 = vrot.slane %v507, %v511
  %vm513 = vcmask 261120
  %v515 = vsel %vm513, %v500, 0
  %517 = vmatprep.subr.bf16.mxu0 0
  %518 = vmatpush1.bf16.msra.mxu0 %v501
  %519 = vmatprep.subr.bf16.mxu0 0
  %520 = vmatpush1.bf16.msra.mxu0 %v502
  %521 = vmatprep.subr.bf16.mxu0 0
  %522 = vmatpush1.bf16.msra.mxu0 0
  %523 = vmatprep.subr.bf16.mxu0 0
  %524 = vmatpush1.bf16.msra.mxu0 0
  %525 = vmatprep.subr.bf16.mxu0 0
  %526 = vmatpush1.bf16.msra.mxu0 0
  %527 = vmatprep.subr.bf16.mxu0 0
  %528 = vmatpush1.bf16.msra.mxu0 0
  %529 = vmatprep.subr.bf16.mxu0 0
  %530 = vmatpush1.bf16.msra.mxu0 0
  %531 = vmatprep.subr.bf16.mxu0 0
  %532 = vmatpush1.bf16.msra.mxu0 0
  %533 = vmatprep.subr.bf16.mxu0 0
  %534 = vmatpush1.bf16.msra.mxu0 0
  %535 = vmatprep.subr.bf16.mxu0 0
  %536 = vmatpush1.bf16.msra.mxu0 0
  %537 = vmatprep.subr.bf16.mxu0 0
  %538 = vmatpush1.bf16.msra.mxu0 0
  %539 = vmatprep.subr.bf16.mxu0 0
  %540 = vmatpush1.bf16.msra.mxu0 0
  %541 = vmatprep.subr.bf16.mxu0 0
  %542 = vmatpush1.bf16.msra.mxu0 0
  %543 = vmatprep.subr.bf16.mxu0 0
  %544 = vmatpush1.bf16.msra.mxu0 0
  %545 = vmatprep.subr.bf16.mxu0 0
  %546 = vmatpush1.bf16.msra.mxu0 0
  %547 = vmatprep.subr.bf16.mxu0 0
  %548 = vmatpush1.bf16.msra.mxu0 0
  %549 = vmatprep.mubr.bf16.mxu0 0
  %550 = vmatmul.mubr.bf16.gmra.mrb[0].mxu0 %v515
  %v551 = vpop.f32.mrb[0].mxu0
  %v552 = vadd.f32 %v512, %v551
  %v553 = vpop.f32.mrb[0].mxu0
  %v554 = vpop.f32.mrb[0].mxu0
  %v555 = vpop.f32.mrb[0].mxu0
  %556 = vdwg.mxu0
  %v557 = vxor.u32 %v552, 2147483648
  %v558 = vmul.f32 %v557, 1.442695
  %v559 = vpow.pop %v558
  %v560 = vadd.f32 %v559, 1.0
  %v561 = vrcp.pop %v560
  %v562 = vmul.f32 1.0, %v561
  %563 = vst [vmem:[%s8] sm:$0x1] %v562
  %vm564 = vcmask 523264
  %v565 = vsel %vm564, %v496, -inf
  %566 = vmax.xlane.f32.xlu0 %v565
  %v567 = vpop.xlane.xlu0 %566
  %v568 = vsel %vm564, %v497, -inf
  %569 = vmax.xlane.f32.xlu0 %v568
  %v570 = vpop.xlane.xlu0 %569
  %v571 = vsel %vm564, %v498, -inf
  %572 = vmax.xlane.f32.xlu0 %v571
  %v573 = vpop.xlane.xlu0 %572
  %v574 = vsel %vm564, %v499, -inf
  %575 = vmax.xlane.f32.xlu0 %v574
  %v576 = vpop.xlane.xlu0 %575
  %vm577 = vcmask 7168
  %578 = vst.msk [vmem:[%s9] sm:$0xff] %vm577, %v567
  %579 = vst.msk [vmem:[%s9 + $0x8] sm:$0xff] %vm577, %v570
  %580 = vst.msk [vmem:[%s9 + $0x10] sm:$0xff] %vm577, %v573
  %581 = vst.msk [vmem:[%s9 + $0x18] sm:$0xff] %vm577, %v576
  %vm582 = vcmask 1048064
  %v583 = vsel %vm582, %v496, -inf
  %584 = vmax.xlane.f32.xlu0 %v583
  %v585 = vpop.xlane.xlu0 %584
  %v586 = vsel %vm582, %v497, -inf
  %587 = vmax.xlane.f32.xlu0 %v586
  %v588 = vpop.xlane.xlu0 %587
  %v589 = vsel %vm582, %v498, -inf
  %590 = vmax.xlane.f32.xlu0 %v589
  %v591 = vpop.xlane.xlu0 %590
  %v592 = vsel %vm582, %v499, -inf
  %593 = vmax.xlane.f32.xlu0 %v592
  %v594 = vpop.xlane.xlu0 %593
  %vm595 = vcmask 15368
  %596 = vst.msk [vmem:[%s9] sm:$0xff] %vm595, %v585
  %597 = vst.msk [vmem:[%s9 + $0x8] sm:$0xff] %vm595, %v588
  %598 = vst.msk [vmem:[%s9 + $0x10] sm:$0xff] %vm595, %v591
  %599 = vst.msk [vmem:[%s9 + $0x18] sm:$0xff] %vm595, %v594
  // Predicated region
  $region34: #{run.2} parent=0 // pred_check
    _
  $region35: #{run.2} parent=0 // pred_check_branch
    %601 = sbr.rel (0) target = $region37
  $region36: #{run.2} parent=0 // pred_region
    _
  $region37: #{run.2} parent=0 // pred_fallthru
    _
  // Predicated region
  $region38: #{run.2} parent=0 // pred_check
    _
  $region39: #{run.2} parent=0 // pred_check_branch
    %603 = sbr.rel (0) target = $region41
  $region40: #{run.2} parent=0 // pred_region
    _
  $region41: #{run.2} parent=0 // pred_fallthru
    _
  // Predicated region
  $region42: #{run.2} parent=0 // pred_check
    _
  $region43: #{run.2} parent=0 // pred_check_branch
    %605 = sbr.rel (0) target = $region45
  $region44: #{run.2} parent=0 // pred_region
    _
  $region45: #{run.2} parent=0 // pred_fallthru
    _
  // Predicated region
  $region46: #{run.2} parent=0 // pred_check
    _
  $region47: #{run.2} parent=0 // pred_check_branch
    %607 = sbr.rel (0) target = $region49
  $region48: #{run.2} parent=0 // pred_region
    _
  $region49: #{run.2} parent=0 // pred_fallthru
    _

// kernel: custom-call.2
$region0: #{custom-call.2}
  %s0 = inlined_call_operand.vmem [shape: bf16[4,8,8], index: 0, kind: output, shape index: {}]

// kernel: run.3
$region0: #{run.3}
  #allocation0 [shape = 'u32[]', space=smem, size = 0x4, offset = 0x4, fixed_abs, tag = 'smem constant byte address 0x4 - core index']
  #allocation1 [shape = 'u32[144,128]{1,0:T(1,128)}', space=vmem, size = 0x12000, scoped, tag = 'internal scratch']
  %s0 = inlined_call_operand.vmem [shape: bf16[4,576], index: 0, kind: input, shape index: {}]
  %s1 = inlined_call_operand.vmem [shape: bf16[576,1024], index: 1, kind: input, shape index: {}]
  %s2 = inlined_call_operand.vmem [shape: f32[1,1024], index: 2, kind: input, shape index: {}]
  %s3 = inlined_call_operand.vmem [shape: bf16[1024,512], index: 3, kind: input, shape index: {}]
  %s4 = inlined_call_operand.vmem [shape: f32[1,512], index: 4, kind: input, shape index: {}]
  %s5 = inlined_call_operand.vmem [shape: bf16[512,256], index: 5, kind: input, shape index: {}]
  %s6 = inlined_call_operand.vmem [shape: f32[128,1], index: 6, kind: input, shape index: {}]
  %s7 = inlined_call_operand.vmem [shape: f32[2,4], index: 7, kind: input, shape index: {}]
  %s8 = inlined_call_operand.vmem [shape: f32[4,2], index: 8, kind: input, shape index: {}]
  %s9 = inlined_call_operand.vmem [shape: f32[2,32], index: 9, kind: input, shape index: {}]
  %s10 = inlined_call_operand.vmem [shape: f32[32,6], index: 10, kind: input, shape index: {}]
  %s11 = inlined_call_operand.vmem [shape: bf16[512,6], index: 11, kind: input, shape index: {}]
  %s12 = inlined_call_operand.vmem [shape: f32[1,6], index: 12, kind: input, shape index: {}]
  %s13 = inlined_call_operand.vmem [shape: f32[2,6], index: 13, kind: output, shape index: {0}]
  %s14 = inlined_call_operand.vmem [shape: f32[4,1], index: 14, kind: output, shape index: {1}]
  %15 = xla_tuple %s13, %s14
  %s16 = sld [smem:[#allocation0]]
  $region70: #{run.3} parent=0
    _
  %s18 = ssub.s32 1, %s16
  %s19 = scalar_select 0, %s18, %s16
  // Predicated region
  $region2: #{run.3} parent=0 // pred_check
    _
  $region3: #{run.3} parent=0 // pred_check_branch
    %21 = sbr.rel (0) target = $region5
  $region4: #{run.3} parent=0 // pred_region
    _
  $region5: #{run.3} parent=0 // pred_fallthru
    _
  // Predicated region
  $region6: #{run.3} parent=0 // pred_check
    _
  $region7: #{run.3} parent=0 // pred_check_branch
    %23 = sbr.rel (0) target = $region9
  $region8: #{run.3} parent=0 // pred_region
    _
  $region9: #{run.3} parent=0 // pred_fallthru
    _
  // Predicated region
  $region10: #{run.3} parent=0 // pred_check
    _
  $region11: #{run.3} parent=0 // pred_check_branch
    %25 = sbr.rel (0) target = $region13
  $region12: #{run.3} parent=0 // pred_region
    _
  $region13: #{run.3} parent=0 // pred_fallthru
    _
  // Predicated region
  $region14: #{run.3} parent=0 // pred_check
    _
  $region15: #{run.3} parent=0 // pred_check_branch
    %27 = sbr.rel (0) target = $region17
  $region16: #{run.3} parent=0 // pred_region
    _
  $region17: #{run.3} parent=0 // pred_fallthru
    _
  // Predicated region
  $region18: #{run.3} parent=0 // pred_check
    _
  $region19: #{run.3} parent=0 // pred_check_branch
    %29 = sbr.rel (0) target = $region21
  $region20: #{run.3} parent=0 // pred_region
    _
  $region21: #{run.3} parent=0 // pred_fallthru
    _
  // Predicated region
  $region22: #{run.3} parent=0 // pred_check
    _
  $region23: #{run.3} parent=0 // pred_check_branch
    %31 = sbr.rel (0) target = $region25
  $region24: #{run.3} parent=0 // pred_region
    _
  $region25: #{run.3} parent=0 // pred_fallthru
    _
  // Predicated region
  $region26: #{run.3} parent=0 // pred_check
    _
  $region27: #{run.3} parent=0 // pred_check_branch
    %33 = sbr.rel (0) target = $region29
  $region28: #{run.3} parent=0 // pred_region
    _
  $region29: #{run.3} parent=0 // pred_fallthru
    _
  // Predicated region
  $region30: #{run.3} parent=0 // pred_check
    _
  $region31: #{run.3} parent=0 // pred_check_branch
    %35 = sbr.rel (0) target = $region33
  $region32: #{run.3} parent=0 // pred_region
    _
  $region33: #{run.3} parent=0 // pred_fallthru
    _
  // Predicated region
  $region34: #{run.3} parent=0 // pred_check
    _
  $region35: #{run.3} parent=0 // pred_check_branch
    %37 = sbr.rel (0) target = $region37
  $region36: #{run.3} parent=0 // pred_region
    _
  $region37: #{run.3} parent=0 // pred_fallthru
    _
  // Predicated region
  $region38: #{run.3} parent=0 // pred_check
    _
  $region39: #{run.3} parent=0 // pred_check_branch
    %39 = sbr.rel (0) target = $region41
  $region40: #{run.3} parent=0 // pred_region
    _
  $region41: #{run.3} parent=0 // pred_fallthru
    _
  // Predicated region
  $region42: #{run.3} parent=0 // pred_check
    _
  $region43: #{run.3} parent=0 // pred_check_branch
    %41 = sbr.rel (0) target = $region45
  $region44: #{run.3} parent=0 // pred_region
    _
  $region45: #{run.3} parent=0 // pred_fallthru
    _
  // Predicated region
  $region46: #{run.3} parent=0 // pred_check
    _
  $region47: #{run.3} parent=0 // pred_check_branch
    %43 = sbr.rel (0) target = $region49
  $region48: #{run.3} parent=0 // pred_region
    _
  $region49: #{run.3} parent=0 // pred_fallthru
    _
  // Predicated region
  $region50: #{run.3} parent=0 // pred_check
    _
  $region51: #{run.3} parent=0 // pred_check_branch
    %45 = sbr.rel (0) target = $region53
  $region52: #{run.3} parent=0 // pred_region
    _
  $region53: #{run.3} parent=0 // pred_fallthru
    _
  %v47 = vld [vmem:[%s0] sm:$0xff]
  %v48 = vld [vmem:[%s0 + $0x8] sm:$0x3]
  %v49 = vld [vmem:[%s1] sm:$0xff]
  %v50 = vld [vmem:[%s1 + $0x8] sm:$0xff]
  %v51 = vld [vmem:[%s1 + $0x10] sm:$0xff]
  %v52 = vld [vmem:[%s1 + $0x18] sm:$0xff]
  %v53 = vld [vmem:[%s1 + $0x20] sm:$0xff]
  %v54 = vld [vmem:[%s1 + $0x28] sm:$0xff]
  %v55 = vld [vmem:[%s1 + $0x30] sm:$0xff]
  %v56 = vld [vmem:[%s1 + $0x38] sm:$0xff]
  %v57 = vld [vmem:[%s1 + $0x40] sm:$0xff]
  %v58 = vld [vmem:[%s1 + $0x48] sm:$0xff]
  %v59 = vld [vmem:[%s1 + $0x50] sm:$0xff]
  %v60 = vld [vmem:[%s1 + $0x58] sm:$0xff]
  %v61 = vld [vmem:[%s1 + $0x60] sm:$0xff]
  %v62 = vld [vmem:[%s1 + $0x68] sm:$0xff]
  %v63 = vld [vmem:[%s1 + $0x70] sm:$0xff]
  %v64 = vld [vmem:[%s1 + $0x78] sm:$0xff]
  %v65 = vld [vmem:[%s1 + $0x80] sm:$0xff]
  %v66 = vld [vmem:[%s1 + $0x88] sm:$0xff]
  %v67 = vld [vmem:[%s1 + $0x90] sm:$0xff]
  %v68 = vld [vmem:[%s1 + $0x98] sm:$0xff]
  %v69 = vld [vmem:[%s1 + $0xa0] sm:$0xff]
  %v70 = vld [vmem:[%s1 + $0xa8] sm:$0xff]
  %v71 = vld [vmem:[%s1 + $0xb0] sm:$0xff]
  %v72 = vld [vmem:[%s1 + $0xb8] sm:$0xff]
  %v73 = vld [vmem:[%s1 + $0xc0] sm:$0xff]
  %v74 = vld [vmem:[%s1 + $0xc8] sm:$0xff]
  %v75 = vld [vmem:[%s1 + $0xd0] sm:$0xff]
  %v76 = vld [vmem:[%s1 + $0xd8] sm:$0xff]
  %v77 = vld [vmem:[%s1 + $0xe0] sm:$0xff]
  %v78 = vld [vmem:[%s1 + $0xe8] sm:$0xff]
  %v79 = vld [vmem:[%s1 + $0xf0] sm:$0xff]
  %v80 = vld [vmem:[%s1 + $0xf8] sm:$0xff]
  %v81 = vld [vmem:[%s1 + $0x100] sm:$0xff]
  %v82 = vld [vmem:[%s1 + $0x108] sm:$0xff]
  %v83 = vld [vmem:[%s1 + $0x110] sm:$0xff]
  %v84 = vld [vmem:[%s1 + $0x118] sm:$0xff]
  %v85 = vld [vmem:[%s1 + $0x120] sm:$0xff]
  %v86 = vld [vmem:[%s1 + $0x128] sm:$0xff]
  %v87 = vld [vmem:[%s1 + $0x130] sm:$0xff]
  %v88 = vld [vmem:[%s1 + $0x138] sm:$0xff]
  %v89 = vld [vmem:[%s1 + $0x140] sm:$0xff]
  %v90 = vld [vmem:[%s1 + $0x148] sm:$0xff]
  %v91 = vld [vmem:[%s1 + $0x150] sm:$0xff]
  %v92 = vld [vmem:[%s1 + $0x158] sm:$0xff]
  %v93 = vld [vmem:[%s1 + $0x160] sm:$0xff]
  %v94 = vld [vmem:[%s1 + $0x168] sm:$0xff]
  %v95 = vld [vmem:[%s1 + $0x170] sm:$0xff]
  %v96 = vld [vmem:[%s1 + $0x178] sm:$0xff]
  %v97 = vld [vmem:[%s1 + $0x180] sm:$0xff]
  %v98 = vld [vmem:[%s1 + $0x188] sm:$0xff]
  %v99 = vld [vmem:[%s1 + $0x190] sm:$0xff]
  %v100 = vld [vmem:[%s1 + $0x198] sm:$0xff]
  %v101 = vld [vmem:[%s1 + $0x1a0] sm:$0xff]
  %v102 = vld [vmem:[%s1 + $0x1a8] sm:$0xff]
  %v103 = vld [vmem:[%s1 + $0x1b0] sm:$0xff]
  %v104 = vld [vmem:[%s1 + $0x1b8] sm:$0xff]
  %v105 = vld [vmem:[%s1 + $0x1c0] sm:$0xff]
  %v106 = vld [vmem:[%s1 + $0x1c8] sm:$0xff]
  %v107 = vld [vmem:[%s1 + $0x1d0] sm:$0xff]
  %v108 = vld [vmem:[%s1 + $0x1d8] sm:$0xff]
  %v109 = vld [vmem:[%s1 + $0x1e0] sm:$0xff]
  %v110 = vld [vmem:[%s1 + $0x1e8] sm:$0xff]
  %v111 = vld [vmem:[%s1 + $0x1f0] sm:$0xff]
  %v112 = vld [vmem:[%s1 + $0x1f8] sm:$0xff]
  %v113 = vld [vmem:[%s1 + $0x200] sm:$0xff]
  %v114 = vld [vmem:[%s1 + $0x208] sm:$0xff]
  %v115 = vld [vmem:[%s1 + $0x210] sm:$0xff]
  %v116 = vld [vmem:[%s1 + $0x218] sm:$0xff]
  %v117 = vld [vmem:[%s1 + $0x220] sm:$0xff]
  %v118 = vld [vmem:[%s1 + $0x228] sm:$0xff]
  %v119 = vld [vmem:[%s1 + $0x230] sm:$0xff]
  %v120 = vld [vmem:[%s1 + $0x238] sm:$0xff]
  %v121 = vld [vmem:[%s1 + $0x240] sm:$0xff]
  %v122 = vld [vmem:[%s1 + $0x248] sm:$0xff]
  %v123 = vld [vmem:[%s1 + $0x250] sm:$0xff]
  %v124 = vld [vmem:[%s1 + $0x258] sm:$0xff]
  %v125 = vld [vmem:[%s1 + $0x260] sm:$0xff]
  %v126 = vld [vmem:[%s1 + $0x268] sm:$0xff]
  %v127 = vld [vmem:[%s1 + $0x270] sm:$0xff]
  %v128 = vld [vmem:[%s1 + $0x278] sm:$0xff]
  %v129 = vld [vmem:[%s1 + $0x280] sm:$0xff]
  %v130 = vld [vmem:[%s1 + $0x288] sm:$0xff]
  %v131 = vld [vmem:[%s1 + $0x290] sm:$0xff]
  %v132 = vld [vmem:[%s1 + $0x298] sm:$0xff]
  %v133 = vld [vmem:[%s1 + $0x2a0] sm:$0xff]
  %v134 = vld [vmem:[%s1 + $0x2a8] sm:$0xff]
  %v135 = vld [vmem:[%s1 + $0x2b0] sm:$0xff]
  %v136 = vld [vmem:[%s1 + $0x2b8] sm:$0xff]
  %v137 = vld [vmem:[%s1 + $0x2c0] sm:$0xff]
  %v138 = vld [vmem:[%s1 + $0x2c8] sm:$0xff]
  %v139 = vld [vmem:[%s1 + $0x2d0] sm:$0xff]
  %v140 = vld [vmem:[%s1 + $0x2d8] sm:$0xff]
  %v141 = vld [vmem:[%s1 + $0x2e0] sm:$0xff]
  %v142 = vld [vmem:[%s1 + $0x2e8] sm:$0xff]
  %v143 = vld [vmem:[%s1 + $0x2f0] sm:$0xff]
  %v144 = vld [vmem:[%s1 + $0x2f8] sm:$0xff]
  %v145 = vld [vmem:[%s1 + $0x300] sm:$0xff]
  %v146 = vld [vmem:[%s1 + $0x308] sm:$0xff]
  %v147 = vld [vmem:[%s1 + $0x310] sm:$0xff]
  %v148 = vld [vmem:[%s1 + $0x318] sm:$0xff]
  %v149 = vld [vmem:[%s1 + $0x320] sm:$0xff]
  %v150 = vld [vmem:[%s1 + $0x328] sm:$0xff]
  %v151 = vld [vmem:[%s1 + $0x330] sm:$0xff]
  %v152 = vld [vmem:[%s1 + $0x338] sm:$0xff]
  %v153 = vld [vmem:[%s1 + $0x340] sm:$0xff]
  %v154 = vld [vmem:[%s1 + $0x348] sm:$0xff]
  %v155 = vld [vmem:[%s1 + $0x350] sm:$0xff]
  %v156 = vld [vmem:[%s1 + $0x358] sm:$0xff]
  %v157 = vld [vmem:[%s1 + $0x360] sm:$0xff]
  %v158 = vld [vmem:[%s1 + $0x368] sm:$0xff]
  %v159 = vld [vmem:[%s1 + $0x370] sm:$0xff]
  %v160 = vld [vmem:[%s1 + $0x378] sm:$0xff]
  %v161 = vld [vmem:[%s1 + $0x380] sm:$0xff]
  %v162 = vld [vmem:[%s1 + $0x388] sm:$0xff]
  %v163 = vld [vmem:[%s1 + $0x390] sm:$0xff]
  %v164 = vld [vmem:[%s1 + $0x398] sm:$0xff]
  %v165 = vld [vmem:[%s1 + $0x3a0] sm:$0xff]
  %v166 = vld [vmem:[%s1 + $0x3a8] sm:$0xff]
  %v167 = vld [vmem:[%s1 + $0x3b0] sm:$0xff]
  %v168 = vld [vmem:[%s1 + $0x3b8] sm:$0xff]
  %v169 = vld [vmem:[%s1 + $0x3c0] sm:$0xff]
  %v170 = vld [vmem:[%s1 + $0x3c8] sm:$0xff]
  %v171 = vld [vmem:[%s1 + $0x3d0] sm:$0xff]
  %v172 = vld [vmem:[%s1 + $0x3d8] sm:$0xff]
  %v173 = vld [vmem:[%s1 + $0x3e0] sm:$0xff]
  %v174 = vld [vmem:[%s1 + $0x3e8] sm:$0xff]
  %v175 = vld [vmem:[%s1 + $0x3f0] sm:$0xff]
  %v176 = vld [vmem:[%s1 + $0x3f8] sm:$0xff]
  %v177 = vld [vmem:[%s1 + $0x400] sm:$0xff]
  %v178 = vld [vmem:[%s1 + $0x408] sm:$0xff]
  %v179 = vld [vmem:[%s1 + $0x410] sm:$0xff]
  %v180 = vld [vmem:[%s1 + $0x418] sm:$0xff]
  %v181 = vld [vmem:[%s1 + $0x420] sm:$0xff]
  %v182 = vld [vmem:[%s1 + $0x428] sm:$0xff]
  %v183 = vld [vmem:[%s1 + $0x430] sm:$0xff]
  %v184 = vld [vmem:[%s1 + $0x438] sm:$0xff]
  %v185 = vld [vmem:[%s1 + $0x440] sm:$0xff]
  %v186 = vld [vmem:[%s1 + $0x448] sm:$0xff]
  %v187 = vld [vmem:[%s1 + $0x450] sm:$0xff]
  %v188 = vld [vmem:[%s1 + $0x458] sm:$0xff]
  %v189 = vld [vmem:[%s1 + $0x460] sm:$0xff]
  %v190 = vld [vmem:[%s1 + $0x468] sm:$0xff]
  %v191 = vld [vmem:[%s1 + $0x470] sm:$0xff]
  %v192 = vld [vmem:[%s1 + $0x478] sm:$0xff]
  %v193 = vld [vmem:[%s1 + $0x480] sm:$0xff]
  %v194 = vld [vmem:[%s1 + $0x488] sm:$0xff]
  %v195 = vld [vmem:[%s1 + $0x490] sm:$0xff]
  %v196 = vld [vmem:[%s1 + $0x498] sm:$0xff]
  %v197 = vld [vmem:[%s1 + $0x4a0] sm:$0xff]
  %v198 = vld [vmem:[%s1 + $0x4a8] sm:$0xff]
  %v199 = vld [vmem:[%s1 + $0x4b0] sm:$0xff]
  %v200 = vld [vmem:[%s1 + $0x4b8] sm:$0xff]
  %v201 = vld [vmem:[%s1 + $0x4c0] sm:$0xff]
  %v202 = vld [vmem:[%s1 + $0x4c8] sm:$0xff]
  %v203 = vld [vmem:[%s1 + $0x4d0] sm:$0xff]
  %v204 = vld [vmem:[%s1 + $0x4d8] sm:$0xff]
  %v205 = vld [vmem:[%s1 + $0x4e0] sm:$0xff]
  %v206 = vld [vmem:[%s1 + $0x4e8] sm:$0xff]
  %v207 = vld [vmem:[%s1 + $0x4f0] sm:$0xff]
  %v208 = vld [vmem:[%s1 + $0x4f8] sm:$0xff]
  %v209 = vld [vmem:[%s1 + $0x500] sm:$0xff]
  %v210 = vld [vmem:[%s1 + $0x508] sm:$0xff]
  %v211 = vld [vmem:[%s1 + $0x510] sm:$0xff]
  %v212 = vld [vmem:[%s1 + $0x518] sm:$0xff]
  %v213 = vld [vmem:[%s1 + $0x520] sm:$0xff]
  %v214 = vld [vmem:[%s1 + $0x528] sm:$0xff]
  %v215 = vld [vmem:[%s1 + $0x530] sm:$0xff]
  %v216 = vld [vmem:[%s1 + $0x538] sm:$0xff]
  %v217 = vld [vmem:[%s1 + $0x540] sm:$0xff]
  %v218 = vld [vmem:[%s1 + $0x548] sm:$0xff]
  %v219 = vld [vmem:[%s1 + $0x550] sm:$0xff]
  %v220 = vld [vmem:[%s1 + $0x558] sm:$0xff]
  %v221 = vld [vmem:[%s1 + $0x560] sm:$0xff]
  %v222 = vld [vmem:[%s1 + $0x568] sm:$0xff]
  %v223 = vld [vmem:[%s1 + $0x570] sm:$0xff]
  %v224 = vld [vmem:[%s1 + $0x578] sm:$0xff]
  %v225 = vld [vmem:[%s1 + $0x580] sm:$0xff]
  %v226 = vld [vmem:[%s1 + $0x588] sm:$0xff]
  %v227 = vld [vmem:[%s1 + $0x590] sm:$0xff]
  %v228 = vld [vmem:[%s1 + $0x598] sm:$0xff]
  %v229 = vld [vmem:[%s1 + $0x5a0] sm:$0xff]
  %v230 = vld [vmem:[%s1 + $0x5a8] sm:$0xff]
  %v231 = vld [vmem:[%s1 + $0x5b0] sm:$0xff]
  %v232 = vld [vmem:[%s1 + $0x5b8] sm:$0xff]
  %v233 = vld [vmem:[%s1 + $0x5c0] sm:$0xff]
  %v234 = vld [vmem:[%s1 + $0x5c8] sm:$0xff]
  %v235 = vld [vmem:[%s1 + $0x5d0] sm:$0xff]
  %v236 = vld [vmem:[%s1 + $0x5d8] sm:$0xff]
  %v237 = vld [vmem:[%s1 + $0x5e0] sm:$0xff]
  %v238 = vld [vmem:[%s1 + $0x5e8] sm:$0xff]
  %v239 = vld [vmem:[%s1 + $0x5f0] sm:$0xff]
  %v240 = vld [vmem:[%s1 + $0x5f8] sm:$0xff]
  %v241 = vld [vmem:[%s1 + $0x600] sm:$0xff]
  %v242 = vld [vmem:[%s1 + $0x608] sm:$0xff]
  %v243 = vld [vmem:[%s1 + $0x610] sm:$0xff]
  %v244 = vld [vmem:[%s1 + $0x618] sm:$0xff]
  %v245 = vld [vmem:[%s1 + $0x620] sm:$0xff]
  %v246 = vld [vmem:[%s1 + $0x628] sm:$0xff]
  %v247 = vld [vmem:[%s1 + $0x630] sm:$0xff]
  %v248 = vld [vmem:[%s1 + $0x638] sm:$0xff]
  %v249 = vld [vmem:[%s1 + $0x640] sm:$0xff]
  %v250 = vld [vmem:[%s1 + $0x648] sm:$0xff]
  %v251 = vld [vmem:[%s1 + $0x650] sm:$0xff]
  %v252 = vld [vmem:[%s1 + $0x658] sm:$0xff]
  %v253 = vld [vmem:[%s1 + $0x660] sm:$0xff]
  %v254 = vld [vmem:[%s1 + $0x668] sm:$0xff]
  %v255 = vld [vmem:[%s1 + $0x670] sm:$0xff]
  %v256 = vld [vmem:[%s1 + $0x678] sm:$0xff]
  %v257 = vld [vmem:[%s1 + $0x680] sm:$0xff]
  %v258 = vld [vmem:[%s1 + $0x688] sm:$0xff]
  %v259 = vld [vmem:[%s1 + $0x690] sm:$0xff]
  %v260 = vld [vmem:[%s1 + $0x698] sm:$0xff]
  %v261 = vld [vmem:[%s1 + $0x6a0] sm:$0xff]
  %v262 = vld [vmem:[%s1 + $0x6a8] sm:$0xff]
  %v263 = vld [vmem:[%s1 + $0x6b0] sm:$0xff]
  %v264 = vld [vmem:[%s1 + $0x6b8] sm:$0xff]
  %v265 = vld [vmem:[%s1 + $0x6c0] sm:$0xff]
  %v266 = vld [vmem:[%s1 + $0x6c8] sm:$0xff]
  %v267 = vld [vmem:[%s1 + $0x6d0] sm:$0xff]
  %v268 = vld [vmem:[%s1 + $0x6d8] sm:$0xff]
  %v269 = vld [vmem:[%s1 + $0x6e0] sm:$0xff]
  %v270 = vld [vmem:[%s1 + $0x6e8] sm:$0xff]
  %v271 = vld [vmem:[%s1 + $0x6f0] sm:$0xff]
  %v272 = vld [vmem:[%s1 + $0x6f8] sm:$0xff]
  %v273 = vld [vmem:[%s1 + $0x700] sm:$0xff]
  %v274 = vld [vmem:[%s1 + $0x708] sm:$0xff]
  %v275 = vld [vmem:[%s1 + $0x710] sm:$0xff]
  %v276 = vld [vmem:[%s1 + $0x718] sm:$0xff]
  %v277 = vld [vmem:[%s1 + $0x720] sm:$0xff]
  %v278 = vld [vmem:[%s1 + $0x728] sm:$0xff]
  %v279 = vld [vmem:[%s1 + $0x730] sm:$0xff]
  %v280 = vld [vmem:[%s1 + $0x738] sm:$0xff]
  %v281 = vld [vmem:[%s1 + $0x740] sm:$0xff]
  %v282 = vld [vmem:[%s1 + $0x748] sm:$0xff]
  %v283 = vld [vmem:[%s1 + $0x750] sm:$0xff]
  %v284 = vld [vmem:[%s1 + $0x758] sm:$0xff]
  %v285 = vld [vmem:[%s1 + $0x760] sm:$0xff]
  %v286 = vld [vmem:[%s1 + $0x768] sm:$0xff]
  %v287 = vld [vmem:[%s1 + $0x770] sm:$0xff]
  %v288 = vld [vmem:[%s1 + $0x778] sm:$0xff]
  %v289 = vld [vmem:[%s1 + $0x780] sm:$0xff]
  %v290 = vld [vmem:[%s1 + $0x788] sm:$0xff]
  %v291 = vld [vmem:[%s1 + $0x790] sm:$0xff]
  %v292 = vld [vmem:[%s1 + $0x798] sm:$0xff]
  %v293 = vld [vmem:[%s1 + $0x7a0] sm:$0xff]
  %v294 = vld [vmem:[%s1 + $0x7a8] sm:$0xff]
  %v295 = vld [vmem:[%s1 + $0x7b0] sm:$0xff]
  %v296 = vld [vmem:[%s1 + $0x7b8] sm:$0xff]
  %v297 = vld [vmem:[%s1 + $0x7c0] sm:$0xff]
  %v298 = vld [vmem:[%s1 + $0x7c8] sm:$0xff]
  %v299 = vld [vmem:[%s1 + $0x7d0] sm:$0xff]
  %v300 = vld [vmem:[%s1 + $0x7d8] sm:$0xff]
  %v301 = vld [vmem:[%s1 + $0x7e0] sm:$0xff]
  %v302 = vld [vmem:[%s1 + $0x7e8] sm:$0xff]
  %v303 = vld [vmem:[%s1 + $0x7f0] sm:$0xff]
  %v304 = vld [vmem:[%s1 + $0x7f8] sm:$0xff]
  %v305 = vld [vmem:[%s1 + $0x800] sm:$0xff]
  %v306 = vld [vmem:[%s1 + $0x808] sm:$0xff]
  %v307 = vld [vmem:[%s1 + $0x810] sm:$0xff]
  %v308 = vld [vmem:[%s1 + $0x818] sm:$0xff]
  %v309 = vld [vmem:[%s1 + $0x820] sm:$0xff]
  %v310 = vld [vmem:[%s1 + $0x828] sm:$0xff]
  %v311 = vld [vmem:[%s1 + $0x830] sm:$0xff]
  %v312 = vld [vmem:[%s1 + $0x838] sm:$0xff]
  %v313 = vld [vmem:[%s1 + $0x840] sm:$0xff]
  %v314 = vld [vmem:[%s1 + $0x848] sm:$0xff]
  %v315 = vld [vmem:[%s1 + $0x850] sm:$0xff]
  %v316 = vld [vmem:[%s1 + $0x858] sm:$0xff]
  %v317 = vld [vmem:[%s1 + $0x860] sm:$0xff]
  %v318 = vld [vmem:[%s1 + $0x868] sm:$0xff]
  %v319 = vld [vmem:[%s1 + $0x870] sm:$0xff]
  %v320 = vld [vmem:[%s1 + $0x878] sm:$0xff]
  %v321 = vld [vmem:[%s1 + $0x880] sm:$0xff]
  %v322 = vld [vmem:[%s1 + $0x888] sm:$0xff]
  %v323 = vld [vmem:[%s1 + $0x890] sm:$0xff]
  %v324 = vld [vmem:[%s1 + $0x898] sm:$0xff]
  %v325 = vld [vmem:[%s1 + $0x8a0] sm:$0xff]
  %v326 = vld [vmem:[%s1 + $0x8a8] sm:$0xff]
  %v327 = vld [vmem:[%s1 + $0x8b0] sm:$0xff]
  %v328 = vld [vmem:[%s1 + $0x8b8] sm:$0xff]
  %v329 = vld [vmem:[%s1 + $0x8c0] sm:$0xff]
  %v330 = vld [vmem:[%s1 + $0x8c8] sm:$0xff]
  %v331 = vld [vmem:[%s1 + $0x8d0] sm:$0xff]
  %v332 = vld [vmem:[%s1 + $0x8d8] sm:$0xff]
  %v333 = vld [vmem:[%s1 + $0x8e0] sm:$0xff]
  %v334 = vld [vmem:[%s1 + $0x8e8] sm:$0xff]
  %v335 = vld [vmem:[%s1 + $0x8f0] sm:$0xff]
  %v336 = vld [vmem:[%s1 + $0x8f8] sm:$0xff]
  %v337 = vld [vmem:[%s2] sm:$0xff]
  %v339 = vlaneseq
  %v340 = vshrl.u32 %v339, 7
  %v341 = vsub.s32 0, %v340
  %v342 = vrot.slane %v337, %v341
  %v343 = vlaneseq
  %v344 = vshrl.u32 %v343, 7
  %v345 = vsub.s32 1, %v344
  %v346 = vrot.slane %v337, %v345
  %v347 = vlaneseq
  %v348 = vshrl.u32 %v347, 7
  %v349 = vsub.s32 2, %v348
  %v350 = vrot.slane %v337, %v349
  %v351 = vlaneseq
  %v352 = vshrl.u32 %v351, 7
  %v353 = vsub.s32 3, %v352
  %v354 = vrot.slane %v337, %v353
  %v355 = vlaneseq
  %v356 = vshrl.u32 %v355, 7
  %v357 = vsub.s32 4, %v356
  %v358 = vrot.slane %v337, %v357
  %v359 = vlaneseq
  %v360 = vshrl.u32 %v359, 7
  %v361 = vsub.s32 5, %v360
  %v362 = vrot.slane %v337, %v361
  %v363 = vlaneseq
  %v364 = vshrl.u32 %v363, 7
  %v365 = vsub.s32 6, %v364
  %v366 = vrot.slane %v337, %v365
  %v367 = vlaneseq
  %v368 = vshrl.u32 %v367, 7
  %v369 = vsub.s32 7, %v368
  %v370 = vrot.slane %v337, %v369
  %v381 = vcombine.high %v47, %v47
  %v383 = vunpack.c.l.s4 1983009808
  %v384 = vunpack.c.0.s8 %v383
  %v385 = vlaneseq
  %v386 = vshrl.u32 %v385, 7
  %v387 = vsub.s32 %v384, %v386
  %v388 = vrot.slane %v47, %v387
  %v390 = vunpack.c.l.s4 1983009808
  %v391 = vunpack.c.0.s8 %v390
  %v392 = vlaneseq
  %v393 = vshrl.u32 %v392, 7
  %v394 = vsub.s32 %v391, %v393
  %v395 = vrot.slane %v381, %v394
  %v396 = vcombine.high %v388, %v388
  %v397 = vcombine.high %v395, %v395
  %v399 = vunpack.c.l.s4 1983009808
  %v400 = vunpack.c.0.s8 %v399
  %v401 = vlaneseq
  %v402 = vshrl.u32 %v401, 7
  %v403 = vsub.s32 %v400, %v402
  %v404 = vrot.slane %v48, %v403
  %v697 = vunpack.c.l.b16 %v49
  %v698 = vunpack.c.h.b16 %v49
  %v699 = vunpack.c.l.b16 %v50
  %v700 = vunpack.c.h.b16 %v50
  %v701 = vunpack.c.l.b16 %v51
  %v702 = vunpack.c.h.b16 %v51
  %v703 = vunpack.c.l.b16 %v52
  %v704 = vunpack.c.h.b16 %v52
  %v705 = vunpack.c.l.b16 %v53
  %v706 = vunpack.c.h.b16 %v53
  %v707 = vunpack.c.l.b16 %v54
  %v708 = vunpack.c.h.b16 %v54
  %v709 = vunpack.c.l.b16 %v55
  %v710 = vunpack.c.h.b16 %v55
  %v711 = vunpack.c.l.b16 %v56
  %v712 = vunpack.c.h.b16 %v56
  %v713 = vunpack.c.l.b16 %v57
  %v714 = vunpack.c.h.b16 %v57
  %v715 = vunpack.c.l.b16 %v58
  %v716 = vunpack.c.h.b16 %v58
  %v717 = vunpack.c.l.b16 %v59
  %v718 = vunpack.c.h.b16 %v59
  %v719 = vunpack.c.l.b16 %v60
  %v720 = vunpack.c.h.b16 %v60
  %v721 = vunpack.c.l.b16 %v61
  %v722 = vunpack.c.h.b16 %v61
  %v723 = vunpack.c.l.b16 %v62
  %v724 = vunpack.c.h.b16 %v62
  %v725 = vunpack.c.l.b16 %v63
  %v726 = vunpack.c.h.b16 %v63
  %v727 = vunpack.c.l.b16 %v64
  %v728 = vunpack.c.h.b16 %v64
  %v729 = vunpack.c.l.b16 %v65
  %v730 = vunpack.c.h.b16 %v65
  %v731 = vunpack.c.l.b16 %v66
  %v732 = vunpack.c.h.b16 %v66
  %v733 = vunpack.c.l.b16 %v67
  %v734 = vunpack.c.h.b16 %v67
  %v735 = vunpack.c.l.b16 %v68
  %v736 = vunpack.c.h.b16 %v68
  %v737 = vunpack.c.l.b16 %v69
  %v738 = vunpack.c.h.b16 %v69
  %v739 = vunpack.c.l.b16 %v70
  %v740 = vunpack.c.h.b16 %v70
  %v741 = vunpack.c.l.b16 %v71
  %v742 = vunpack.c.h.b16 %v71
  %v743 = vunpack.c.l.b16 %v72
  %v744 = vunpack.c.h.b16 %v72
  %v745 = vunpack.c.l.b16 %v73
  %v746 = vunpack.c.h.b16 %v73
  %v747 = vunpack.c.l.b16 %v74
  %v748 = vunpack.c.h.b16 %v74
  %v749 = vunpack.c.l.b16 %v75
  %v750 = vunpack.c.h.b16 %v75
  %v751 = vunpack.c.l.b16 %v76
  %v752 = vunpack.c.h.b16 %v76
  %v753 = vunpack.c.l.b16 %v77
  %v754 = vunpack.c.h.b16 %v77
  %v755 = vunpack.c.l.b16 %v78
  %v756 = vunpack.c.h.b16 %v78
  %v757 = vunpack.c.l.b16 %v79
  %v758 = vunpack.c.h.b16 %v79
  %v759 = vunpack.c.l.b16 %v80
  %v760 = vunpack.c.h.b16 %v80
  %v761 = vunpack.c.l.b16 %v81
  %v762 = vunpack.c.h.b16 %v81
  %v763 = vunpack.c.l.b16 %v82
  %v764 = vunpack.c.h.b16 %v82
  %v765 = vunpack.c.l.b16 %v83
  %v766 = vunpack.c.h.b16 %v83
  %v767 = vunpack.c.l.b16 %v84
  %v768 = vunpack.c.h.b16 %v84
  %v769 = vunpack.c.l.b16 %v85
  %v770 = vunpack.c.h.b16 %v85
  %v771 = vunpack.c.l.b16 %v86
  %v772 = vunpack.c.h.b16 %v86
  %v773 = vunpack.c.l.b16 %v87
  %v774 = vunpack.c.h.b16 %v87
  %v775 = vunpack.c.l.b16 %v88
  %v776 = vunpack.c.h.b16 %v88
  %v777 = vunpack.c.l.b16 %v89
  %v778 = vunpack.c.h.b16 %v89
  %v779 = vunpack.c.l.b16 %v90
  %v780 = vunpack.c.h.b16 %v90
  %v781 = vunpack.c.l.b16 %v91
  %v782 = vunpack.c.h.b16 %v91
  %v783 = vunpack.c.l.b16 %v92
  %v784 = vunpack.c.h.b16 %v92
  %v785 = vunpack.c.l.b16 %v93
  %v786 = vunpack.c.h.b16 %v93
  %v787 = vunpack.c.l.b16 %v94
  %v788 = vunpack.c.h.b16 %v94
  %v789 = vunpack.c.l.b16 %v95
  %v790 = vunpack.c.h.b16 %v95
  %v791 = vunpack.c.l.b16 %v96
  %v792 = vunpack.c.h.b16 %v96
  %v793 = vunpack.c.l.b16 %v97
  %v794 = vunpack.c.h.b16 %v97
  %v795 = vunpack.c.l.b16 %v98
  %v796 = vunpack.c.h.b16 %v98
  %v797 = vunpack.c.l.b16 %v99
  %v798 = vunpack.c.h.b16 %v99
  %v799 = vunpack.c.l.b16 %v100
  %v800 = vunpack.c.h.b16 %v100
  %v801 = vunpack.c.l.b16 %v101
  %v802 = vunpack.c.h.b16 %v101
  %v803 = vunpack.c.l.b16 %v102
  %v804 = vunpack.c.h.b16 %v102
  %v805 = vunpack.c.l.b16 %v103
  %v806 = vunpack.c.h.b16 %v103
  %v807 = vunpack.c.l.b16 %v104
  %v808 = vunpack.c.h.b16 %v104
  %v809 = vunpack.c.l.b16 %v105
  %v810 = vunpack.c.h.b16 %v105
  %v811 = vunpack.c.l.b16 %v106
  %v812 = vunpack.c.h.b16 %v106
  %v813 = vunpack.c.l.b16 %v107
  %v814 = vunpack.c.h.b16 %v107
  %v815 = vunpack.c.l.b16 %v108
  %v816 = vunpack.c.h.b16 %v108
  %v817 = vunpack.c.l.b16 %v109
  %v818 = vunpack.c.h.b16 %v109
  %v819 = vunpack.c.l.b16 %v110
  %v820 = vunpack.c.h.b16 %v110
  %v821 = vunpack.c.l.b16 %v111
  %v822 = vunpack.c.h.b16 %v111
  %v823 = vunpack.c.l.b16 %v112
  %v824 = vunpack.c.h.b16 %v112
  %v825 = vunpack.c.l.b16 %v113
  %v826 = vunpack.c.h.b16 %v113
  %v827 = vunpack.c.l.b16 %v114
  %v828 = vunpack.c.h.b16 %v114
  %v829 = vunpack.c.l.b16 %v115
  %v830 = vunpack.c.h.b16 %v115
  %v831 = vunpack.c.l.b16 %v116
  %v832 = vunpack.c.h.b16 %v116
  %v833 = vunpack.c.l.b16 %v117
  %v834 = vunpack.c.h.b16 %v117
  %v835 = vunpack.c.l.b16 %v118
  %v836 = vunpack.c.h.b16 %v118
  %v837 = vunpack.c.l.b16 %v119
  %v838 = vunpack.c.h.b16 %v119
  %v839 = vunpack.c.l.b16 %v120
  %v840 = vunpack.c.h.b16 %v120
  %v841 = vunpack.c.l.b16 %v121
  %v842 = vunpack.c.h.b16 %v121
  %v843 = vunpack.c.l.b16 %v122
  %v844 = vunpack.c.h.b16 %v122
  %v845 = vunpack.c.l.b16 %v123
  %v846 = vunpack.c.h.b16 %v123
  %v847 = vunpack.c.l.b16 %v124
  %v848 = vunpack.c.h.b16 %v124
  %v849 = vunpack.c.l.b16 %v125
  %v850 = vunpack.c.h.b16 %v125
  %v851 = vunpack.c.l.b16 %v126
  %v852 = vunpack.c.h.b16 %v126
  %v853 = vunpack.c.l.b16 %v127
  %v854 = vunpack.c.h.b16 %v127
  %v855 = vunpack.c.l.b16 %v128
  %v856 = vunpack.c.h.b16 %v128
  %v857 = vunpack.c.l.b16 %v129
  %v858 = vunpack.c.h.b16 %v129
  %v859 = vunpack.c.l.b16 %v130
  %v860 = vunpack.c.h.b16 %v130
  %v861 = vunpack.c.l.b16 %v131
  %v862 = vunpack.c.h.b16 %v131
  %v863 = vunpack.c.l.b16 %v132
  %v864 = vunpack.c.h.b16 %v132
  %v865 = vunpack.c.l.b16 %v133
  %v866 = vunpack.c.h.b16 %v133
  %v867 = vunpack.c.l.b16 %v134
  %v868 = vunpack.c.h.b16 %v134
  %v869 = vunpack.c.l.b16 %v135
  %v870 = vunpack.c.h.b16 %v135
  %v871 = vunpack.c.l.b16 %v136
  %v872 = vunpack.c.h.b16 %v136
  %v873 = vunpack.c.l.b16 %v137
  %v874 = vunpack.c.h.b16 %v137
  %v875 = vunpack.c.l.b16 %v138
  %v876 = vunpack.c.h.b16 %v138
  %v877 = vunpack.c.l.b16 %v139
  %v878 = vunpack.c.h.b16 %v139
  %v879 = vunpack.c.l.b16 %v140
  %v880 = vunpack.c.h.b16 %v140
  %v881 = vunpack.c.l.b16 %v141
  %v882 = vunpack.c.h.b16 %v141
  %v883 = vunpack.c.l.b16 %v142
  %v884 = vunpack.c.h.b16 %v142
  %v885 = vunpack.c.l.b16 %v143
  %v886 = vunpack.c.h.b16 %v143
  %v887 = vunpack.c.l.b16 %v144
  %v888 = vunpack.c.h.b16 %v144
  %v889 = vunpack.c.l.b16 %v145
  %v890 = vunpack.c.h.b16 %v145
  %v891 = vunpack.c.l.b16 %v146
  %v892 = vunpack.c.h.b16 %v146
  %v893 = vunpack.c.l.b16 %v147
  %v894 = vunpack.c.h.b16 %v147
  %v895 = vunpack.c.l.b16 %v148
  %v896 = vunpack.c.h.b16 %v148
  %v897 = vunpack.c.l.b16 %v149
  %v898 = vunpack.c.h.b16 %v149
  %v899 = vunpack.c.l.b16 %v150
  %v900 = vunpack.c.h.b16 %v150
  %v901 = vunpack.c.l.b16 %v151
  %v902 = vunpack.c.h.b16 %v151
  %v903 = vunpack.c.l.b16 %v152
  %v904 = vunpack.c.h.b16 %v152
  %v905 = vunpack.c.l.b16 %v153
  %v906 = vunpack.c.h.b16 %v153
  %v907 = vunpack.c.l.b16 %v154
  %v908 = vunpack.c.h.b16 %v154
  %v909 = vunpack.c.l.b16 %v155
  %v910 = vunpack.c.h.b16 %v155
  %v911 = vunpack.c.l.b16 %v156
  %v912 = vunpack.c.h.b16 %v156
  %v913 = vunpack.c.l.b16 %v157
  %v914 = vunpack.c.h.b16 %v157
  %v915 = vunpack.c.l.b16 %v158
  %v916 = vunpack.c.h.b16 %v158
  %v917 = vunpack.c.l.b16 %v159
  %v918 = vunpack.c.h.b16 %v159
  %v919 = vunpack.c.l.b16 %v160
  %v920 = vunpack.c.h.b16 %v160
  %v921 = vunpack.c.l.b16 %v161
  %v922 = vunpack.c.h.b16 %v161
  %v923 = vunpack.c.l.b16 %v162
  %v924 = vunpack.c.h.b16 %v162
  %v925 = vunpack.c.l.b16 %v163
  %v926 = vunpack.c.h.b16 %v163
  %v927 = vunpack.c.l.b16 %v164
  %v928 = vunpack.c.h.b16 %v164
  %v929 = vunpack.c.l.b16 %v165
  %v930 = vunpack.c.h.b16 %v165
  %v931 = vunpack.c.l.b16 %v166
  %v932 = vunpack.c.h.b16 %v166
  %v933 = vunpack.c.l.b16 %v167
  %v934 = vunpack.c.h.b16 %v167
  %v935 = vunpack.c.l.b16 %v168
  %v936 = vunpack.c.h.b16 %v168
  %v937 = vunpack.c.l.b16 %v169
  %v938 = vunpack.c.h.b16 %v169
  %v939 = vunpack.c.l.b16 %v170
  %v940 = vunpack.c.h.b16 %v170
  %v941 = vunpack.c.l.b16 %v171
  %v942 = vunpack.c.h.b16 %v171
  %v943 = vunpack.c.l.b16 %v172
  %v944 = vunpack.c.h.b16 %v172
  %v945 = vunpack.c.l.b16 %v173
  %v946 = vunpack.c.h.b16 %v173
  %v947 = vunpack.c.l.b16 %v174
  %v948 = vunpack.c.h.b16 %v174
  %v949 = vunpack.c.l.b16 %v175
  %v950 = vunpack.c.h.b16 %v175
  %v951 = vunpack.c.l.b16 %v176
  %v952 = vunpack.c.h.b16 %v176
  %v953 = vunpack.c.l.b16 %v177
  %v954 = vunpack.c.h.b16 %v177
  %v955 = vunpack.c.l.b16 %v178
  %v956 = vunpack.c.h.b16 %v178
  %v957 = vunpack.c.l.b16 %v179
  %v958 = vunpack.c.h.b16 %v179
  %v959 = vunpack.c.l.b16 %v180
  %v960 = vunpack.c.h.b16 %v180
  %v961 = vunpack.c.l.b16 %v181
  %v962 = vunpack.c.h.b16 %v181
  %v963 = vunpack.c.l.b16 %v182
  %v964 = vunpack.c.h.b16 %v182
  %v965 = vunpack.c.l.b16 %v183
  %v966 = vunpack.c.h.b16 %v183
  %v967 = vunpack.c.l.b16 %v184
  %v968 = vunpack.c.h.b16 %v184
  %v969 = vunpack.c.l.b16 %v185
  %v970 = vunpack.c.h.b16 %v185
  %v971 = vunpack.c.l.b16 %v186
  %v972 = vunpack.c.h.b16 %v186
  %v973 = vunpack.c.l.b16 %v187
  %v974 = vunpack.c.h.b16 %v187
  %v975 = vunpack.c.l.b16 %v188
  %v976 = vunpack.c.h.b16 %v188
  %v977 = vunpack.c.l.b16 %v189
  %v978 = vunpack.c.h.b16 %v189
  %v979 = vunpack.c.l.b16 %v190
  %v980 = vunpack.c.h.b16 %v190
  %v981 = vunpack.c.l.b16 %v191
  %v982 = vunpack.c.h.b16 %v191
  %v983 = vunpack.c.l.b16 %v192
  %v984 = vunpack.c.h.b16 %v192
  %v985 = vunpack.c.l.b16 %v193
  %v986 = vunpack.c.h.b16 %v193
  %v987 = vunpack.c.l.b16 %v194
  %v988 = vunpack.c.h.b16 %v194
  %v989 = vunpack.c.l.b16 %v195
  %v990 = vunpack.c.h.b16 %v195
  %v991 = vunpack.c.l.b16 %v196
  %v992 = vunpack.c.h.b16 %v196
  %v993 = vunpack.c.l.b16 %v197
  %v994 = vunpack.c.h.b16 %v197
  %v995 = vunpack.c.l.b16 %v198
  %v996 = vunpack.c.h.b16 %v198
  %v997 = vunpack.c.l.b16 %v199
  %v998 = vunpack.c.h.b16 %v199
  %v999 = vunpack.c.l.b16 %v200
  %v1000 = vunpack.c.h.b16 %v200
  %v1001 = vunpack.c.l.b16 %v201
  %v1002 = vunpack.c.h.b16 %v201
  %v1003 = vunpack.c.l.b16 %v202
  %v1004 = vunpack.c.h.b16 %v202
  %v1005 = vunpack.c.l.b16 %v203
  %v1006 = vunpack.c.h.b16 %v203
  %v1007 = vunpack.c.l.b16 %v204
  %v1008 = vunpack.c.h.b16 %v204
  %v1009 = vunpack.c.l.b16 %v205
  %v1010 = vunpack.c.h.b16 %v205
  %v1011 = vunpack.c.l.b16 %v206
  %v1012 = vunpack.c.h.b16 %v206
  %v1013 = vunpack.c.l.b16 %v207
  %v1014 = vunpack.c.h.b16 %v207
  %v1015 = vunpack.c.l.b16 %v208
  %v1016 = vunpack.c.h.b16 %v208
  %v1017 = vunpack.c.l.b16 %v209
  %v1018 = vunpack.c.h.b16 %v209
  %v1019 = vunpack.c.l.b16 %v210
  %v1020 = vunpack.c.h.b16 %v210
  %v1021 = vunpack.c.l.b16 %v211
  %v1022 = vunpack.c.h.b16 %v211
  %v1023 = vunpack.c.l.b16 %v212
  %v1024 = vunpack.c.h.b16 %v212
  %v1025 = vunpack.c.l.b16 %v213
  %v1026 = vunpack.c.h.b16 %v213
  %v1027 = vunpack.c.l.b16 %v214
  %v1028 = vunpack.c.h.b16 %v214
  %v1029 = vunpack.c.l.b16 %v215
  %v1030 = vunpack.c.h.b16 %v215
  %v1031 = vunpack.c.l.b16 %v216
  %v1032 = vunpack.c.h.b16 %v216
  %v1033 = vunpack.c.l.b16 %v217
  %v1034 = vunpack.c.h.b16 %v217
  %v1035 = vunpack.c.l.b16 %v218
  %v1036 = vunpack.c.h.b16 %v218
  %v1037 = vunpack.c.l.b16 %v219
  %v1038 = vunpack.c.h.b16 %v219
  %v1039 = vunpack.c.l.b16 %v220
  %v1040 = vunpack.c.h.b16 %v220
  %v1041 = vunpack.c.l.b16 %v221
  %v1042 = vunpack.c.h.b16 %v221
  %v1043 = vunpack.c.l.b16 %v222
  %v1044 = vunpack.c.h.b16 %v222
  %v1045 = vunpack.c.l.b16 %v223
  %v1046 = vunpack.c.h.b16 %v223
  %v1047 = vunpack.c.l.b16 %v224
  %v1048 = vunpack.c.h.b16 %v224
  %v1049 = vunpack.c.l.b16 %v225
  %v1050 = vunpack.c.h.b16 %v225
  %v1051 = vunpack.c.l.b16 %v226
  %v1052 = vunpack.c.h.b16 %v226
  %v1053 = vunpack.c.l.b16 %v227
  %v1054 = vunpack.c.h.b16 %v227
  %v1055 = vunpack.c.l.b16 %v228
  %v1056 = vunpack.c.h.b16 %v228
  %v1057 = vunpack.c.l.b16 %v229
  %v1058 = vunpack.c.h.b16 %v229
  %v1059 = vunpack.c.l.b16 %v230
  %v1060 = vunpack.c.h.b16 %v230
  %v1061 = vunpack.c.l.b16 %v231
  %v1062 = vunpack.c.h.b16 %v231
  %v1063 = vunpack.c.l.b16 %v232
  %v1064 = vunpack.c.h.b16 %v232
  %v1065 = vunpack.c.l.b16 %v233
  %v1066 = vunpack.c.h.b16 %v233
  %v1067 = vunpack.c.l.b16 %v234
  %v1068 = vunpack.c.h.b16 %v234
  %v1069 = vunpack.c.l.b16 %v235
  %v1070 = vunpack.c.h.b16 %v235
  %v1071 = vunpack.c.l.b16 %v236
  %v1072 = vunpack.c.h.b16 %v236
  %v1073 = vunpack.c.l.b16 %v237
  %v1074 = vunpack.c.h.b16 %v237
  %v1075 = vunpack.c.l.b16 %v238
  %v1076 = vunpack.c.h.b16 %v238
  %v1077 = vunpack.c.l.b16 %v239
  %v1078 = vunpack.c.h.b16 %v239
  %v1079 = vunpack.c.l.b16 %v240
  %v1080 = vunpack.c.h.b16 %v240
  %v1081 = vunpack.c.l.b16 %v241
  %v1082 = vunpack.c.h.b16 %v241
  %v1083 = vunpack.c.l.b16 %v242
  %v1084 = vunpack.c.h.b16 %v242
  %v1085 = vunpack.c.l.b16 %v243
  %v1086 = vunpack.c.h.b16 %v243
  %v1087 = vunpack.c.l.b16 %v244
  %v1088 = vunpack.c.h.b16 %v244
  %v1089 = vunpack.c.l.b16 %v245
  %v1090 = vunpack.c.h.b16 %v245
  %v1091 = vunpack.c.l.b16 %v246
  %v1092 = vunpack.c.h.b16 %v246
  %v1093 = vunpack.c.l.b16 %v247
  %v1094 = vunpack.c.h.b16 %v247
  %v1095 = vunpack.c.l.b16 %v248
  %v1096 = vunpack.c.h.b16 %v248
  %v1097 = vunpack.c.l.b16 %v249
  %v1098 = vunpack.c.h.b16 %v249
  %v1099 = vunpack.c.l.b16 %v250
  %v1100 = vunpack.c.h.b16 %v250
  %v1101 = vunpack.c.l.b16 %v251
  %v1102 = vunpack.c.h.b16 %v251
  %v1103 = vunpack.c.l.b16 %v252
  %v1104 = vunpack.c.h.b16 %v252
  %v1105 = vunpack.c.l.b16 %v253
  %v1106 = vunpack.c.h.b16 %v253
  %v1107 = vunpack.c.l.b16 %v254
  %v1108 = vunpack.c.h.b16 %v254
  %v1109 = vunpack.c.l.b16 %v255
  %v1110 = vunpack.c.h.b16 %v255
  %v1111 = vunpack.c.l.b16 %v256
  %v1112 = vunpack.c.h.b16 %v256
  %v1113 = vunpack.c.l.b16 %v257
  %v1114 = vunpack.c.h.b16 %v257
  %v1115 = vunpack.c.l.b16 %v258
  %v1116 = vunpack.c.h.b16 %v258
  %v1117 = vunpack.c.l.b16 %v259
  %v1118 = vunpack.c.h.b16 %v259
  %v1119 = vunpack.c.l.b16 %v260
  %v1120 = vunpack.c.h.b16 %v260
  %v1121 = vunpack.c.l.b16 %v261
  %v1122 = vunpack.c.h.b16 %v261
  %v1123 = vunpack.c.l.b16 %v262
  %v1124 = vunpack.c.h.b16 %v262
  %v1125 = vunpack.c.l.b16 %v263
  %v1126 = vunpack.c.h.b16 %v263
  %v1127 = vunpack.c.l.b16 %v264
  %v1128 = vunpack.c.h.b16 %v264
  %v1129 = vunpack.c.l.b16 %v265
  %v1130 = vunpack.c.h.b16 %v265
  %v1131 = vunpack.c.l.b16 %v266
  %v1132 = vunpack.c.h.b16 %v266
  %v1133 = vunpack.c.l.b16 %v267
  %v1134 = vunpack.c.h.b16 %v267
  %v1135 = vunpack.c.l.b16 %v268
  %v1136 = vunpack.c.h.b16 %v268
  %v1137 = vunpack.c.l.b16 %v269
  %v1138 = vunpack.c.h.b16 %v269
  %v1139 = vunpack.c.l.b16 %v270
  %v1140 = vunpack.c.h.b16 %v270
  %v1141 = vunpack.c.l.b16 %v271
  %v1142 = vunpack.c.h.b16 %v271
  %v1143 = vunpack.c.l.b16 %v272
  %v1144 = vunpack.c.h.b16 %v272
  %v1145 = vunpack.c.l.b16 %v273
  %v1146 = vunpack.c.h.b16 %v273
  %v1147 = vunpack.c.l.b16 %v274
  %v1148 = vunpack.c.h.b16 %v274
  %v1149 = vunpack.c.l.b16 %v275
  %v1150 = vunpack.c.h.b16 %v275
  %v1151 = vunpack.c.l.b16 %v276
  %v1152 = vunpack.c.h.b16 %v276
  %v1153 = vunpack.c.l.b16 %v277
  %v1154 = vunpack.c.h.b16 %v277
  %v1155 = vunpack.c.l.b16 %v278
  %v1156 = vunpack.c.h.b16 %v278
  %v1157 = vunpack.c.l.b16 %v279
  %v1158 = vunpack.c.h.b16 %v279
  %v1159 = vunpack.c.l.b16 %v280
  %v1160 = vunpack.c.h.b16 %v280
  %v1161 = vunpack.c.l.b16 %v281
  %v1162 = vunpack.c.h.b16 %v281
  %v1163 = vunpack.c.l.b16 %v282
  %v1164 = vunpack.c.h.b16 %v282
  %v1165 = vunpack.c.l.b16 %v283
  %v1166 = vunpack.c.h.b16 %v283
  %v1167 = vunpack.c.l.b16 %v284
  %v1168 = vunpack.c.h.b16 %v284
  %v1169 = vunpack.c.l.b16 %v285
  %v1170 = vunpack.c.h.b16 %v285
  %v1171 = vunpack.c.l.b16 %v286
  %v1172 = vunpack.c.h.b16 %v286
  %v1173 = vunpack.c.l.b16 %v287
  %v1174 = vunpack.c.h.b16 %v287
  %v1175 = vunpack.c.l.b16 %v288
  %v1176 = vunpack.c.h.b16 %v288
  %v1177 = vunpack.c.l.b16 %v289
  %v1178 = vunpack.c.h.b16 %v289
  %v1179 = vunpack.c.l.b16 %v290
  %v1180 = vunpack.c.h.b16 %v290
  %v1181 = vunpack.c.l.b16 %v291
  %v1182 = vunpack.c.h.b16 %v291
  %v1183 = vunpack.c.l.b16 %v292
  %v1184 = vunpack.c.h.b16 %v292
  %v1185 = vunpack.c.l.b16 %v293
  %v1186 = vunpack.c.h.b16 %v293
  %v1187 = vunpack.c.l.b16 %v294
  %v1188 = vunpack.c.h.b16 %v294
  %v1189 = vunpack.c.l.b16 %v295
  %v1190 = vunpack.c.h.b16 %v295
  %v1191 = vunpack.c.l.b16 %v296
  %v1192 = vunpack.c.h.b16 %v296
  %v1193 = vunpack.c.l.b16 %v297
  %v1194 = vunpack.c.h.b16 %v297
  %v1195 = vunpack.c.l.b16 %v298
  %v1196 = vunpack.c.h.b16 %v298
  %v1197 = vunpack.c.l.b16 %v299
  %v1198 = vunpack.c.h.b16 %v299
  %v1199 = vunpack.c.l.b16 %v300
  %v1200 = vunpack.c.h.b16 %v300
  %v1201 = vunpack.c.l.b16 %v301
  %v1202 = vunpack.c.h.b16 %v301
  %v1203 = vunpack.c.l.b16 %v302
  %v1204 = vunpack.c.h.b16 %v302
  %v1205 = vunpack.c.l.b16 %v303
  %v1206 = vunpack.c.h.b16 %v303
  %v1207 = vunpack.c.l.b16 %v304
  %v1208 = vunpack.c.h.b16 %v304
  %v1209 = vunpack.c.l.b16 %v305
  %v1210 = vunpack.c.h.b16 %v305
  %v1211 = vunpack.c.l.b16 %v306
  %v1212 = vunpack.c.h.b16 %v306
  %v1213 = vunpack.c.l.b16 %v307
  %v1214 = vunpack.c.h.b16 %v307
  %v1215 = vunpack.c.l.b16 %v308
  %v1216 = vunpack.c.h.b16 %v308
  %v1217 = vunpack.c.l.b16 %v309
  %v1218 = vunpack.c.h.b16 %v309
  %v1219 = vunpack.c.l.b16 %v310
  %v1220 = vunpack.c.h.b16 %v310
  %v1221 = vunpack.c.l.b16 %v311
  %v1222 = vunpack.c.h.b16 %v311
  %v1223 = vunpack.c.l.b16 %v312
  %v1224 = vunpack.c.h.b16 %v312
  %v1225 = vunpack.c.l.b16 %v313
  %v1226 = vunpack.c.h.b16 %v313
  %v1227 = vunpack.c.l.b16 %v314
  %v1228 = vunpack.c.h.b16 %v314
  %v1229 = vunpack.c.l.b16 %v315
  %v1230 = vunpack.c.h.b16 %v315
  %v1231 = vunpack.c.l.b16 %v316
  %v1232 = vunpack.c.h.b16 %v316
  %v1233 = vunpack.c.l.b16 %v317
  %v1234 = vunpack.c.h.b16 %v317
  %v1235 = vunpack.c.l.b16 %v318
  %v1236 = vunpack.c.h.b16 %v318
  %v1237 = vunpack.c.l.b16 %v319
  %v1238 = vunpack.c.h.b16 %v319
  %v1239 = vunpack.c.l.b16 %v320
  %v1240 = vunpack.c.h.b16 %v320
  %v1241 = vunpack.c.l.b16 %v321
  %v1242 = vunpack.c.h.b16 %v321
  %v1243 = vunpack.c.l.b16 %v322
  %v1244 = vunpack.c.h.b16 %v322
  %v1245 = vunpack.c.l.b16 %v323
  %v1246 = vunpack.c.h.b16 %v323
  %v1247 = vunpack.c.l.b16 %v324
  %v1248 = vunpack.c.h.b16 %v324
  %v1249 = vunpack.c.l.b16 %v325
  %v1250 = vunpack.c.h.b16 %v325
  %v1251 = vunpack.c.l.b16 %v326
  %v1252 = vunpack.c.h.b16 %v326
  %v1253 = vunpack.c.l.b16 %v327
  %v1254 = vunpack.c.h.b16 %v327
  %v1255 = vunpack.c.l.b16 %v328
  %v1256 = vunpack.c.h.b16 %v328
  %v1257 = vunpack.c.l.b16 %v329
  %v1258 = vunpack.c.h.b16 %v329
  %v1259 = vunpack.c.l.b16 %v330
  %v1260 = vunpack.c.h.b16 %v330
  %v1261 = vunpack.c.l.b16 %v331
  %v1262 = vunpack.c.h.b16 %v331
  %v1263 = vunpack.c.l.b16 %v332
  %v1264 = vunpack.c.h.b16 %v332
  %v1265 = vunpack.c.l.b16 %v333
  %v1266 = vunpack.c.h.b16 %v333
  %v1267 = vunpack.c.l.b16 %v334
  %v1268 = vunpack.c.h.b16 %v334
  %v1269 = vunpack.c.l.b16 %v335
  %v1270 = vunpack.c.h.b16 %v335
  %v1271 = vunpack.c.l.b16 %v336
  %v1272 = vunpack.c.h.b16 %v336
  %v1273 = vpack.c.b16 %v705, %v697
  %v1274 = vpack.c.b16 %v706, %v698
  %v1275 = vpack.c.b16 %v707, %v699
  %v1276 = vpack.c.b16 %v708, %v700
  %v1277 = vpack.c.b16 %v709, %v701
  %v1278 = vpack.c.b16 %v710, %v702
  %v1279 = vpack.c.b16 %v711, %v703
  %v1280 = vpack.c.b16 %v712, %v704
  %v1281 = vpack.c.b16 %v721, %v713
  %v1282 = vpack.c.b16 %v722, %v714
  %v1283 = vpack.c.b16 %v723, %v715
  %v1284 = vpack.c.b16 %v724, %v716
  %v1285 = vpack.c.b16 %v725, %v717
  %v1286 = vpack.c.b16 %v726, %v718
  %v1287 = vpack.c.b16 %v727, %v719
  %v1288 = vpack.c.b16 %v728, %v720
  %v1289 = vpack.c.b16 %v737, %v729
  %v1290 = vpack.c.b16 %v738, %v730
  %v1291 = vpack.c.b16 %v739, %v731
  %v1292 = vpack.c.b16 %v740, %v732
  %v1293 = vpack.c.b16 %v741, %v733
  %v1294 = vpack.c.b16 %v742, %v734
  %v1295 = vpack.c.b16 %v743, %v735
  %v1296 = vpack.c.b16 %v744, %v736
  %v1297 = vpack.c.b16 %v753, %v745
  %v1298 = vpack.c.b16 %v754, %v746
  %v1299 = vpack.c.b16 %v755, %v747
  %v1300 = vpack.c.b16 %v756, %v748
  %v1301 = vpack.c.b16 %v757, %v749
  %v1302 = vpack.c.b16 %v758, %v750
  %v1303 = vpack.c.b16 %v759, %v751
  %v1304 = vpack.c.b16 %v760, %v752
  %v1305 = vpack.c.b16 %v769, %v761
  %v1306 = vpack.c.b16 %v770, %v762
  %v1307 = vpack.c.b16 %v771, %v763
  %v1308 = vpack.c.b16 %v772, %v764
  %v1309 = vpack.c.b16 %v773, %v765
  %v1310 = vpack.c.b16 %v774, %v766
  %v1311 = vpack.c.b16 %v775, %v767
  %v1312 = vpack.c.b16 %v776, %v768
  %v1313 = vpack.c.b16 %v785, %v777
  %v1314 = vpack.c.b16 %v786, %v778
  %v1315 = vpack.c.b16 %v787, %v779
  %v1316 = vpack.c.b16 %v788, %v780
  %v1317 = vpack.c.b16 %v789, %v781
  %v1318 = vpack.c.b16 %v790, %v782
  %v1319 = vpack.c.b16 %v791, %v783
  %v1320 = vpack.c.b16 %v792, %v784
  %v1321 = vpack.c.b16 %v801, %v793
  %v1322 = vpack.c.b16 %v802, %v794
  %v1323 = vpack.c.b16 %v803, %v795
  %v1324 = vpack.c.b16 %v804, %v796
  %v1325 = vpack.c.b16 %v805, %v797
  %v1326 = vpack.c.b16 %v806, %v798
  %v1327 = vpack.c.b16 %v807, %v799
  %v1328 = vpack.c.b16 %v808, %v800
  %v1329 = vpack.c.b16 %v817, %v809
  %v1330 = vpack.c.b16 %v818, %v810
  %v1331 = vpack.c.b16 %v819, %v811
  %v1332 = vpack.c.b16 %v820, %v812
  %v1333 = vpack.c.b16 %v821, %v813
  %v1334 = vpack.c.b16 %v822, %v814
  %v1335 = vpack.c.b16 %v823, %v815
  %v1336 = vpack.c.b16 %v824, %v816
  %v1337 = vpack.c.b16 %v833, %v825
  %v1338 = vpack.c.b16 %v834, %v826
  %v1339 = vpack.c.b16 %v835, %v827
  %v1340 = vpack.c.b16 %v836, %v828
  %v1341 = vpack.c.b16 %v837, %v829
  %v1342 = vpack.c.b16 %v838, %v830
  %v1343 = vpack.c.b16 %v839, %v831
  %v1344 = vpack.c.b16 %v840, %v832
  %v1345 = vpack.c.b16 %v849, %v841
  %v1346 = vpack.c.b16 %v850, %v842
  %v1347 = vpack.c.b16 %v851, %v843
  %v1348 = vpack.c.b16 %v852, %v844
  %v1349 = vpack.c.b16 %v853, %v845
  %v1350 = vpack.c.b16 %v854, %v846
  %v1351 = vpack.c.b16 %v855, %v847
  %v1352 = vpack.c.b16 %v856, %v848
  %v1353 = vpack.c.b16 %v865, %v857
  %v1354 = vpack.c.b16 %v866, %v858
  %v1355 = vpack.c.b16 %v867, %v859
  %v1356 = vpack.c.b16 %v868, %v860
  %v1357 = vpack.c.b16 %v869, %v861
  %v1358 = vpack.c.b16 %v870, %v862
  %v1359 = vpack.c.b16 %v871, %v863
  %v1360 = vpack.c.b16 %v872, %v864
  %v1361 = vpack.c.b16 %v881, %v873
  %v1362 = vpack.c.b16 %v882, %v874
  %v1363 = vpack.c.b16 %v883, %v875
  %v1364 = vpack.c.b16 %v884, %v876
  %v1365 = vpack.c.b16 %v885, %v877
  %v1366 = vpack.c.b16 %v886, %v878
  %v1367 = vpack.c.b16 %v887, %v879
  %v1368 = vpack.c.b16 %v888, %v880
  %v1369 = vpack.c.b16 %v897, %v889
  %v1370 = vpack.c.b16 %v898, %v890
  %v1371 = vpack.c.b16 %v899, %v891
  %v1372 = vpack.c.b16 %v900, %v892
  %v1373 = vpack.c.b16 %v901, %v893
  %v1374 = vpack.c.b16 %v902, %v894
  %v1375 = vpack.c.b16 %v903, %v895
  %v1376 = vpack.c.b16 %v904, %v896
  %v1377 = vpack.c.b16 %v913, %v905
  %v1378 = vpack.c.b16 %v914, %v906
  %v1379 = vpack.c.b16 %v915, %v907
  %v1380 = vpack.c.b16 %v916, %v908
  %v1381 = vpack.c.b16 %v917, %v909
  %v1382 = vpack.c.b16 %v918, %v910
  %v1383 = vpack.c.b16 %v919, %v911
  %v1384 = vpack.c.b16 %v920, %v912
  %v1385 = vpack.c.b16 %v929, %v921
  %v1386 = vpack.c.b16 %v930, %v922
  %v1387 = vpack.c.b16 %v931, %v923
  %v1388 = vpack.c.b16 %v932, %v924
  %v1389 = vpack.c.b16 %v933, %v925
  %v1390 = vpack.c.b16 %v934, %v926
  %v1391 = vpack.c.b16 %v935, %v927
  %v1392 = vpack.c.b16 %v936, %v928
  %v1393 = vpack.c.b16 %v945, %v937
  %v1394 = vpack.c.b16 %v946, %v938
  %v1395 = vpack.c.b16 %v947, %v939
  %v1396 = vpack.c.b16 %v948, %v940
  %v1397 = vpack.c.b16 %v949, %v941
  %v1398 = vpack.c.b16 %v950, %v942
  %v1399 = vpack.c.b16 %v951, %v943
  %v1400 = vpack.c.b16 %v952, %v944
  %v1401 = vpack.c.b16 %v961, %v953
  %v1402 = vpack.c.b16 %v962, %v954
  %v1403 = vpack.c.b16 %v963, %v955
  %v1404 = vpack.c.b16 %v964, %v956
  %v1405 = vpack.c.b16 %v965, %v957
  %v1406 = vpack.c.b16 %v966, %v958
  %v1407 = vpack.c.b16 %v967, %v959
  %v1408 = vpack.c.b16 %v968, %v960
  %v1409 = vpack.c.b16 %v977, %v969
  %v1410 = vpack.c.b16 %v978, %v970
  %v1411 = vpack.c.b16 %v979, %v971
  %v1412 = vpack.c.b16 %v980, %v972
  %v1413 = vpack.c.b16 %v981, %v973
  %v1414 = vpack.c.b16 %v982, %v974
  %v1415 = vpack.c.b16 %v983, %v975
  %v1416 = vpack.c.b16 %v984, %v976
  %v1417 = vpack.c.b16 %v993, %v985
  %v1418 = vpack.c.b16 %v994, %v986
  %v1419 = vpack.c.b16 %v995, %v987
  %v1420 = vpack.c.b16 %v996, %v988
  %v1421 = vpack.c.b16 %v997, %v989
  %v1422 = vpack.c.b16 %v998, %v990
  %v1423 = vpack.c.b16 %v999, %v991
  %v1424 = vpack.c.b16 %v1000, %v992
  %v1425 = vpack.c.b16 %v1009, %v1001
  %v1426 = vpack.c.b16 %v1010, %v1002
  %v1427 = vpack.c.b16 %v1011, %v1003
  %v1428 = vpack.c.b16 %v1012, %v1004
  %v1429 = vpack.c.b16 %v1013, %v1005
  %v1430 = vpack.c.b16 %v1014, %v1006
  %v1431 = vpack.c.b16 %v1015, %v1007
  %v1432 = vpack.c.b16 %v1016, %v1008
  %v1433 = vpack.c.b16 %v1025, %v1017
  %v1434 = vpack.c.b16 %v1026, %v1018
  %v1435 = vpack.c.b16 %v1027, %v1019
  %v1436 = vpack.c.b16 %v1028, %v1020
  %v1437 = vpack.c.b16 %v1029, %v1021
  %v1438 = vpack.c.b16 %v1030, %v1022
  %v1439 = vpack.c.b16 %v1031, %v1023
  %v1440 = vpack.c.b16 %v1032, %v1024
  %v1441 = vpack.c.b16 %v1041, %v1033
  %v1442 = vpack.c.b16 %v1042, %v1034
  %v1443 = vpack.c.b16 %v1043, %v1035
  %v1444 = vpack.c.b16 %v1044, %v1036
  %v1445 = vpack.c.b16 %v1045, %v1037
  %v1446 = vpack.c.b16 %v1046, %v1038
  %v1447 = vpack.c.b16 %v1047, %v1039
  %v1448 = vpack.c.b16 %v1048, %v1040
  %v1449 = vpack.c.b16 %v1057, %v1049
  %v1450 = vpack.c.b16 %v1058, %v1050
  %v1451 = vpack.c.b16 %v1059, %v1051
  %v1452 = vpack.c.b16 %v1060, %v1052
  %v1453 = vpack.c.b16 %v1061, %v1053
  %v1454 = vpack.c.b16 %v1062, %v1054
  %v1455 = vpack.c.b16 %v1063, %v1055
  %v1456 = vpack.c.b16 %v1064, %v1056
  %v1457 = vpack.c.b16 %v1073, %v1065
  %v1458 = vpack.c.b16 %v1074, %v1066
  %v1459 = vpack.c.b16 %v1075, %v1067
  %v1460 = vpack.c.b16 %v1076, %v1068
  %v1461 = vpack.c.b16 %v1077, %v1069
  %v1462 = vpack.c.b16 %v1078, %v1070
  %v1463 = vpack.c.b16 %v1079, %v1071
  %v1464 = vpack.c.b16 %v1080, %v1072
  %v1465 = vpack.c.b16 %v1089, %v1081
  %v1466 = vpack.c.b16 %v1090, %v1082
  %v1467 = vpack.c.b16 %v1091, %v1083
  %v1468 = vpack.c.b16 %v1092, %v1084
  %v1469 = vpack.c.b16 %v1093, %v1085
  %v1470 = vpack.c.b16 %v1094, %v1086
  %v1471 = vpack.c.b16 %v1095, %v1087
  %v1472 = vpack.c.b16 %v1096, %v1088
  %v1473 = vpack.c.b16 %v1105, %v1097
  %v1474 = vpack.c.b16 %v1106, %v1098
  %v1475 = vpack.c.b16 %v1107, %v1099
  %v1476 = vpack.c.b16 %v1108, %v1100
  %v1477 = vpack.c.b16 %v1109, %v1101
  %v1478 = vpack.c.b16 %v1110, %v1102
  %v1479 = vpack.c.b16 %v1111, %v1103
  %v1480 = vpack.c.b16 %v1112, %v1104
  %v1481 = vpack.c.b16 %v1121, %v1113
  %v1482 = vpack.c.b16 %v1122, %v1114
  %v1483 = vpack.c.b16 %v1123, %v1115
  %v1484 = vpack.c.b16 %v1124, %v1116
  %v1485 = vpack.c.b16 %v1125, %v1117
  %v1486 = vpack.c.b16 %v1126, %v1118
  %v1487 = vpack.c.b16 %v1127, %v1119
  %v1488 = vpack.c.b16 %v1128, %v1120
  %v1489 = vpack.c.b16 %v1137, %v1129
  %v1490 = vpack.c.b16 %v1138, %v1130
  %v1491 = vpack.c.b16 %v1139, %v1131
  %v1492 = vpack.c.b16 %v1140, %v1132
  %v1493 = vpack.c.b16 %v1141, %v1133
  %v1494 = vpack.c.b16 %v1142, %v1134
  %v1495 = vpack.c.b16 %v1143, %v1135
  %v1496 = vpack.c.b16 %v1144, %v1136
  %v1497 = vpack.c.b16 %v1153, %v1145
  %v1498 = vpack.c.b16 %v1154, %v1146
  %v1499 = vpack.c.b16 %v1155, %v1147
  %v1500 = vpack.c.b16 %v1156, %v1148
  %v1501 = vpack.c.b16 %v1157, %v1149
  %v1502 = vpack.c.b16 %v1158, %v1150
  %v1503 = vpack.c.b16 %v1159, %v1151
  %v1504 = vpack.c.b16 %v1160, %v1152
  %v1505 = vpack.c.b16 %v1169, %v1161
  %v1506 = vpack.c.b16 %v1170, %v1162
  %v1507 = vpack.c.b16 %v1171, %v1163
  %v1508 = vpack.c.b16 %v1172, %v1164
  %v1509 = vpack.c.b16 %v1173, %v1165
  %v1510 = vpack.c.b16 %v1174, %v1166
  %v1511 = vpack.c.b16 %v1175, %v1167
  %v1512 = vpack.c.b16 %v1176, %v1168
  %v1513 = vpack.c.b16 %v1185, %v1177
  %v1514 = vpack.c.b16 %v1186, %v1178
  %v1515 = vpack.c.b16 %v1187, %v1179
  %v1516 = vpack.c.b16 %v1188, %v1180
  %v1517 = vpack.c.b16 %v1189, %v1181
  %v1518 = vpack.c.b16 %v1190, %v1182
  %v1519 = vpack.c.b16 %v1191, %v1183
  %v1520 = vpack.c.b16 %v1192, %v1184
  %v1521 = vpack.c.b16 %v1201, %v1193
  %v1522 = vpack.c.b16 %v1202, %v1194
  %v1523 = vpack.c.b16 %v1203, %v1195
  %v1524 = vpack.c.b16 %v1204, %v1196
  %v1525 = vpack.c.b16 %v1205, %v1197
  %v1526 = vpack.c.b16 %v1206, %v1198
  %v1527 = vpack.c.b16 %v1207, %v1199
  %v1528 = vpack.c.b16 %v1208, %v1200
  %v1529 = vpack.c.b16 %v1217, %v1209
  %v1530 = vpack.c.b16 %v1218, %v1210
  %v1531 = vpack.c.b16 %v1219, %v1211
  %v1532 = vpack.c.b16 %v1220, %v1212
  %v1533 = vpack.c.b16 %v1221, %v1213
  %v1534 = vpack.c.b16 %v1222, %v1214
  %v1535 = vpack.c.b16 %v1223, %v1215
  %v1536 = vpack.c.b16 %v1224, %v1216
  %v1537 = vpack.c.b16 %v1233, %v1225
  %v1538 = vpack.c.b16 %v1234, %v1226
  %v1539 = vpack.c.b16 %v1235, %v1227
  %v1540 = vpack.c.b16 %v1236, %v1228
  %v1541 = vpack.c.b16 %v1237, %v1229
  %v1542 = vpack.c.b16 %v1238, %v1230
  %v1543 = vpack.c.b16 %v1239, %v1231
  %v1544 = vpack.c.b16 %v1240, %v1232
  %v1545 = vpack.c.b16 %v1249, %v1241
  %v1546 = vpack.c.b16 %v1250, %v1242
  %v1547 = vpack.c.b16 %v1251, %v1243
  %v1548 = vpack.c.b16 %v1252, %v1244
  %v1549 = vpack.c.b16 %v1253, %v1245
  %v1550 = vpack.c.b16 %v1254, %v1246
  %v1551 = vpack.c.b16 %v1255, %v1247
  %v1552 = vpack.c.b16 %v1256, %v1248
  %v1553 = vpack.c.b16 %v1265, %v1257
  %v1554 = vpack.c.b16 %v1266, %v1258
  %v1555 = vpack.c.b16 %v1267, %v1259
  %v1556 = vpack.c.b16 %v1268, %v1260
  %v1557 = vpack.c.b16 %v1269, %v1261
  %v1558 = vpack.c.b16 %v1270, %v1262
  %v1559 = vpack.c.b16 %v1271, %v1263
  %v1560 = vpack.c.b16 %v1272, %v1264
  %vm1849 = vcmask 523264
  %v1851 = vsel %vm1849, %v404, 0
  %1853 = vmatprep.subr.bf16.mxu0 %v1274
  %1854 = vmatpush1.bf16.msra.mxu0 %v1273
  %1855 = vmatprep.subr.bf16.mxu0 %v1282
  %1856 = vmatpush1.bf16.msra.mxu0 %v1281
  %1857 = vmatprep.subr.bf16.mxu0 %v1290
  %1858 = vmatpush1.bf16.msra.mxu0 %v1289
  %1859 = vmatprep.subr.bf16.mxu0 %v1298
  %1860 = vmatpush1.bf16.msra.mxu0 %v1297
  %1861 = vmatprep.subr.bf16.mxu0 %v1306
  %1862 = vmatpush1.bf16.msra.mxu0 %v1305
  %1863 = vmatprep.subr.bf16.mxu0 %v1314
  %1864 = vmatpush1.bf16.msra.mxu0 %v1313
  %1865 = vmatprep.subr.bf16.mxu0 %v1322
  %1866 = vmatpush1.bf16.msra.mxu0 %v1321
  %1867 = vmatprep.subr.bf16.mxu0 %v1330
  %1868 = vmatpush1.bf16.msra.mxu0 %v1329
  %1869 = vmatprep.subr.bf16.mxu0 %v1338
  %1870 = vmatpush1.bf16.msra.mxu0 %v1337
  %1871 = vmatprep.subr.bf16.mxu0 %v1346
  %1872 = vmatpush1.bf16.msra.mxu0 %v1345
  %1873 = vmatprep.subr.bf16.mxu0 %v1354
  %1874 = vmatpush1.bf16.msra.mxu0 %v1353
  %1875 = vmatprep.subr.bf16.mxu0 %v1362
  %1876 = vmatpush1.bf16.msra.mxu0 %v1361
  %1877 = vmatprep.subr.bf16.mxu0 %v1370
  %1878 = vmatpush1.bf16.msra.mxu0 %v1369
  %1879 = vmatprep.subr.bf16.mxu0 %v1378
  %1880 = vmatpush1.bf16.msra.mxu0 %v1377
  %1881 = vmatprep.subr.bf16.mxu0 %v1386
  %1882 = vmatpush1.bf16.msra.mxu0 %v1385
  %1883 = vmatprep.subr.bf16.mxu0 %v1394
  %1884 = vmatpush1.bf16.msra.mxu0 %v1393
  %1885 = vmatprep.mubr.bf16.mxu0 %v396
  %1886 = vmatmul.mubr.bf16.gmra.mrb[0].mxu0 %v388
  %v1887 = vpop.f32.mrb[0].mxu0
  %v1888 = vadd.f32 %v342, %v1887
  %v1889 = vpop.f32.mrb[0].mxu0
  %v1890 = vadd.f32 %v346, %v1889
  %v1891 = vpop.f32.mrb[0].mxu0
  %v1892 = vpop.f32.mrb[0].mxu0
  %1893 = vdwg.mxu0
  %1894 = vmatprep.subr.bf16.mxu0 %v1402
  %1895 = vmatpush1.bf16.msra.mxu0 %v1401
  %1896 = vmatprep.subr.bf16.mxu0 %v1410
  %1897 = vmatpush1.bf16.msra.mxu0 %v1409
  %1898 = vmatprep.subr.bf16.mxu0 %v1418
  %1899 = vmatpush1.bf16.msra.mxu0 %v1417
  %1900 = vmatprep.subr.bf16.mxu0 %v1426
  %1901 = vmatpush1.bf16.msra.mxu0 %v1425
  %1902 = vmatprep.subr.bf16.mxu0 %v1434
  %1903 = vmatpush1.bf16.msra.mxu0 %v1433
  %1904 = vmatprep.subr.bf16.mxu0 %v1442
  %1905 = vmatpush1.bf16.msra.mxu0 %v1441
  %1906 = vmatprep.subr.bf16.mxu0 %v1450
  %1907 = vmatpush1.bf16.msra.mxu0 %v1449
  %1908 = vmatprep.subr.bf16.mxu0 %v1458
  %1909 = vmatpush1.bf16.msra.mxu0 %v1457
  %1910 = vmatprep.subr.bf16.mxu0 %v1466
  %1911 = vmatpush1.bf16.msra.mxu0 %v1465
  %1912 = vmatprep.subr.bf16.mxu0 %v1474
  %1913 = vmatpush1.bf16.msra.mxu0 %v1473
  %1914 = vmatprep.subr.bf16.mxu0 %v1482
  %1915 = vmatpush1.bf16.msra.mxu0 %v1481
  %1916 = vmatprep.subr.bf16.mxu0 %v1490
  %1917 = vmatpush1.bf16.msra.mxu0 %v1489
  %1918 = vmatprep.subr.bf16.mxu0 %v1498
  %1919 = vmatpush1.bf16.msra.mxu0 %v1497
  %1920 = vmatprep.subr.bf16.mxu0 %v1506
  %1921 = vmatpush1.bf16.msra.mxu0 %v1505
  %1922 = vmatprep.subr.bf16.mxu0 %v1514
  %1923 = vmatpush1.bf16.msra.mxu0 %v1513
  %1924 = vmatprep.subr.bf16.mxu0 %v1522
  %1925 = vmatpush1.bf16.msra.mxu0 %v1521
  %1926 = vmatprep.mubr.bf16.mxu0 %v397
  %1927 = vmatmul.mubr.bf16.gmra.mrb[0].mxu0 %v395
  %v1928 = vpop.f32.mrb[0].mxu0
  %v1929 = vadd.f32 %v1888, %v1928
  %v1930 = vpop.f32.mrb[0].mxu0
  %v1931 = vadd.f32 %v1890, %v1930
  %v1932 = vpop.f32.mrb[0].mxu0
  %v1933 = vpop.f32.mrb[0].mxu0
  %1934 = vdwg.mxu0
  %1935 = vmatprep.subr.bf16.mxu0 %v1530
  %1936 = vmatpush1.bf16.msra.mxu0 %v1529
  %1937 = vmatprep.subr.bf16.mxu0 %v1538
  %1938 = vmatpush1.bf16.msra.mxu0 %v1537
  %1939 = vmatprep.subr.bf16.mxu0 %v1546
  %1940 = vmatpush1.bf16.msra.mxu0 %v1545
  %1941 = vmatprep.subr.bf16.mxu0 %v1554
  %1942 = vmatpush1.bf16.msra.mxu0 %v1553
  %1943 = vmatprep.subr.bf16.mxu0 0
  %1944 = vmatpush1.bf16.msra.mxu0 0
  %1945 = vmatprep.subr.bf16.mxu0 0
  %1946 = vmatpush1.bf16.msra.mxu0 0
  %1947 = vmatprep.subr.bf16.mxu0 0
  %1948 = vmatpush1.bf16.msra.mxu0 0
  %1949 = vmatprep.subr.bf16.mxu0 0
  %1950 = vmatpush1.bf16.msra.mxu0 0
  %1951 = vmatprep.subr.bf16.mxu0 0
  %1952 = vmatpush1.bf16.msra.mxu0 0
  %1953 = vmatprep.subr.bf16.mxu0 0
  %1954 = vmatpush1.bf16.msra.mxu0 0
  %1955 = vmatprep.subr.bf16.mxu0 0
  %1956 = vmatpush1.bf16.msra.mxu0 0
  %1957 = vmatprep.subr.bf16.mxu0 0
  %1958 = vmatpush1.bf16.msra.mxu0 0
  %1959 = vmatprep.subr.bf16.mxu0 0
  %1960 = vmatpush1.bf16.msra.mxu0 0
  %1961 = vmatprep.subr.bf16.mxu0 0
  %1962 = vmatpush1.bf16.msra.mxu0 0
  %1963 = vmatprep.subr.bf16.mxu0 0
  %1964 = vmatpush1.bf16.msra.mxu0 0
  %1965 = vmatprep.subr.bf16.mxu0 0
  %1966 = vmatpush1.bf16.msra.mxu0 0
  %1967 = vmatprep.mubr.bf16.mxu0 0
  %1968 = vmatmul.mubr.bf16.gmra.mrb[0].mxu0 %v1851
  %v1969 = vpop.f32.mrb[0].mxu0
  %v1970 = vadd.f32 %v1929, %v1969
  %v1971 = vpop.f32.mrb[0].mxu0
  %v1972 = vadd.f32 %v1931, %v1971
  %v1973 = vpop.f32.mrb[0].mxu0
  %v1974 = vpop.f32.mrb[0].mxu0
  %1975 = vdwg.mxu0
  %1976 = vmatprep.subr.bf16.mxu0 %v1276
  %1977 = vmatpush1.bf16.msra.mxu0 %v1275
  %1978 = vmatprep.subr.bf16.mxu0 %v1284
  %1979 = vmatpush1.bf16.msra.mxu0 %v1283
  %1980 = vmatprep.subr.bf16.mxu0 %v1292
  %1981 = vmatpush1.bf16.msra.mxu0 %v1291
  %1982 = vmatprep.subr.bf16.mxu0 %v1300
  %1983 = vmatpush1.bf16.msra.mxu0 %v1299
  %1984 = vmatprep.subr.bf16.mxu0 %v1308
  %1985 = vmatpush1.bf16.msra.mxu0 %v1307
  %1986 = vmatprep.subr.bf16.mxu0 %v1316
  %1987 = vmatpush1.bf16.msra.mxu0 %v1315
  %1988 = vmatprep.subr.bf16.mxu0 %v1324
  %1989 = vmatpush1.bf16.msra.mxu0 %v1323
  %1990 = vmatprep.subr.bf16.mxu0 %v1332
  %1991 = vmatpush1.bf16.msra.mxu0 %v1331
  %1992 = vmatprep.subr.bf16.mxu0 %v1340
  %1993 = vmatpush1.bf16.msra.mxu0 %v1339
  %1994 = vmatprep.subr.bf16.mxu0 %v1348
  %1995 = vmatpush1.bf16.msra.mxu0 %v1347
  %1996 = vmatprep.subr.bf16.mxu0 %v1356
  %1997 = vmatpush1.bf16.msra.mxu0 %v1355
  %1998 = vmatprep.subr.bf16.mxu0 %v1364
  %1999 = vmatpush1.bf16.msra.mxu0 %v1363
  %2000 = vmatprep.subr.bf16.mxu0 %v1372
  %2001 = vmatpush1.bf16.msra.mxu0 %v1371
  %2002 = vmatprep.subr.bf16.mxu0 %v1380
  %2003 = vmatpush1.bf16.msra.mxu0 %v1379
  %2004 = vmatprep.subr.bf16.mxu0 %v1388
  %2005 = vmatpush1.bf16.msra.mxu0 %v1387
  %2006 = vmatprep.subr.bf16.mxu0 %v1396
  %2007 = vmatpush1.bf16.msra.mxu0 %v1395
  %2008 = vmatprep.mubr.bf16.mxu0 %v396
  %2009 = vmatmul.mubr.bf16.gmra.mrb[0].mxu0 %v388
  %v2010 = vpop.f32.mrb[0].mxu0
  %v2011 = vadd.f32 %v350, %v2010
  %v2012 = vpop.f32.mrb[0].mxu0
  %v2013 = vadd.f32 %v354, %v2012
  %v2014 = vpop.f32.mrb[0].mxu0
  %v2015 = vpop.f32.mrb[0].mxu0
  %2016 = vdwg.mxu0
  %2017 = vmatprep.subr.bf16.mxu0 %v1404
  %2018 = vmatpush1.bf16.msra.mxu0 %v1403
  %2019 = vmatprep.subr.bf16.mxu0 %v1412
  %2020 = vmatpush1.bf16.msra.mxu0 %v1411
  %2021 = vmatprep.subr.bf16.mxu0 %v1420
  %2022 = vmatpush1.bf16.msra.mxu0 %v1419
  %2023 = vmatprep.subr.bf16.mxu0 %v1428
  %2024 = vmatpush1.bf16.msra.mxu0 %v1427
  %2025 = vmatprep.subr.bf16.mxu0 %v1436
  %2026 = vmatpush1.bf16.msra.mxu0 %v1435
  %2027 = vmatprep.subr.bf16.mxu0 %v1444
  %2028 = vmatpush1.bf16.msra.mxu0 %v1443
  %2029 = vmatprep.subr.bf16.mxu0 %v1452
  %2030 = vmatpush1.bf16.msra.mxu0 %v1451
  %2031 = vmatprep.subr.bf16.mxu0 %v1460
  %2032 = vmatpush1.bf16.msra.mxu0 %v1459
  %2033 = vmatprep.subr.bf16.mxu0 %v1468
  %2034 = vmatpush1.bf16.msra.mxu0 %v1467
  %2035 = vmatprep.subr.bf16.mxu0 %v1476
  %2036 = vmatpush1.bf16.msra.mxu0 %v1475
  %2037 = vmatprep.subr.bf16.mxu0 %v1484
  %2038 = vmatpush1.bf16.msra.mxu0 %v1483
  %2039 = vmatprep.subr.bf16.mxu0 %v1492
  %2040 = vmatpush1.bf16.msra.mxu0 %v1491
  %2041 = vmatprep.subr.bf16.mxu0 %v1500
  %2042 = vmatpush1.bf16.msra.mxu0 %v1499
  %2043 = vmatprep.subr.bf16.mxu0 %v1508
  %2044 = vmatpush1.bf16.msra.mxu0 %v1507
  %2045 = vmatprep.subr.bf16.mxu0 %v1516
  %2046 = vmatpush1.bf16.msra.mxu0 %v1515
  %2047 = vmatprep.subr.bf16.mxu0 %v1524
  %2048 = vmatpush1.bf16.msra.mxu0 %v1523
  %2049 = vmatprep.mubr.bf16.mxu0 %v397
  %2050 = vmatmul.mubr.bf16.gmra.mrb[0].mxu0 %v395
  %v2051 = vpop.f32.mrb[0].mxu0
  %v2052 = vadd.f32 %v2011, %v2051
  %v2053 = vpop.f32.mrb[0].mxu0
  %v2054 = vadd.f32 %v2013, %v2053
  %v2055 = vpop.f32.mrb[0].mxu0
  %v2056 = vpop.f32.mrb[0].mxu0
  %2057 = vdwg.mxu0
  %2058 = vmatprep.subr.bf16.mxu0 %v1532
  %2059 = vmatpush1.bf16.msra.mxu0 %v1531
  %2060 = vmatprep.subr.bf16.mxu0 %v1540
  %2061 = vmatpush1.bf16.msra.mxu0 %v1539
  %2062 = vmatprep.subr.bf16.mxu0 %v1548
  %2063 = vmatpush1.bf16.msra.mxu0 %v1547
  %2064 = vmatprep.subr.bf16.mxu0 %v1556
  %2065 = vmatpush1.bf16.msra.mxu0 %v1555
  %2066 = vmatprep.subr.bf16.mxu0 0
  %2067 = vmatpush1.bf16.msra.mxu0 0
  %2068 = vmatprep.subr.bf16.mxu0 0
  %2069 = vmatpush1.bf16.msra.mxu0 0
  %2070 = vmatprep.subr.bf16.mxu0 0
  %2071 = vmatpush1.bf16.msra.mxu0 0
  %2072 = vmatprep.subr.bf16.mxu0 0
  %2073 = vmatpush1.bf16.msra.mxu0 0
  %2074 = vmatprep.subr.bf16.mxu0 0
  %2075 = vmatpush1.bf16.msra.mxu0 0
  %2076 = vmatprep.subr.bf16.mxu0 0
  %2077 = vmatpush1.bf16.msra.mxu0 0
  %2078 = vmatprep.subr.bf16.mxu0 0
  %2079 = vmatpush1.bf16.msra.mxu0 0
  %2080 = vmatprep.subr.bf16.mxu0 0
  %2081 = vmatpush1.bf16.msra.mxu0 0
  %2082 = vmatprep.subr.bf16.mxu0 0
  %2083 = vmatpush1.bf16.msra.mxu0 0
  %2084 = vmatprep.subr.bf16.mxu0 0
  %2085 = vmatpush1.bf16.msra.mxu0 0
  %2086 = vmatprep.subr.bf16.mxu0 0
  %2087 = vmatpush1.bf16.msra.mxu0 0
  %2088 = vmatprep.subr.bf16.mxu0 0
  %2089 = vmatpush1.bf16.msra.mxu0 0
  %2090 = vmatprep.mubr.bf16.mxu0 0
  %2091 = vmatmul.mubr.bf16.gmra.mrb[0].mxu0 %v1851
  %v2092 = vpop.f32.mrb[0].mxu0
  %v2093 = vadd.f32 %v2052, %v2092
  %v2094 = vpop.f32.mrb[0].mxu0
  %v2095 = vadd.f32 %v2054, %v2094
  %v2096 = vpop.f32.mrb[0].mxu0
  %v2097 = vpop.f32.mrb[0].mxu0
  %2098 = vdwg.mxu0
  %2099 = vmatprep.subr.bf16.mxu0 %v1278
  %2100 = vmatpush1.bf16.msra.mxu0 %v1277
  %2101 = vmatprep.subr.bf16.mxu0 %v1286
  %2102 = vmatpush1.bf16.msra.mxu0 %v1285
  %2103 = vmatprep.subr.bf16.mxu0 %v1294
  %2104 = vmatpush1.bf16.msra.mxu0 %v1293
  %2105 = vmatprep.subr.bf16.mxu0 %v1302
  %2106 = vmatpush1.bf16.msra.mxu0 %v1301
  %2107 = vmatprep.subr.bf16.mxu0 %v1310
  %2108 = vmatpush1.bf16.msra.mxu0 %v1309
  %2109 = vmatprep.subr.bf16.mxu0 %v1318
  %2110 = vmatpush1.bf16.msra.mxu0 %v1317
  %2111 = vmatprep.subr.bf16.mxu0 %v1326
  %2112 = vmatpush1.bf16.msra.mxu0 %v1325
  %2113 = vmatprep.subr.bf16.mxu0 %v1334
  %2114 = vmatpush1.bf16.msra.mxu0 %v1333
  %2115 = vmatprep.subr.bf16.mxu0 %v1342
  %2116 = vmatpush1.bf16.msra.mxu0 %v1341
  %2117 = vmatprep.subr.bf16.mxu0 %v1350
  %2118 = vmatpush1.bf16.msra.mxu0 %v1349
  %2119 = vmatprep.subr.bf16.mxu0 %v1358
  %2120 = vmatpush1.bf16.msra.mxu0 %v1357
  %2121 = vmatprep.subr.bf16.mxu0 %v1366
  %2122 = vmatpush1.bf16.msra.mxu0 %v1365
  %2123 = vmatprep.subr.bf16.mxu0 %v1374
  %2124 = vmatpush1.bf16.msra.mxu0 %v1373
  %2125 = vmatprep.subr.bf16.mxu0 %v1382
  %2126 = vmatpush1.bf16.msra.mxu0 %v1381
  %2127 = vmatprep.subr.bf16.mxu0 %v1390
  %2128 = vmatpush1.bf16.msra.mxu0 %v1389
  %2129 = vmatprep.subr.bf16.mxu0 %v1398
  %2130 = vmatpush1.bf16.msra.mxu0 %v1397
  %2131 = vmatprep.mubr.bf16.mxu0 %v396
  %2132 = vmatmul.mubr.bf16.gmra.mrb[0].mxu0 %v388
  %v2133 = vpop.f32.mrb[0].mxu0
  %v2134 = vadd.f32 %v358, %v2133
  %v2135 = vpop.f32.mrb[0].mxu0
  %v2136 = vadd.f32 %v362, %v2135
  %v2137 = vpop.f32.mrb[0].mxu0
  %v2138 = vpop.f32.mrb[0].mxu0
  %2139 = vdwg.mxu0
  %2140 = vmatprep.subr.bf16.mxu0 %v1406
  %2141 = vmatpush1.bf16.msra.mxu0 %v1405
  %2142 = vmatprep.subr.bf16.mxu0 %v1414
  %2143 = vmatpush1.bf16.msra.mxu0 %v1413
  %2144 = vmatprep.subr.bf16.mxu0 %v1422
  %2145 = vmatpush1.bf16.msra.mxu0 %v1421
  %2146 = vmatprep.subr.bf16.mxu0 %v1430
  %2147 = vmatpush1.bf16.msra.mxu0 %v1429
  %2148 = vmatprep.subr.bf16.mxu0 %v1438
  %2149 = vmatpush1.bf16.msra.mxu0 %v1437
  %2150 = vmatprep.subr.bf16.mxu0 %v1446
  %2151 = vmatpush1.bf16.msra.mxu0 %v1445
  %2152 = vmatprep.subr.bf16.mxu0 %v1454
  %2153 = vmatpush1.bf16.msra.mxu0 %v1453
  %2154 = vmatprep.subr.bf16.mxu0 %v1462
  %2155 = vmatpush1.bf16.msra.mxu0 %v1461
  %2156 = vmatprep.subr.bf16.mxu0 %v1470
  %2157 = vmatpush1.bf16.msra.mxu0 %v1469
  %2158 = vmatprep.subr.bf16.mxu0 %v1478
  %2159 = vmatpush1.bf16.msra.mxu0 %v1477
  %2160 = vmatprep.subr.bf16.mxu0 %v1486
  %2161 = vmatpush1.bf16.msra.mxu0 %v1485
  %2162 = vmatprep.subr.bf16.mxu0 %v1494
  %2163 = vmatpush1.bf16.msra.mxu0 %v1493
  %2164 = vmatprep.subr.bf16.mxu0 %v1502
  %2165 = vmatpush1.bf16.msra.mxu0 %v1501
  %2166 = vmatprep.subr.bf16.mxu0 %v1510
  %2167 = vmatpush1.bf16.msra.mxu0 %v1509
  %2168 = vmatprep.subr.bf16.mxu0 %v1518
  %2169 = vmatpush1.bf16.msra.mxu0 %v1517
  %2170 = vmatprep.subr.bf16.mxu0 %v1526
  %2171 = vmatpush1.bf16.msra.mxu0 %v1525
  %2172 = vmatprep.mubr.bf16.mxu0 %v397
  %2173 = vmatmul.mubr.bf16.gmra.mrb[0].mxu0 %v395
  %v2174 = vpop.f32.mrb[0].mxu0
  %v2175 = vadd.f32 %v2134, %v2174
  %v2176 = vpop.f32.mrb[0].mxu0
  %v2177 = vadd.f32 %v2136, %v2176
  %v2178 = vpop.f32.mrb[0].mxu0
  %v2179 = vpop.f32.mrb[0].mxu0
  %2180 = vdwg.mxu0
  %2181 = vmatprep.subr.bf16.mxu0 %v1534
  %2182 = vmatpush1.bf16.msra.mxu0 %v1533
  %2183 = vmatprep.subr.bf16.mxu0 %v1542
  %2184 = vmatpush1.bf16.msra.mxu0 %v1541
  %2185 = vmatprep.subr.bf16.mxu0 %v1550
  %2186 = vmatpush1.bf16.msra.mxu0 %v1549
  %2187 = vmatprep.subr.bf16.mxu0 %v1558
  %2188 = vmatpush1.bf16.msra.mxu0 %v1557
  %2189 = vmatprep.subr.bf16.mxu0 0
  %2190 = vmatpush1.bf16.msra.mxu0 0
  %2191 = vmatprep.subr.bf16.mxu0 0
  %2192 = vmatpush1.bf16.msra.mxu0 0
  %2193 = vmatprep.subr.bf16.mxu0 0
  %2194 = vmatpush1.bf16.msra.mxu0 0
  %2195 = vmatprep.subr.bf16.mxu0 0
  %2196 = vmatpush1.bf16.msra.mxu0 0
  %2197 = vmatprep.subr.bf16.mxu0 0
  %2198 = vmatpush1.bf16.msra.mxu0 0
  %2199 = vmatprep.subr.bf16.mxu0 0
  %2200 = vmatpush1.bf16.msra.mxu0 0
  %2201 = vmatprep.subr.bf16.mxu0 0
  %2202 = vmatpush1.bf16.msra.mxu0 0
  %2203 = vmatprep.subr.bf16.mxu0 0
  %2204 = vmatpush1.bf16.msra.mxu0 0
  %2205 = vmatprep.subr.bf16.mxu0 0
  %2206 = vmatpush1.bf16.msra.mxu0 0
  %2207 = vmatprep.subr.bf16.mxu0 0
  %2208 = vmatpush1.bf16.msra.mxu0 0
  %2209 = vmatprep.subr.bf16.mxu0 0
  %2210 = vmatpush1.bf16.msra.mxu0 0
  %2211 = vmatprep.subr.bf16.mxu0 0
  %2212 = vmatpush1.bf16.msra.mxu0 0
  %2213 = vmatprep.mubr.bf16.mxu0 0
  %2214 = vmatmul.mubr.bf16.gmra.mrb[0].mxu0 %v1851
  %v2215 = vpop.f32.mrb[0].mxu0
  %v2216 = vadd.f32 %v2175, %v2215
  %v2217 = vpop.f32.mrb[0].mxu0
  %v2218 = vadd.f32 %v2177, %v2217
  %v2219 = vpop.f32.mrb[0].mxu0
  %v2220 = vpop.f32.mrb[0].mxu0
  %2221 = vdwg.mxu0
  %2222 = vmatprep.subr.bf16.mxu0 %v1280
  %2223 = vmatpush1.bf16.msra.mxu0 %v1279
  %2224 = vmatprep.subr.bf16.mxu0 %v1288
  %2225 = vmatpush1.bf16.msra.mxu0 %v1287
  %2226 = vmatprep.subr.bf16.mxu0 %v1296
  %2227 = vmatpush1.bf16.msra.mxu0 %v1295
  %2228 = vmatprep.subr.bf16.mxu0 %v1304
  %2229 = vmatpush1.bf16.msra.mxu0 %v1303
  %2230 = vmatprep.subr.bf16.mxu0 %v1312
  %2231 = vmatpush1.bf16.msra.mxu0 %v1311
  %2232 = vmatprep.subr.bf16.mxu0 %v1320
  %2233 = vmatpush1.bf16.msra.mxu0 %v1319
  %2234 = vmatprep.subr.bf16.mxu0 %v1328
  %2235 = vmatpush1.bf16.msra.mxu0 %v1327
  %2236 = vmatprep.subr.bf16.mxu0 %v1336
  %2237 = vmatpush1.bf16.msra.mxu0 %v1335
  %2238 = vmatprep.subr.bf16.mxu0 %v1344
  %2239 = vmatpush1.bf16.msra.mxu0 %v1343
  %2240 = vmatprep.subr.bf16.mxu0 %v1352
  %2241 = vmatpush1.bf16.msra.mxu0 %v1351
  %2242 = vmatprep.subr.bf16.mxu0 %v1360
  %2243 = vmatpush1.bf16.msra.mxu0 %v1359
  %2244 = vmatprep.subr.bf16.mxu0 %v1368
  %2245 = vmatpush1.bf16.msra.mxu0 %v1367
  %2246 = vmatprep.subr.bf16.mxu0 %v1376
  %2247 = vmatpush1.bf16.msra.mxu0 %v1375
  %2248 = vmatprep.subr.bf16.mxu0 %v1384
  %2249 = vmatpush1.bf16.msra.mxu0 %v1383
  %2250 = vmatprep.subr.bf16.mxu0 %v1392
  %2251 = vmatpush1.bf16.msra.mxu0 %v1391
  %2252 = vmatprep.subr.bf16.mxu0 %v1400
  %2253 = vmatpush1.bf16.msra.mxu0 %v1399
  %2254 = vmatprep.mubr.bf16.mxu0 %v396
  %2255 = vmatmul.mubr.bf16.gmra.mrb[0].mxu0 %v388
  %v2256 = vpop.f32.mrb[0].mxu0
  %v2257 = vadd.f32 %v366, %v2256
  %v2258 = vpop.f32.mrb[0].mxu0
  %v2259 = vadd.f32 %v370, %v2258
  %v2260 = vpop.f32.mrb[0].mxu0
  %v2261 = vpop.f32.mrb[0].mxu0
  %2262 = vdwg.mxu0
  %2263 = vmatprep.subr.bf16.mxu0 %v1408
  %2264 = vmatpush1.bf16.msra.mxu0 %v1407
  %2265 = vmatprep.subr.bf16.mxu0 %v1416
  %2266 = vmatpush1.bf16.msra.mxu0 %v1415
  %2267 = vmatprep.subr.bf16.mxu0 %v1424
  %2268 = vmatpush1.bf16.msra.mxu0 %v1423
  %2269 = vmatprep.subr.bf16.mxu0 %v1432
  %2270 = vmatpush1.bf16.msra.mxu0 %v1431
  %2271 = vmatprep.subr.bf16.mxu0 %v1440
  %2272 = vmatpush1.bf16.msra.mxu0 %v1439
  %2273 = vmatprep.subr.bf16.mxu0 %v1448
  %2274 = vmatpush1.bf16.msra.mxu0 %v1447
  %2275 = vmatprep.subr.bf16.mxu0 %v1456
  %2276 = vmatpush1.bf16.msra.mxu0 %v1455
  %2277 = vmatprep.subr.bf16.mxu0 %v1464
  %2278 = vmatpush1.bf16.msra.mxu0 %v1463
  %2279 = vmatprep.subr.bf16.mxu0 %v1472
  %2280 = vmatpush1.bf16.msra.mxu0 %v1471
  %2281 = vmatprep.subr.bf16.mxu0 %v1480
  %2282 = vmatpush1.bf16.msra.mxu0 %v1479
  %2283 = vmatprep.subr.bf16.mxu0 %v1488
  %2284 = vmatpush1.bf16.msra.mxu0 %v1487
  %2285 = vmatprep.subr.bf16.mxu0 %v1496
  %2286 = vmatpush1.bf16.msra.mxu0 %v1495
  %2287 = vmatprep.subr.bf16.mxu0 %v1504
  %2288 = vmatpush1.bf16.msra.mxu0 %v1503
  %2289 = vmatprep.subr.bf16.mxu0 %v1512
  %2290 = vmatpush1.bf16.msra.mxu0 %v1511
  %2291 = vmatprep.subr.bf16.mxu0 %v1520
  %2292 = vmatpush1.bf16.msra.mxu0 %v1519
  %2293 = vmatprep.subr.bf16.mxu0 %v1528
  %2294 = vmatpush1.bf16.msra.mxu0 %v1527
  %2295 = vmatprep.mubr.bf16.mxu0 %v397
  %2296 = vmatmul.mubr.bf16.gmra.mrb[0].mxu0 %v395
  %v2297 = vpop.f32.mrb[0].mxu0
  %v2298 = vadd.f32 %v2257, %v2297
  %v2299 = vpop.f32.mrb[0].mxu0
  %v2300 = vadd.f32 %v2259, %v2299
  %v2301 = vpop.f32.mrb[0].mxu0
  %v2302 = vpop.f32.mrb[0].mxu0
  %2303 = vdwg.mxu0
  %2304 = vmatprep.subr.bf16.mxu0 %v1536
  %2305 = vmatpush1.bf16.msra.mxu0 %v1535
  %2306 = vmatprep.subr.bf16.mxu0 %v1544
  %2307 = vmatpush1.bf16.msra.mxu0 %v1543
  %2308 = vmatprep.subr.bf16.mxu0 %v1552
  %2309 = vmatpush1.bf16.msra.mxu0 %v1551
  %2310 = vmatprep.subr.bf16.mxu0 %v1560
  %2311 = vmatpush1.bf16.msra.mxu0 %v1559
  %2312 = vmatprep.subr.bf16.mxu0 0
  %2313 = vmatpush1.bf16.msra.mxu0 0
  %2314 = vmatprep.subr.bf16.mxu0 0
  %2315 = vmatpush1.bf16.msra.mxu0 0
  %2316 = vmatprep.subr.bf16.mxu0 0
  %2317 = vmatpush1.bf16.msra.mxu0 0
  %2318 = vmatprep.subr.bf16.mxu0 0
  %2319 = vmatpush1.bf16.msra.mxu0 0
  %2320 = vmatprep.subr.bf16.mxu0 0
  %2321 = vmatpush1.bf16.msra.mxu0 0
  %2322 = vmatprep.subr.bf16.mxu0 0
  %2323 = vmatpush1.bf16.msra.mxu0 0
  %2324 = vmatprep.subr.bf16.mxu0 0
  %2325 = vmatpush1.bf16.msra.mxu0 0
  %2326 = vmatprep.subr.bf16.mxu0 0
  %2327 = vmatpush1.bf16.msra.mxu0 0
  %2328 = vmatprep.subr.bf16.mxu0 0
  %2329 = vmatpush1.bf16.msra.mxu0 0
  %2330 = vmatprep.subr.bf16.mxu0 0
  %2331 = vmatpush1.bf16.msra.mxu0 0
  %2332 = vmatprep.subr.bf16.mxu0 0
  %2333 = vmatpush1.bf16.msra.mxu0 0
  %2334 = vmatprep.subr.bf16.mxu0 0
  %2335 = vmatpush1.bf16.msra.mxu0 0
  %2336 = vmatprep.mubr.bf16.mxu0 0
  %2337 = vmatmul.mubr.bf16.gmra.mrb[0].mxu0 %v1851
  %v2338 = vpop.f32.mrb[0].mxu0
  %v2339 = vadd.f32 %v2298, %v2338
  %v2340 = vpop.f32.mrb[0].mxu0
  %v2341 = vadd.f32 %v2300, %v2340
  %v2342 = vpop.f32.mrb[0].mxu0
  %v2343 = vpop.f32.mrb[0].mxu0
  %2344 = vdwg.mxu0
  %v2345 = vmax.f32 %v1970, 0.0
  %v2346 = vmax.f32 %v1972, 0.0
  %v2347 = vmax.f32 %v2093, 0.0
  %v2348 = vmax.f32 %v2095, 0.0
  %v2349 = vmax.f32 %v2216, 0.0
  %v2350 = vmax.f32 %v2218, 0.0
  %v2351 = vmax.f32 %v2339, 0.0
  %v2352 = vmax.f32 %v2341, 0.0
  %v2353 = vpack.c.bf16 %v2345, %v2345
  %v2354 = vpack.c.bf16 %v2346, %v2346
  %v2355 = vpack.c.bf16 %v2347, %v2347
  %v2356 = vpack.c.bf16 %v2348, %v2348
  %v2357 = vpack.c.bf16 %v2349, %v2349
  %v2358 = vpack.c.bf16 %v2350, %v2350
  %v2359 = vpack.c.bf16 %v2351, %v2351
  %v2360 = vpack.c.bf16 %v2352, %v2352
  %v2361 = vld [vmem:[%s3] sm:$0xff]
  %v2362 = vld [vmem:[%s3 + $0x8] sm:$0xff]
  %v2363 = vld [vmem:[%s3 + $0x10] sm:$0xff]
  %v2364 = vld [vmem:[%s3 + $0x18] sm:$0xff]
  %v2365 = vld [vmem:[%s3 + $0x20] sm:$0xff]
  %v2366 = vld [vmem:[%s3 + $0x28] sm:$0xff]
  %v2367 = vld [vmem:[%s3 + $0x30] sm:$0xff]
  %v2368 = vld [vmem:[%s3 + $0x38] sm:$0xff]
  %v2369 = vld [vmem:[%s3 + $0x40] sm:$0xff]
  %v2370 = vld [vmem:[%s3 + $0x48] sm:$0xff]
  %v2371 = vld [vmem:[%s3 + $0x50] sm:$0xff]
  %v2372 = vld [vmem:[%s3 + $0x58] sm:$0xff]
  %v2373 = vld [vmem:[%s3 + $0x60] sm:$0xff]
  %v2374 = vld [vmem:[%s3 + $0x68] sm:$0xff]
  %v2375 = vld [vmem:[%s3 + $0x70] sm:$0xff]
  %v2376 = vld [vmem:[%s3 + $0x78] sm:$0xff]
  %v2377 = vld [vmem:[%s3 + $0x80] sm:$0xff]
  %v2378 = vld [vmem:[%s3 + $0x88] sm:$0xff]
  %v2379 = vld [vmem:[%s3 + $0x90] sm:$0xff]
  %v2380 = vld [vmem:[%s3 + $0x98] sm:$0xff]
  %v2381 = vld [vmem:[%s3 + $0xa0] sm:$0xff]
  %v2382 = vld [vmem:[%s3 + $0xa8] sm:$0xff]
  %v2383 = vld [vmem:[%s3 + $0xb0] sm:$0xff]
  %v2384 = vld [vmem:[%s3 + $0xb8] sm:$0xff]
  %v2385 = vld [vmem:[%s3 + $0xc0] sm:$0xff]
  %v2386 = vld [vmem:[%s3 + $0xc8] sm:$0xff]
  %v2387 = vld [vmem:[%s3 + $0xd0] sm:$0xff]
  %v2388 = vld [vmem:[%s3 + $0xd8] sm:$0xff]
  %v2389 = vld [vmem:[%s3 + $0xe0] sm:$0xff]
  %v2390 = vld [vmem:[%s3 + $0xe8] sm:$0xff]
  %v2391 = vld [vmem:[%s3 + $0xf0] sm:$0xff]
  %v2392 = vld [vmem:[%s3 + $0xf8] sm:$0xff]
  %v2393 = vld [vmem:[%s3 + $0x100] sm:$0xff]
  %v2394 = vld [vmem:[%s3 + $0x108] sm:$0xff]
  %v2395 = vld [vmem:[%s3 + $0x110] sm:$0xff]
  %v2396 = vld [vmem:[%s3 + $0x118] sm:$0xff]
  %v2397 = vld [vmem:[%s3 + $0x120] sm:$0xff]
  %v2398 = vld [vmem:[%s3 + $0x128] sm:$0xff]
  %v2399 = vld [vmem:[%s3 + $0x130] sm:$0xff]
  %v2400 = vld [vmem:[%s3 + $0x138] sm:$0xff]
  %v2401 = vld [vmem:[%s3 + $0x140] sm:$0xff]
  %v2402 = vld [vmem:[%s3 + $0x148] sm:$0xff]
  %v2403 = vld [vmem:[%s3 + $0x150] sm:$0xff]
  %v2404 = vld [vmem:[%s3 + $0x158] sm:$0xff]
  %v2405 = vld [vmem:[%s3 + $0x160] sm:$0xff]
  %v2406 = vld [vmem:[%s3 + $0x168] sm:$0xff]
  %v2407 = vld [vmem:[%s3 + $0x170] sm:$0xff]
  %v2408 = vld [vmem:[%s3 + $0x178] sm:$0xff]
  %v2409 = vld [vmem:[%s3 + $0x180] sm:$0xff]
  %v2410 = vld [vmem:[%s3 + $0x188] sm:$0xff]
  %v2411 = vld [vmem:[%s3 + $0x190] sm:$0xff]
  %v2412 = vld [vmem:[%s3 + $0x198] sm:$0xff]
  %v2413 = vld [vmem:[%s3 + $0x1a0] sm:$0xff]
  %v2414 = vld [vmem:[%s3 + $0x1a8] sm:$0xff]
  %v2415 = vld [vmem:[%s3 + $0x1b0] sm:$0xff]
  %v2416 = vld [vmem:[%s3 + $0x1b8] sm:$0xff]
  %v2417 = vld [vmem:[%s3 + $0x1c0] sm:$0xff]
  %v2418 = vld [vmem:[%s3 + $0x1c8] sm:$0xff]
  %v2419 = vld [vmem:[%s3 + $0x1d0] sm:$0xff]
  %v2420 = vld [vmem:[%s3 + $0x1d8] sm:$0xff]
  %v2421 = vld [vmem:[%s3 + $0x1e0] sm:$0xff]
  %v2422 = vld [vmem:[%s3 + $0x1e8] sm:$0xff]
  %v2423 = vld [vmem:[%s3 + $0x1f0] sm:$0xff]
  %v2424 = vld [vmem:[%s3 + $0x1f8] sm:$0xff]
  %v2425 = vld [vmem:[%s3 + $0x200] sm:$0xff]
  %v2426 = vld [vmem:[%s3 + $0x208] sm:$0xff]
  %v2427 = vld [vmem:[%s3 + $0x210] sm:$0xff]
  %v2428 = vld [vmem:[%s3 + $0x218] sm:$0xff]
  %v2429 = vld [vmem:[%s3 + $0x220] sm:$0xff]
  %v2430 = vld [vmem:[%s3 + $0x228] sm:$0xff]
  %v2431 = vld [vmem:[%s3 + $0x230] sm:$0xff]
  %v2432 = vld [vmem:[%s3 + $0x238] sm:$0xff]
  %v2433 = vld [vmem:[%s3 + $0x240] sm:$0xff]
  %v2434 = vld [vmem:[%s3 + $0x248] sm:$0xff]
  %v2435 = vld [vmem:[%s3 + $0x250] sm:$0xff]
  %v2436 = vld [vmem:[%s3 + $0x258] sm:$0xff]
  %v2437 = vld [vmem:[%s3 + $0x260] sm:$0xff]
  %v2438 = vld [vmem:[%s3 + $0x268] sm:$0xff]
  %v2439 = vld [vmem:[%s3 + $0x270] sm:$0xff]
  %v2440 = vld [vmem:[%s3 + $0x278] sm:$0xff]
  %v2441 = vld [vmem:[%s3 + $0x280] sm:$0xff]
  %v2442 = vld [vmem:[%s3 + $0x288] sm:$0xff]
  %v2443 = vld [vmem:[%s3 + $0x290] sm:$0xff]
  %v2444 = vld [vmem:[%s3 + $0x298] sm:$0xff]
  %v2445 = vld [vmem:[%s3 + $0x2a0] sm:$0xff]
  %v2446 = vld [vmem:[%s3 + $0x2a8] sm:$0xff]
  %v2447 = vld [vmem:[%s3 + $0x2b0] sm:$0xff]
  %v2448 = vld [vmem:[%s3 + $0x2b8] sm:$0xff]
  %v2449 = vld [vmem:[%s3 + $0x2c0] sm:$0xff]
  %v2450 = vld [vmem:[%s3 + $0x2c8] sm:$0xff]
  %v2451 = vld [vmem:[%s3 + $0x2d0] sm:$0xff]
  %v2452 = vld [vmem:[%s3 + $0x2d8] sm:$0xff]
  %v2453 = vld [vmem:[%s3 + $0x2e0] sm:$0xff]
  %v2454 = vld [vmem:[%s3 + $0x2e8] sm:$0xff]
  %v2455 = vld [vmem:[%s3 + $0x2f0] sm:$0xff]
  %v2456 = vld [vmem:[%s3 + $0x2f8] sm:$0xff]
  %v2457 = vld [vmem:[%s3 + $0x300] sm:$0xff]
  %v2458 = vld [vmem:[%s3 + $0x308] sm:$0xff]
  %v2459 = vld [vmem:[%s3 + $0x310] sm:$0xff]
  %v2460 = vld [vmem:[%s3 + $0x318] sm:$0xff]
  %v2461 = vld [vmem:[%s3 + $0x320] sm:$0xff]
  %v2462 = vld [vmem:[%s3 + $0x328] sm:$0xff]
  %v2463 = vld [vmem:[%s3 + $0x330] sm:$0xff]
  %v2464 = vld [vmem:[%s3 + $0x338] sm:$0xff]
  %v2465 = vld [vmem:[%s3 + $0x340] sm:$0xff]
  %v2466 = vld [vmem:[%s3 + $0x348] sm:$0xff]
  %v2467 = vld [vmem:[%s3 + $0x350] sm:$0xff]
  %v2468 = vld [vmem:[%s3 + $0x358] sm:$0xff]
  %v2469 = vld [vmem:[%s3 + $0x360] sm:$0xff]
  %v2470 = vld [vmem:[%s3 + $0x368] sm:$0xff]
  %v2471 = vld [vmem:[%s3 + $0x370] sm:$0xff]
  %v2472 = vld [vmem:[%s3 + $0x378] sm:$0xff]
  %v2473 = vld [vmem:[%s3 + $0x380] sm:$0xff]
  %v2474 = vld [vmem:[%s3 + $0x388] sm:$0xff]
  %v2475 = vld [vmem:[%s3 + $0x390] sm:$0xff]
  %v2476 = vld [vmem:[%s3 + $0x398] sm:$0xff]
  %v2477 = vld [vmem:[%s3 + $0x3a0] sm:$0xff]
  %v2478 = vld [vmem:[%s3 + $0x3a8] sm:$0xff]
  %v2479 = vld [vmem:[%s3 + $0x3b0] sm:$0xff]
  %v2480 = vld [vmem:[%s3 + $0x3b8] sm:$0xff]
  %v2481 = vld [vmem:[%s3 + $0x3c0] sm:$0xff]
  %v2482 = vld [vmem:[%s3 + $0x3c8] sm:$0xff]
  %v2483 = vld [vmem:[%s3 + $0x3d0] sm:$0xff]
  %v2484 = vld [vmem:[%s3 + $0x3d8] sm:$0xff]
  %v2485 = vld [vmem:[%s3 + $0x3e0] sm:$0xff]
  %v2486 = vld [vmem:[%s3 + $0x3e8] sm:$0xff]
  %v2487 = vld [vmem:[%s3 + $0x3f0] sm:$0xff]
  %v2488 = vld [vmem:[%s3 + $0x3f8] sm:$0xff]
  %v2489 = vld [vmem:[%s3 + $0x400] sm:$0xff]
  %v2490 = vld [vmem:[%s3 + $0x408] sm:$0xff]
  %v2491 = vld [vmem:[%s3 + $0x410] sm:$0xff]
  %v2492 = vld [vmem:[%s3 + $0x418] sm:$0xff]
  %v2493 = vld [vmem:[%s3 + $0x420] sm:$0xff]
  %v2494 = vld [vmem:[%s3 + $0x428] sm:$0xff]
  %v2495 = vld [vmem:[%s3 + $0x430] sm:$0xff]
  %v2496 = vld [vmem:[%s3 + $0x438] sm:$0xff]
  %v2497 = vld [vmem:[%s3 + $0x440] sm:$0xff]
  %v2498 = vld [vmem:[%s3 + $0x448] sm:$0xff]
  %v2499 = vld [vmem:[%s3 + $0x450] sm:$0xff]
  %v2500 = vld [vmem:[%s3 + $0x458] sm:$0xff]
  %v2501 = vld [vmem:[%s3 + $0x460] sm:$0xff]
  %v2502 = vld [vmem:[%s3 + $0x468] sm:$0xff]
  %v2503 = vld [vmem:[%s3 + $0x470] sm:$0xff]
  %v2504 = vld [vmem:[%s3 + $0x478] sm:$0xff]
  %v2505 = vld [vmem:[%s3 + $0x480] sm:$0xff]
  %v2506 = vld [vmem:[%s3 + $0x488] sm:$0xff]
  %v2507 = vld [vmem:[%s3 + $0x490] sm:$0xff]
  %v2508 = vld [vmem:[%s3 + $0x498] sm:$0xff]
  %v2509 = vld [vmem:[%s3 + $0x4a0] sm:$0xff]
  %v2510 = vld [vmem:[%s3 + $0x4a8] sm:$0xff]
  %v2511 = vld [vmem:[%s3 + $0x4b0] sm:$0xff]
  %v2512 = vld [vmem:[%s3 + $0x4b8] sm:$0xff]
  %v2513 = vld [vmem:[%s3 + $0x4c0] sm:$0xff]
  %v2514 = vld [vmem:[%s3 + $0x4c8] sm:$0xff]
  %v2515 = vld [vmem:[%s3 + $0x4d0] sm:$0xff]
  %v2516 = vld [vmem:[%s3 + $0x4d8] sm:$0xff]
  %v2517 = vld [vmem:[%s3 + $0x4e0] sm:$0xff]
  %v2518 = vld [vmem:[%s3 + $0x4e8] sm:$0xff]
  %v2519 = vld [vmem:[%s3 + $0x4f0] sm:$0xff]
  %v2520 = vld [vmem:[%s3 + $0x4f8] sm:$0xff]
  %v2521 = vld [vmem:[%s3 + $0x500] sm:$0xff]
  %v2522 = vld [vmem:[%s3 + $0x508] sm:$0xff]
  %v2523 = vld [vmem:[%s3 + $0x510] sm:$0xff]
  %v2524 = vld [vmem:[%s3 + $0x518] sm:$0xff]
  %v2525 = vld [vmem:[%s3 + $0x520] sm:$0xff]
  %v2526 = vld [vmem:[%s3 + $0x528] sm:$0xff]
  %v2527 = vld [vmem:[%s3 + $0x530] sm:$0xff]
  %v2528 = vld [vmem:[%s3 + $0x538] sm:$0xff]
  %v2529 = vld [vmem:[%s3 + $0x540] sm:$0xff]
  %v2530 = vld [vmem:[%s3 + $0x548] sm:$0xff]
  %v2531 = vld [vmem:[%s3 + $0x550] sm:$0xff]
  %v2532 = vld [vmem:[%s3 + $0x558] sm:$0xff]
  %v2533 = vld [vmem:[%s3 + $0x560] sm:$0xff]
  %v2534 = vld [vmem:[%s3 + $0x568] sm:$0xff]
  %v2535 = vld [vmem:[%s3 + $0x570] sm:$0xff]
  %v2536 = vld [vmem:[%s3 + $0x578] sm:$0xff]
  %v2537 = vld [vmem:[%s3 + $0x580] sm:$0xff]
  %v2538 = vld [vmem:[%s3 + $0x588] sm:$0xff]
  %v2539 = vld [vmem:[%s3 + $0x590] sm:$0xff]
  %v2540 = vld [vmem:[%s3 + $0x598] sm:$0xff]
  %v2541 = vld [vmem:[%s3 + $0x5a0] sm:$0xff]
  %v2542 = vld [vmem:[%s3 + $0x5a8] sm:$0xff]
  %v2543 = vld [vmem:[%s3 + $0x5b0] sm:$0xff]
  %v2544 = vld [vmem:[%s3 + $0x5b8] sm:$0xff]
  %v2545 = vld [vmem:[%s3 + $0x5c0] sm:$0xff]
  %v2546 = vld [vmem:[%s3 + $0x5c8] sm:$0xff]
  %v2547 = vld [vmem:[%s3 + $0x5d0] sm:$0xff]
  %v2548 = vld [vmem:[%s3 + $0x5d8] sm:$0xff]
  %v2549 = vld [vmem:[%s3 + $0x5e0] sm:$0xff]
  %v2550 = vld [vmem:[%s3 + $0x5e8] sm:$0xff]
  %v2551 = vld [vmem:[%s3 + $0x5f0] sm:$0xff]
  %v2552 = vld [vmem:[%s3 + $0x5f8] sm:$0xff]
  %v2553 = vld [vmem:[%s3 + $0x600] sm:$0xff]
  %v2554 = vld [vmem:[%s3 + $0x608] sm:$0xff]
  %v2555 = vld [vmem:[%s3 + $0x610] sm:$0xff]
  %v2556 = vld [vmem:[%s3 + $0x618] sm:$0xff]
  %v2557 = vld [vmem:[%s3 + $0x620] sm:$0xff]
  %v2558 = vld [vmem:[%s3 + $0x628] sm:$0xff]
  %v2559 = vld [vmem:[%s3 + $0x630] sm:$0xff]
  %v2560 = vld [vmem:[%s3 + $0x638] sm:$0xff]
  %v2561 = vld [vmem:[%s3 + $0x640] sm:$0xff]
  %v2562 = vld [vmem:[%s3 + $0x648] sm:$0xff]
  %v2563 = vld [vmem:[%s3 + $0x650] sm:$0xff]
  %v2564 = vld [vmem:[%s3 + $0x658] sm:$0xff]
  %v2565 = vld [vmem:[%s3 + $0x660] sm:$0xff]
  %v2566 = vld [vmem:[%s3 + $0x668] sm:$0xff]
  %v2567 = vld [vmem:[%s3 + $0x670] sm:$0xff]
  %v2568 = vld [vmem:[%s3 + $0x678] sm:$0xff]
  %v2569 = vld [vmem:[%s3 + $0x680] sm:$0xff]
  %v2570 = vld [vmem:[%s3 + $0x688] sm:$0xff]
  %v2571 = vld [vmem:[%s3 + $0x690] sm:$0xff]
  %v2572 = vld [vmem:[%s3 + $0x698] sm:$0xff]
  %v2573 = vld [vmem:[%s3 + $0x6a0] sm:$0xff]
  %v2574 = vld [vmem:[%s3 + $0x6a8] sm:$0xff]
  %v2575 = vld [vmem:[%s3 + $0x6b0] sm:$0xff]
  %v2576 = vld [vmem:[%s3 + $0x6b8] sm:$0xff]
  %v2577 = vld [vmem:[%s3 + $0x6c0] sm:$0xff]
  %v2578 = vld [vmem:[%s3 + $0x6c8] sm:$0xff]
  %v2579 = vld [vmem:[%s3 + $0x6d0] sm:$0xff]
  %v2580 = vld [vmem:[%s3 + $0x6d8] sm:$0xff]
  %v2581 = vld [vmem:[%s3 + $0x6e0] sm:$0xff]
  %v2582 = vld [vmem:[%s3 + $0x6e8] sm:$0xff]
  %v2583 = vld [vmem:[%s3 + $0x6f0] sm:$0xff]
  %v2584 = vld [vmem:[%s3 + $0x6f8] sm:$0xff]
  %v2585 = vld [vmem:[%s3 + $0x700] sm:$0xff]
  %v2586 = vld [vmem:[%s3 + $0x708] sm:$0xff]
  %v2587 = vld [vmem:[%s3 + $0x710] sm:$0xff]
  %v2588 = vld [vmem:[%s3 + $0x718] sm:$0xff]
  %v2589 = vld [vmem:[%s3 + $0x720] sm:$0xff]
  %v2590 = vld [vmem:[%s3 + $0x728] sm:$0xff]
  %v2591 = vld [vmem:[%s3 + $0x730] sm:$0xff]
  %v2592 = vld [vmem:[%s3 + $0x738] sm:$0xff]
  %v2593 = vld [vmem:[%s3 + $0x740] sm:$0xff]
  %v2594 = vld [vmem:[%s3 + $0x748] sm:$0xff]
  %v2595 = vld [vmem:[%s3 + $0x750] sm:$0xff]
  %v2596 = vld [vmem:[%s3 + $0x758] sm:$0xff]
  %v2597 = vld [vmem:[%s3 + $0x760] sm:$0xff]
  %v2598 = vld [vmem:[%s3 + $0x768] sm:$0xff]
  %v2599 = vld [vmem:[%s3 + $0x770] sm:$0xff]
  %v2600 = vld [vmem:[%s3 + $0x778] sm:$0xff]
  %v2601 = vld [vmem:[%s3 + $0x780] sm:$0xff]
  %v2602 = vld [vmem:[%s3 + $0x788] sm:$0xff]
  %v2603 = vld [vmem:[%s3 + $0x790] sm:$0xff]
  %v2604 = vld [vmem:[%s3 + $0x798] sm:$0xff]
  %v2605 = vld [vmem:[%s3 + $0x7a0] sm:$0xff]
  %v2606 = vld [vmem:[%s3 + $0x7a8] sm:$0xff]
  %v2607 = vld [vmem:[%s3 + $0x7b0] sm:$0xff]
  %v2608 = vld [vmem:[%s3 + $0x7b8] sm:$0xff]
  %v2609 = vld [vmem:[%s3 + $0x7c0] sm:$0xff]
  %v2610 = vld [vmem:[%s3 + $0x7c8] sm:$0xff]
  %v2611 = vld [vmem:[%s3 + $0x7d0] sm:$0xff]
  %v2612 = vld [vmem:[%s3 + $0x7d8] sm:$0xff]
  %v2613 = vld [vmem:[%s3 + $0x7e0] sm:$0xff]
  %v2614 = vld [vmem:[%s3 + $0x7e8] sm:$0xff]
  %v2615 = vld [vmem:[%s3 + $0x7f0] sm:$0xff]
  %v2616 = vld [vmem:[%s3 + $0x7f8] sm:$0xff]
  %v2617 = vld [vmem:[%s4] sm:$0xf]
  %v2619 = vlaneseq
  %v2620 = vshrl.u32 %v2619, 7
  %v2621 = vsub.s32 0, %v2620
  %v2622 = vrot.slane %v2617, %v2621
  %v2623 = vlaneseq
  %v2624 = vshrl.u32 %v2623, 7
  %v2625 = vsub.s32 1, %v2624
  %v2626 = vrot.slane %v2617, %v2625
  %v2627 = vlaneseq
  %v2628 = vshrl.u32 %v2627, 7
  %v2629 = vsub.s32 2, %v2628
  %v2630 = vrot.slane %v2617, %v2629
  %v2631 = vlaneseq
  %v2632 = vshrl.u32 %v2631, 7
  %v2633 = vsub.s32 3, %v2632
  %v2634 = vrot.slane %v2617, %v2633
  %v2895 = vunpack.c.l.b16 %v2361
  %v2896 = vunpack.c.h.b16 %v2361
  %v2897 = vunpack.c.l.b16 %v2362
  %v2898 = vunpack.c.h.b16 %v2362
  %v2899 = vunpack.c.l.b16 %v2363
  %v2900 = vunpack.c.h.b16 %v2363
  %v2901 = vunpack.c.l.b16 %v2364
  %v2902 = vunpack.c.h.b16 %v2364
  %v2903 = vunpack.c.l.b16 %v2365
  %v2904 = vunpack.c.h.b16 %v2365
  %v2905 = vunpack.c.l.b16 %v2366
  %v2906 = vunpack.c.h.b16 %v2366
  %v2907 = vunpack.c.l.b16 %v2367
  %v2908 = vunpack.c.h.b16 %v2367
  %v2909 = vunpack.c.l.b16 %v2368
  %v2910 = vunpack.c.h.b16 %v2368
  %v2911 = vunpack.c.l.b16 %v2369
  %v2912 = vunpack.c.h.b16 %v2369
  %v2913 = vunpack.c.l.b16 %v2370
  %v2914 = vunpack.c.h.b16 %v2370
  %v2915 = vunpack.c.l.b16 %v2371
  %v2916 = vunpack.c.h.b16 %v2371
  %v2917 = vunpack.c.l.b16 %v2372
  %v2918 = vunpack.c.h.b16 %v2372
  %v2919 = vunpack.c.l.b16 %v2373
  %v2920 = vunpack.c.h.b16 %v2373
  %v2921 = vunpack.c.l.b16 %v2374
  %v2922 = vunpack.c.h.b16 %v2374
  %v2923 = vunpack.c.l.b16 %v2375
  %v2924 = vunpack.c.h.b16 %v2375
  %v2925 = vunpack.c.l.b16 %v2376
  %v2926 = vunpack.c.h.b16 %v2376
  %v2927 = vunpack.c.l.b16 %v2377
  %v2928 = vunpack.c.h.b16 %v2377
  %v2929 = vunpack.c.l.b16 %v2378
  %v2930 = vunpack.c.h.b16 %v2378
  %v2931 = vunpack.c.l.b16 %v2379
  %v2932 = vunpack.c.h.b16 %v2379
  %v2933 = vunpack.c.l.b16 %v2380
  %v2934 = vunpack.c.h.b16 %v2380
  %v2935 = vunpack.c.l.b16 %v2381
  %v2936 = vunpack.c.h.b16 %v2381
  %v2937 = vunpack.c.l.b16 %v2382
  %v2938 = vunpack.c.h.b16 %v2382
  %v2939 = vunpack.c.l.b16 %v2383
  %v2940 = vunpack.c.h.b16 %v2383
  %v2941 = vunpack.c.l.b16 %v2384
  %v2942 = vunpack.c.h.b16 %v2384
  %v2943 = vunpack.c.l.b16 %v2385
  %v2944 = vunpack.c.h.b16 %v2385
  %v2945 = vunpack.c.l.b16 %v2386
  %v2946 = vunpack.c.h.b16 %v2386
  %v2947 = vunpack.c.l.b16 %v2387
  %v2948 = vunpack.c.h.b16 %v2387
  %v2949 = vunpack.c.l.b16 %v2388
  %v2950 = vunpack.c.h.b16 %v2388
  %v2951 = vunpack.c.l.b16 %v2389
  %v2952 = vunpack.c.h.b16 %v2389
  %v2953 = vunpack.c.l.b16 %v2390
  %v2954 = vunpack.c.h.b16 %v2390
  %v2955 = vunpack.c.l.b16 %v2391
  %v2956 = vunpack.c.h.b16 %v2391
  %v2957 = vunpack.c.l.b16 %v2392
  %v2958 = vunpack.c.h.b16 %v2392
  %v2959 = vunpack.c.l.b16 %v2393
  %v2960 = vunpack.c.h.b16 %v2393
  %v2961 = vunpack.c.l.b16 %v2394
  %v2962 = vunpack.c.h.b16 %v2394
  %v2963 = vunpack.c.l.b16 %v2395
  %v2964 = vunpack.c.h.b16 %v2395
  %v2965 = vunpack.c.l.b16 %v2396
  %v2966 = vunpack.c.h.b16 %v2396
  %v2967 = vunpack.c.l.b16 %v2397
  %v2968 = vunpack.c.h.b16 %v2397
  %v2969 = vunpack.c.l.b16 %v2398
  %v2970 = vunpack.c.h.b16 %v2398
  %v2971 = vunpack.c.l.b16 %v2399
  %v2972 = vunpack.c.h.b16 %v2399
  %v2973 = vunpack.c.l.b16 %v2400
  %v2974 = vunpack.c.h.b16 %v2400
  %v2975 = vunpack.c.l.b16 %v2401
  %v2976 = vunpack.c.h.b16 %v2401
  %v2977 = vunpack.c.l.b16 %v2402
  %v2978 = vunpack.c.h.b16 %v2402
  %v2979 = vunpack.c.l.b16 %v2403
  %v2980 = vunpack.c.h.b16 %v2403
  %v2981 = vunpack.c.l.b16 %v2404
  %v2982 = vunpack.c.h.b16 %v2404
  %v2983 = vunpack.c.l.b16 %v2405
  %v2984 = vunpack.c.h.b16 %v2405
  %v2985 = vunpack.c.l.b16 %v2406
  %v2986 = vunpack.c.h.b16 %v2406
  %v2987 = vunpack.c.l.b16 %v2407
  %v2988 = vunpack.c.h.b16 %v2407
  %v2989 = vunpack.c.l.b16 %v2408
  %v2990 = vunpack.c.h.b16 %v2408
  %v2991 = vunpack.c.l.b16 %v2409
  %v2992 = vunpack.c.h.b16 %v2409
  %v2993 = vunpack.c.l.b16 %v2410
  %v2994 = vunpack.c.h.b16 %v2410
  %v2995 = vunpack.c.l.b16 %v2411
  %v2996 = vunpack.c.h.b16 %v2411
  %v2997 = vunpack.c.l.b16 %v2412
  %v2998 = vunpack.c.h.b16 %v2412
  %v2999 = vunpack.c.l.b16 %v2413
  %v3000 = vunpack.c.h.b16 %v2413
  %v3001 = vunpack.c.l.b16 %v2414
  %v3002 = vunpack.c.h.b16 %v2414
  %v3003 = vunpack.c.l.b16 %v2415
  %v3004 = vunpack.c.h.b16 %v2415
  %v3005 = vunpack.c.l.b16 %v2416
  %v3006 = vunpack.c.h.b16 %v2416
  %v3007 = vunpack.c.l.b16 %v2417
  %v3008 = vunpack.c.h.b16 %v2417
  %v3009 = vunpack.c.l.b16 %v2418
  %v3010 = vunpack.c.h.b16 %v2418
  %v3011 = vunpack.c.l.b16 %v2419
  %v3012 = vunpack.c.h.b16 %v2419
  %v3013 = vunpack.c.l.b16 %v2420
  %v3014 = vunpack.c.h.b16 %v2420
  %v3015 = vunpack.c.l.b16 %v2421
  %v3016 = vunpack.c.h.b16 %v2421
  %v3017 = vunpack.c.l.b16 %v2422
  %v3018 = vunpack.c.h.b16 %v2422
  %v3019 = vunpack.c.l.b16 %v2423
  %v3020 = vunpack.c.h.b16 %v2423
  %v3021 = vunpack.c.l.b16 %v2424
  %v3022 = vunpack.c.h.b16 %v2424
  %v3023 = vunpack.c.l.b16 %v2425
  %v3024 = vunpack.c.h.b16 %v2425
  %v3025 = vunpack.c.l.b16 %v2426
  %v3026 = vunpack.c.h.b16 %v2426
  %v3027 = vunpack.c.l.b16 %v2427
  %v3028 = vunpack.c.h.b16 %v2427
  %v3029 = vunpack.c.l.b16 %v2428
  %v3030 = vunpack.c.h.b16 %v2428
  %v3031 = vunpack.c.l.b16 %v2429
  %v3032 = vunpack.c.h.b16 %v2429
  %v3033 = vunpack.c.l.b16 %v2430
  %v3034 = vunpack.c.h.b16 %v2430
  %v3035 = vunpack.c.l.b16 %v2431
  %v3036 = vunpack.c.h.b16 %v2431
  %v3037 = vunpack.c.l.b16 %v2432
  %v3038 = vunpack.c.h.b16 %v2432
  %v3039 = vunpack.c.l.b16 %v2433
  %v3040 = vunpack.c.h.b16 %v2433
  %v3041 = vunpack.c.l.b16 %v2434
  %v3042 = vunpack.c.h.b16 %v2434
  %v3043 = vunpack.c.l.b16 %v2435
  %v3044 = vunpack.c.h.b16 %v2435
  %v3045 = vunpack.c.l.b16 %v2436
  %v3046 = vunpack.c.h.b16 %v2436
  %v3047 = vunpack.c.l.b16 %v2437
  %v3048 = vunpack.c.h.b16 %v2437
  %v3049 = vunpack.c.l.b16 %v2438
  %v3050 = vunpack.c.h.b16 %v2438
  %v3051 = vunpack.c.l.b16 %v2439
  %v3052 = vunpack.c.h.b16 %v2439
  %v3053 = vunpack.c.l.b16 %v2440
  %v3054 = vunpack.c.h.b16 %v2440
  %v3055 = vunpack.c.l.b16 %v2441
  %v3056 = vunpack.c.h.b16 %v2441
  %v3057 = vunpack.c.l.b16 %v2442
  %v3058 = vunpack.c.h.b16 %v2442
  %v3059 = vunpack.c.l.b16 %v2443
  %v3060 = vunpack.c.h.b16 %v2443
  %v3061 = vunpack.c.l.b16 %v2444
  %v3062 = vunpack.c.h.b16 %v2444
  %v3063 = vunpack.c.l.b16 %v2445
  %v3064 = vunpack.c.h.b16 %v2445
  %v3065 = vunpack.c.l.b16 %v2446
  %v3066 = vunpack.c.h.b16 %v2446
  %v3067 = vunpack.c.l.b16 %v2447
  %v3068 = vunpack.c.h.b16 %v2447
  %v3069 = vunpack.c.l.b16 %v2448
  %v3070 = vunpack.c.h.b16 %v2448
  %v3071 = vunpack.c.l.b16 %v2449
  %v3072 = vunpack.c.h.b16 %v2449
  %v3073 = vunpack.c.l.b16 %v2450
  %v3074 = vunpack.c.h.b16 %v2450
  %v3075 = vunpack.c.l.b16 %v2451
  %v3076 = vunpack.c.h.b16 %v2451
  %v3077 = vunpack.c.l.b16 %v2452
  %v3078 = vunpack.c.h.b16 %v2452
  %v3079 = vunpack.c.l.b16 %v2453
  %v3080 = vunpack.c.h.b16 %v2453
  %v3081 = vunpack.c.l.b16 %v2454
  %v3082 = vunpack.c.h.b16 %v2454
  %v3083 = vunpack.c.l.b16 %v2455
  %v3084 = vunpack.c.h.b16 %v2455
  %v3085 = vunpack.c.l.b16 %v2456
  %v3086 = vunpack.c.h.b16 %v2456
  %v3087 = vunpack.c.l.b16 %v2457
  %v3088 = vunpack.c.h.b16 %v2457
  %v3089 = vunpack.c.l.b16 %v2458
  %v3090 = vunpack.c.h.b16 %v2458
  %v3091 = vunpack.c.l.b16 %v2459
  %v3092 = vunpack.c.h.b16 %v2459
  %v3093 = vunpack.c.l.b16 %v2460
  %v3094 = vunpack.c.h.b16 %v2460
  %v3095 = vunpack.c.l.b16 %v2461
  %v3096 = vunpack.c.h.b16 %v2461
  %v3097 = vunpack.c.l.b16 %v2462
  %v3098 = vunpack.c.h.b16 %v2462
  %v3099 = vunpack.c.l.b16 %v2463
  %v3100 = vunpack.c.h.b16 %v2463
  %v3101 = vunpack.c.l.b16 %v2464
  %v3102 = vunpack.c.h.b16 %v2464
  %v3103 = vunpack.c.l.b16 %v2465
  %v3104 = vunpack.c.h.b16 %v2465
  %v3105 = vunpack.c.l.b16 %v2466
  %v3106 = vunpack.c.h.b16 %v2466
  %v3107 = vunpack.c.l.b16 %v2467
  %v3108 = vunpack.c.h.b16 %v2467
  %v3109 = vunpack.c.l.b16 %v2468
  %v3110 = vunpack.c.h.b16 %v2468
  %v3111 = vunpack.c.l.b16 %v2469
  %v3112 = vunpack.c.h.b16 %v2469
  %v3113 = vunpack.c.l.b16 %v2470
  %v3114 = vunpack.c.h.b16 %v2470
  %v3115 = vunpack.c.l.b16 %v2471
  %v3116 = vunpack.c.h.b16 %v2471
  %v3117 = vunpack.c.l.b16 %v2472
  %v3118 = vunpack.c.h.b16 %v2472
  %v3119 = vunpack.c.l.b16 %v2473
  %v3120 = vunpack.c.h.b16 %v2473
  %v3121 = vunpack.c.l.b16 %v2474
  %v3122 = vunpack.c.h.b16 %v2474
  %v3123 = vunpack.c.l.b16 %v2475
  %v3124 = vunpack.c.h.b16 %v2475
  %v3125 = vunpack.c.l.b16 %v2476
  %v3126 = vunpack.c.h.b16 %v2476
  %v3127 = vunpack.c.l.b16 %v2477
  %v3128 = vunpack.c.h.b16 %v2477
  %v3129 = vunpack.c.l.b16 %v2478
  %v3130 = vunpack.c.h.b16 %v2478
  %v3131 = vunpack.c.l.b16 %v2479
  %v3132 = vunpack.c.h.b16 %v2479
  %v3133 = vunpack.c.l.b16 %v2480
  %v3134 = vunpack.c.h.b16 %v2480
  %v3135 = vunpack.c.l.b16 %v2481
  %v3136 = vunpack.c.h.b16 %v2481
  %v3137 = vunpack.c.l.b16 %v2482
  %v3138 = vunpack.c.h.b16 %v2482
  %v3139 = vunpack.c.l.b16 %v2483
  %v3140 = vunpack.c.h.b16 %v2483
  %v3141 = vunpack.c.l.b16 %v2484
  %v3142 = vunpack.c.h.b16 %v2484
  %v3143 = vunpack.c.l.b16 %v2485
  %v3144 = vunpack.c.h.b16 %v2485
  %v3145 = vunpack.c.l.b16 %v2486
  %v3146 = vunpack.c.h.b16 %v2486
  %v3147 = vunpack.c.l.b16 %v2487
  %v3148 = vunpack.c.h.b16 %v2487
  %v3149 = vunpack.c.l.b16 %v2488
  %v3150 = vunpack.c.h.b16 %v2488
  %v3151 = vunpack.c.l.b16 %v2489
  %v3152 = vunpack.c.h.b16 %v2489
  %v3153 = vunpack.c.l.b16 %v2490
  %v3154 = vunpack.c.h.b16 %v2490
  %v3155 = vunpack.c.l.b16 %v2491
  %v3156 = vunpack.c.h.b16 %v2491
  %v3157 = vunpack.c.l.b16 %v2492
  %v3158 = vunpack.c.h.b16 %v2492
  %v3159 = vunpack.c.l.b16 %v2493
  %v3160 = vunpack.c.h.b16 %v2493
  %v3161 = vunpack.c.l.b16 %v2494
  %v3162 = vunpack.c.h.b16 %v2494
  %v3163 = vunpack.c.l.b16 %v2495
  %v3164 = vunpack.c.h.b16 %v2495
  %v3165 = vunpack.c.l.b16 %v2496
  %v3166 = vunpack.c.h.b16 %v2496
  %v3167 = vunpack.c.l.b16 %v2497
  %v3168 = vunpack.c.h.b16 %v2497
  %v3169 = vunpack.c.l.b16 %v2498
  %v3170 = vunpack.c.h.b16 %v2498
  %v3171 = vunpack.c.l.b16 %v2499
  %v3172 = vunpack.c.h.b16 %v2499
  %v3173 = vunpack.c.l.b16 %v2500
  %v3174 = vunpack.c.h.b16 %v2500
  %v3175 = vunpack.c.l.b16 %v2501
  %v3176 = vunpack.c.h.b16 %v2501
  %v3177 = vunpack.c.l.b16 %v2502
  %v3178 = vunpack.c.h.b16 %v2502
  %v3179 = vunpack.c.l.b16 %v2503
  %v3180 = vunpack.c.h.b16 %v2503
  %v3181 = vunpack.c.l.b16 %v2504
  %v3182 = vunpack.c.h.b16 %v2504
  %v3183 = vunpack.c.l.b16 %v2505
  %v3184 = vunpack.c.h.b16 %v2505
  %v3185 = vunpack.c.l.b16 %v2506
  %v3186 = vunpack.c.h.b16 %v2506
  %v3187 = vunpack.c.l.b16 %v2507
  %v3188 = vunpack.c.h.b16 %v2507
  %v3189 = vunpack.c.l.b16 %v2508
  %v3190 = vunpack.c.h.b16 %v2508
  %v3191 = vunpack.c.l.b16 %v2509
  %v3192 = vunpack.c.h.b16 %v2509
  %v3193 = vunpack.c.l.b16 %v2510
  %v3194 = vunpack.c.h.b16 %v2510
  %v3195 = vunpack.c.l.b16 %v2511
  %v3196 = vunpack.c.h.b16 %v2511
  %v3197 = vunpack.c.l.b16 %v2512
  %v3198 = vunpack.c.h.b16 %v2512
  %v3199 = vunpack.c.l.b16 %v2513
  %v3200 = vunpack.c.h.b16 %v2513
  %v3201 = vunpack.c.l.b16 %v2514
  %v3202 = vunpack.c.h.b16 %v2514
  %v3203 = vunpack.c.l.b16 %v2515
  %v3204 = vunpack.c.h.b16 %v2515
  %v3205 = vunpack.c.l.b16 %v2516
  %v3206 = vunpack.c.h.b16 %v2516
  %v3207 = vunpack.c.l.b16 %v2517
  %v3208 = vunpack.c.h.b16 %v2517
  %v3209 = vunpack.c.l.b16 %v2518
  %v3210 = vunpack.c.h.b16 %v2518
  %v3211 = vunpack.c.l.b16 %v2519
  %v3212 = vunpack.c.h.b16 %v2519
  %v3213 = vunpack.c.l.b16 %v2520
  %v3214 = vunpack.c.h.b16 %v2520
  %v3215 = vunpack.c.l.b16 %v2521
  %v3216 = vunpack.c.h.b16 %v2521
  %v3217 = vunpack.c.l.b16 %v2522
  %v3218 = vunpack.c.h.b16 %v2522
  %v3219 = vunpack.c.l.b16 %v2523
  %v3220 = vunpack.c.h.b16 %v2523
  %v3221 = vunpack.c.l.b16 %v2524
  %v3222 = vunpack.c.h.b16 %v2524
  %v3223 = vunpack.c.l.b16 %v2525
  %v3224 = vunpack.c.h.b16 %v2525
  %v3225 = vunpack.c.l.b16 %v2526
  %v3226 = vunpack.c.h.b16 %v2526
  %v3227 = vunpack.c.l.b16 %v2527
  %v3228 = vunpack.c.h.b16 %v2527
  %v3229 = vunpack.c.l.b16 %v2528
  %v3230 = vunpack.c.h.b16 %v2528
  %v3231 = vunpack.c.l.b16 %v2529
  %v3232 = vunpack.c.h.b16 %v2529
  %v3233 = vunpack.c.l.b16 %v2530
  %v3234 = vunpack.c.h.b16 %v2530
  %v3235 = vunpack.c.l.b16 %v2531
  %v3236 = vunpack.c.h.b16 %v2531
  %v3237 = vunpack.c.l.b16 %v2532
  %v3238 = vunpack.c.h.b16 %v2532
  %v3239 = vunpack.c.l.b16 %v2533
  %v3240 = vunpack.c.h.b16 %v2533
  %v3241 = vunpack.c.l.b16 %v2534
  %v3242 = vunpack.c.h.b16 %v2534
  %v3243 = vunpack.c.l.b16 %v2535
  %v3244 = vunpack.c.h.b16 %v2535
  %v3245 = vunpack.c.l.b16 %v2536
  %v3246 = vunpack.c.h.b16 %v2536
  %v3247 = vunpack.c.l.b16 %v2537
  %v3248 = vunpack.c.h.b16 %v2537
  %v3249 = vunpack.c.l.b16 %v2538
  %v3250 = vunpack.c.h.b16 %v2538
  %v3251 = vunpack.c.l.b16 %v2539
  %v3252 = vunpack.c.h.b16 %v2539
  %v3253 = vunpack.c.l.b16 %v2540
  %v3254 = vunpack.c.h.b16 %v2540
  %v3255 = vunpack.c.l.b16 %v2541
  %v3256 = vunpack.c.h.b16 %v2541
  %v3257 = vunpack.c.l.b16 %v2542
  %v3258 = vunpack.c.h.b16 %v2542
  %v3259 = vunpack.c.l.b16 %v2543
  %v3260 = vunpack.c.h.b16 %v2543
  %v3261 = vunpack.c.l.b16 %v2544
  %v3262 = vunpack.c.h.b16 %v2544
  %v3263 = vunpack.c.l.b16 %v2545
  %v3264 = vunpack.c.h.b16 %v2545
  %v3265 = vunpack.c.l.b16 %v2546
  %v3266 = vunpack.c.h.b16 %v2546
  %v3267 = vunpack.c.l.b16 %v2547
  %v3268 = vunpack.c.h.b16 %v2547
  %v3269 = vunpack.c.l.b16 %v2548
  %v3270 = vunpack.c.h.b16 %v2548
  %v3271 = vunpack.c.l.b16 %v2549
  %v3272 = vunpack.c.h.b16 %v2549
  %v3273 = vunpack.c.l.b16 %v2550
  %v3274 = vunpack.c.h.b16 %v2550
  %v3275 = vunpack.c.l.b16 %v2551
  %v3276 = vunpack.c.h.b16 %v2551
  %v3277 = vunpack.c.l.b16 %v2552
  %v3278 = vunpack.c.h.b16 %v2552
  %v3279 = vunpack.c.l.b16 %v2553
  %v3280 = vunpack.c.h.b16 %v2553
  %v3281 = vunpack.c.l.b16 %v2554
  %v3282 = vunpack.c.h.b16 %v2554
  %v3283 = vunpack.c.l.b16 %v2555
  %v3284 = vunpack.c.h.b16 %v2555
  %v3285 = vunpack.c.l.b16 %v2556
  %v3286 = vunpack.c.h.b16 %v2556
  %v3287 = vunpack.c.l.b16 %v2557
  %v3288 = vunpack.c.h.b16 %v2557
  %v3289 = vunpack.c.l.b16 %v2558
  %v3290 = vunpack.c.h.b16 %v2558
  %v3291 = vunpack.c.l.b16 %v2559
  %v3292 = vunpack.c.h.b16 %v2559
  %v3293 = vunpack.c.l.b16 %v2560
  %v3294 = vunpack.c.h.b16 %v2560
  %v3295 = vunpack.c.l.b16 %v2561
  %v3296 = vunpack.c.h.b16 %v2561
  %v3297 = vunpack.c.l.b16 %v2562
  %v3298 = vunpack.c.h.b16 %v2562
  %v3299 = vunpack.c.l.b16 %v2563
  %v3300 = vunpack.c.h.b16 %v2563
  %v3301 = vunpack.c.l.b16 %v2564
  %v3302 = vunpack.c.h.b16 %v2564
  %v3303 = vunpack.c.l.b16 %v2565
  %v3304 = vunpack.c.h.b16 %v2565
  %v3305 = vunpack.c.l.b16 %v2566
  %v3306 = vunpack.c.h.b16 %v2566
  %v3307 = vunpack.c.l.b16 %v2567
  %v3308 = vunpack.c.h.b16 %v2567
  %v3309 = vunpack.c.l.b16 %v2568
  %v3310 = vunpack.c.h.b16 %v2568
  %v3311 = vunpack.c.l.b16 %v2569
  %v3312 = vunpack.c.h.b16 %v2569
  %v3313 = vunpack.c.l.b16 %v2570
  %v3314 = vunpack.c.h.b16 %v2570
  %v3315 = vunpack.c.l.b16 %v2571
  %v3316 = vunpack.c.h.b16 %v2571
  %v3317 = vunpack.c.l.b16 %v2572
  %v3318 = vunpack.c.h.b16 %v2572
  %v3319 = vunpack.c.l.b16 %v2573
  %v3320 = vunpack.c.h.b16 %v2573
  %v3321 = vunpack.c.l.b16 %v2574
  %v3322 = vunpack.c.h.b16 %v2574
  %v3323 = vunpack.c.l.b16 %v2575
  %v3324 = vunpack.c.h.b16 %v2575
  %v3325 = vunpack.c.l.b16 %v2576
  %v3326 = vunpack.c.h.b16 %v2576
  %v3327 = vunpack.c.l.b16 %v2577
  %v3328 = vunpack.c.h.b16 %v2577
  %v3329 = vunpack.c.l.b16 %v2578
  %v3330 = vunpack.c.h.b16 %v2578
  %v3331 = vunpack.c.l.b16 %v2579
  %v3332 = vunpack.c.h.b16 %v2579
  %v3333 = vunpack.c.l.b16 %v2580
  %v3334 = vunpack.c.h.b16 %v2580
  %v3335 = vunpack.c.l.b16 %v2581
  %v3336 = vunpack.c.h.b16 %v2581
  %v3337 = vunpack.c.l.b16 %v2582
  %v3338 = vunpack.c.h.b16 %v2582
  %v3339 = vunpack.c.l.b16 %v2583
  %v3340 = vunpack.c.h.b16 %v2583
  %v3341 = vunpack.c.l.b16 %v2584
  %v3342 = vunpack.c.h.b16 %v2584
  %v3343 = vunpack.c.l.b16 %v2585
  %v3344 = vunpack.c.h.b16 %v2585
  %v3345 = vunpack.c.l.b16 %v2586
  %v3346 = vunpack.c.h.b16 %v2586
  %v3347 = vunpack.c.l.b16 %v2587
  %v3348 = vunpack.c.h.b16 %v2587
  %v3349 = vunpack.c.l.b16 %v2588
  %v3350 = vunpack.c.h.b16 %v2588
  %v3351 = vunpack.c.l.b16 %v2589
  %v3352 = vunpack.c.h.b16 %v2589
  %v3353 = vunpack.c.l.b16 %v2590
  %v3354 = vunpack.c.h.b16 %v2590
  %v3355 = vunpack.c.l.b16 %v2591
  %v3356 = vunpack.c.h.b16 %v2591
  %v3357 = vunpack.c.l.b16 %v2592
  %v3358 = vunpack.c.h.b16 %v2592
  %v3359 = vunpack.c.l.b16 %v2593
  %v3360 = vunpack.c.h.b16 %v2593
  %v3361 = vunpack.c.l.b16 %v2594
  %v3362 = vunpack.c.h.b16 %v2594
  %v3363 = vunpack.c.l.b16 %v2595
  %v3364 = vunpack.c.h.b16 %v2595
  %v3365 = vunpack.c.l.b16 %v2596
  %v3366 = vunpack.c.h.b16 %v2596
  %v3367 = vunpack.c.l.b16 %v2597
  %v3368 = vunpack.c.h.b16 %v2597
  %v3369 = vunpack.c.l.b16 %v2598
  %v3370 = vunpack.c.h.b16 %v2598
  %v3371 = vunpack.c.l.b16 %v2599
  %v3372 = vunpack.c.h.b16 %v2599
  %v3373 = vunpack.c.l.b16 %v2600
  %v3374 = vunpack.c.h.b16 %v2600
  %v3375 = vunpack.c.l.b16 %v2601
  %v3376 = vunpack.c.h.b16 %v2601
  %v3377 = vunpack.c.l.b16 %v2602
  %v3378 = vunpack.c.h.b16 %v2602
  %v3379 = vunpack.c.l.b16 %v2603
  %v3380 = vunpack.c.h.b16 %v2603
  %v3381 = vunpack.c.l.b16 %v2604
  %v3382 = vunpack.c.h.b16 %v2604
  %v3383 = vunpack.c.l.b16 %v2605
  %v3384 = vunpack.c.h.b16 %v2605
  %v3385 = vunpack.c.l.b16 %v2606
  %v3386 = vunpack.c.h.b16 %v2606
  %v3387 = vunpack.c.l.b16 %v2607
  %v3388 = vunpack.c.h.b16 %v2607
  %v3389 = vunpack.c.l.b16 %v2608
  %v3390 = vunpack.c.h.b16 %v2608
  %v3391 = vunpack.c.l.b16 %v2609
  %v3392 = vunpack.c.h.b16 %v2609
  %v3393 = vunpack.c.l.b16 %v2610
  %v3394 = vunpack.c.h.b16 %v2610
  %v3395 = vunpack.c.l.b16 %v2611
  %v3396 = vunpack.c.h.b16 %v2611
  %v3397 = vunpack.c.l.b16 %v2612
  %v3398 = vunpack.c.h.b16 %v2612
  %v3399 = vunpack.c.l.b16 %v2613
  %v3400 = vunpack.c.h.b16 %v2613
  %v3401 = vunpack.c.l.b16 %v2614
  %v3402 = vunpack.c.h.b16 %v2614
  %v3403 = vunpack.c.l.b16 %v2615
  %v3404 = vunpack.c.h.b16 %v2615
  %v3405 = vunpack.c.l.b16 %v2616
  %v3406 = vunpack.c.h.b16 %v2616
  %v3407 = vpack.c.b16 %v2899, %v2895
  %v3408 = vpack.c.b16 %v2900, %v2896
  %v3409 = vpack.c.b16 %v2901, %v2897
  %v3410 = vpack.c.b16 %v2902, %v2898
  %v3411 = vpack.c.b16 %v2907, %v2903
  %v3412 = vpack.c.b16 %v2908, %v2904
  %v3413 = vpack.c.b16 %v2909, %v2905
  %v3414 = vpack.c.b16 %v2910, %v2906
  %v3415 = vpack.c.b16 %v2915, %v2911
  %v3416 = vpack.c.b16 %v2916, %v2912
  %v3417 = vpack.c.b16 %v2917, %v2913
  %v3418 = vpack.c.b16 %v2918, %v2914
  %v3419 = vpack.c.b16 %v2923, %v2919
  %v3420 = vpack.c.b16 %v2924, %v2920
  %v3421 = vpack.c.b16 %v2925, %v2921
  %v3422 = vpack.c.b16 %v2926, %v2922
  %v3423 = vpack.c.b16 %v2931, %v2927
  %v3424 = vpack.c.b16 %v2932, %v2928
  %v3425 = vpack.c.b16 %v2933, %v2929
  %v3426 = vpack.c.b16 %v2934, %v2930
  %v3427 = vpack.c.b16 %v2939, %v2935
  %v3428 = vpack.c.b16 %v2940, %v2936
  %v3429 = vpack.c.b16 %v2941, %v2937
  %v3430 = vpack.c.b16 %v2942, %v2938
  %v3431 = vpack.c.b16 %v2947, %v2943
  %v3432 = vpack.c.b16 %v2948, %v2944
  %v3433 = vpack.c.b16 %v2949, %v2945
  %v3434 = vpack.c.b16 %v2950, %v2946
  %v3435 = vpack.c.b16 %v2955, %v2951
  %v3436 = vpack.c.b16 %v2956, %v2952
  %v3437 = vpack.c.b16 %v2957, %v2953
  %v3438 = vpack.c.b16 %v2958, %v2954
  %v3439 = vpack.c.b16 %v2963, %v2959
  %v3440 = vpack.c.b16 %v2964, %v2960
  %v3441 = vpack.c.b16 %v2965, %v2961
  %v3442 = vpack.c.b16 %v2966, %v2962
  %v3443 = vpack.c.b16 %v2971, %v2967
  %v3444 = vpack.c.b16 %v2972, %v2968
  %v3445 = vpack.c.b16 %v2973, %v2969
  %v3446 = vpack.c.b16 %v2974, %v2970
  %v3447 = vpack.c.b16 %v2979, %v2975
  %v3448 = vpack.c.b16 %v2980, %v2976
  %v3449 = vpack.c.b16 %v2981, %v2977
  %v3450 = vpack.c.b16 %v2982, %v2978
  %v3451 = vpack.c.b16 %v2987, %v2983
  %v3452 = vpack.c.b16 %v2988, %v2984
  %v3453 = vpack.c.b16 %v2989, %v2985
  %v3454 = vpack.c.b16 %v2990, %v2986
  %v3455 = vpack.c.b16 %v2995, %v2991
  %v3456 = vpack.c.b16 %v2996, %v2992
  %v3457 = vpack.c.b16 %v2997, %v2993
  %v3458 = vpack.c.b16 %v2998, %v2994
  %v3459 = vpack.c.b16 %v3003, %v2999
  %v3460 = vpack.c.b16 %v3004, %v3000
  %v3461 = vpack.c.b16 %v3005, %v3001
  %v3462 = vpack.c.b16 %v3006, %v3002
  %v3463 = vpack.c.b16 %v3011, %v3007
  %v3464 = vpack.c.b16 %v3012, %v3008
  %v3465 = vpack.c.b16 %v3013, %v3009
  %v3466 = vpack.c.b16 %v3014, %v3010
  %v3467 = vpack.c.b16 %v3019, %v3015
  %v3468 = vpack.c.b16 %v3020, %v3016
  %v3469 = vpack.c.b16 %v3021, %v3017
  %v3470 = vpack.c.b16 %v3022, %v3018
  %v3471 = vpack.c.b16 %v3027, %v3023
  %v3472 = vpack.c.b16 %v3028, %v3024
  %v3473 = vpack.c.b16 %v3029, %v3025
  %v3474 = vpack.c.b16 %v3030, %v3026
  %v3475 = vpack.c.b16 %v3035, %v3031
  %v3476 = vpack.c.b16 %v3036, %v3032
  %v3477 = vpack.c.b16 %v3037, %v3033
  %v3478 = vpack.c.b16 %v3038, %v3034
  %v3479 = vpack.c.b16 %v3043, %v3039
  %v3480 = vpack.c.b16 %v3044, %v3040
  %v3481 = vpack.c.b16 %v3045, %v3041
  %v3482 = vpack.c.b16 %v3046, %v3042
  %v3483 = vpack.c.b16 %v3051, %v3047
  %v3484 = vpack.c.b16 %v3052, %v3048
  %v3485 = vpack.c.b16 %v3053, %v3049
  %v3486 = vpack.c.b16 %v3054, %v3050
  %v3487 = vpack.c.b16 %v3059, %v3055
  %v3488 = vpack.c.b16 %v3060, %v3056
  %v3489 = vpack.c.b16 %v3061, %v3057
  %v3490 = vpack.c.b16 %v3062, %v3058
  %v3491 = vpack.c.b16 %v3067, %v3063
  %v3492 = vpack.c.b16 %v3068, %v3064
  %v3493 = vpack.c.b16 %v3069, %v3065
  %v3494 = vpack.c.b16 %v3070, %v3066
  %v3495 = vpack.c.b16 %v3075, %v3071
  %v3496 = vpack.c.b16 %v3076, %v3072
  %v3497 = vpack.c.b16 %v3077, %v3073
  %v3498 = vpack.c.b16 %v3078, %v3074
  %v3499 = vpack.c.b16 %v3083, %v3079
  %v3500 = vpack.c.b16 %v3084, %v3080
  %v3501 = vpack.c.b16 %v3085, %v3081
  %v3502 = vpack.c.b16 %v3086, %v3082
  %v3503 = vpack.c.b16 %v3091, %v3087
  %v3504 = vpack.c.b16 %v3092, %v3088
  %v3505 = vpack.c.b16 %v3093, %v3089
  %v3506 = vpack.c.b16 %v3094, %v3090
  %v3507 = vpack.c.b16 %v3099, %v3095
  %v3508 = vpack.c.b16 %v3100, %v3096
  %v3509 = vpack.c.b16 %v3101, %v3097
  %v3510 = vpack.c.b16 %v3102, %v3098
  %v3511 = vpack.c.b16 %v3107, %v3103
  %v3512 = vpack.c.b16 %v3108, %v3104
  %v3513 = vpack.c.b16 %v3109, %v3105
  %v3514 = vpack.c.b16 %v3110, %v3106
  %v3515 = vpack.c.b16 %v3115, %v3111
  %v3516 = vpack.c.b16 %v3116, %v3112
  %v3517 = vpack.c.b16 %v3117, %v3113
  %v3518 = vpack.c.b16 %v3118, %v3114
  %v3519 = vpack.c.b16 %v3123, %v3119
  %v3520 = vpack.c.b16 %v3124, %v3120
  %v3521 = vpack.c.b16 %v3125, %v3121
  %v3522 = vpack.c.b16 %v3126, %v3122
  %v3523 = vpack.c.b16 %v3131, %v3127
  %v3524 = vpack.c.b16 %v3132, %v3128
  %v3525 = vpack.c.b16 %v3133, %v3129
  %v3526 = vpack.c.b16 %v3134, %v3130
  %v3527 = vpack.c.b16 %v3139, %v3135
  %v3528 = vpack.c.b16 %v3140, %v3136
  %v3529 = vpack.c.b16 %v3141, %v3137
  %v3530 = vpack.c.b16 %v3142, %v3138
  %v3531 = vpack.c.b16 %v3147, %v3143
  %v3532 = vpack.c.b16 %v3148, %v3144
  %v3533 = vpack.c.b16 %v3149, %v3145
  %v3534 = vpack.c.b16 %v3150, %v3146
  %v3535 = vpack.c.b16 %v3155, %v3151
  %v3536 = vpack.c.b16 %v3156, %v3152
  %v3537 = vpack.c.b16 %v3157, %v3153
  %v3538 = vpack.c.b16 %v3158, %v3154
  %v3539 = vpack.c.b16 %v3163, %v3159
  %v3540 = vpack.c.b16 %v3164, %v3160
  %v3541 = vpack.c.b16 %v3165, %v3161
  %v3542 = vpack.c.b16 %v3166, %v3162
  %v3543 = vpack.c.b16 %v3171, %v3167
  %v3544 = vpack.c.b16 %v3172, %v3168
  %v3545 = vpack.c.b16 %v3173, %v3169
  %v3546 = vpack.c.b16 %v3174, %v3170
  %v3547 = vpack.c.b16 %v3179, %v3175
  %v3548 = vpack.c.b16 %v3180, %v3176
  %v3549 = vpack.c.b16 %v3181, %v3177
  %v3550 = vpack.c.b16 %v3182, %v3178
  %v3551 = vpack.c.b16 %v3187, %v3183
  %v3552 = vpack.c.b16 %v3188, %v3184
  %v3553 = vpack.c.b16 %v3189, %v3185
  %v3554 = vpack.c.b16 %v3190, %v3186
  %v3555 = vpack.c.b16 %v3195, %v3191
  %v3556 = vpack.c.b16 %v3196, %v3192
  %v3557 = vpack.c.b16 %v3197, %v3193
  %v3558 = vpack.c.b16 %v3198, %v3194
  %v3559 = vpack.c.b16 %v3203, %v3199
  %v3560 = vpack.c.b16 %v3204, %v3200
  %v3561 = vpack.c.b16 %v3205, %v3201
  %v3562 = vpack.c.b16 %v3206, %v3202
  %v3563 = vpack.c.b16 %v3211, %v3207
  %v3564 = vpack.c.b16 %v3212, %v3208
  %v3565 = vpack.c.b16 %v3213, %v3209
  %v3566 = vpack.c.b16 %v3214, %v3210
  %v3567 = vpack.c.b16 %v3219, %v3215
  %v3568 = vpack.c.b16 %v3220, %v3216
  %v3569 = vpack.c.b16 %v3221, %v3217
  %v3570 = vpack.c.b16 %v3222, %v3218
  %v3571 = vpack.c.b16 %v3227, %v3223
  %v3572 = vpack.c.b16 %v3228, %v3224
  %v3573 = vpack.c.b16 %v3229, %v3225
  %v3574 = vpack.c.b16 %v3230, %v3226
  %v3575 = vpack.c.b16 %v3235, %v3231
  %v3576 = vpack.c.b16 %v3236, %v3232
  %v3577 = vpack.c.b16 %v3237, %v3233
  %v3578 = vpack.c.b16 %v3238, %v3234
  %v3579 = vpack.c.b16 %v3243, %v3239
  %v3580 = vpack.c.b16 %v3244, %v3240
  %v3581 = vpack.c.b16 %v3245, %v3241
  %v3582 = vpack.c.b16 %v3246, %v3242
  %v3583 = vpack.c.b16 %v3251, %v3247
  %v3584 = vpack.c.b16 %v3252, %v3248
  %v3585 = vpack.c.b16 %v3253, %v3249
  %v3586 = vpack.c.b16 %v3254, %v3250
  %v3587 = vpack.c.b16 %v3259, %v3255
  %v3588 = vpack.c.b16 %v3260, %v3256
  %v3589 = vpack.c.b16 %v3261, %v3257
  %v3590 = vpack.c.b16 %v3262, %v3258
  %v3591 = vpack.c.b16 %v3267, %v3263
  %v3592 = vpack.c.b16 %v3268, %v3264
  %v3593 = vpack.c.b16 %v3269, %v3265
  %v3594 = vpack.c.b16 %v3270, %v3266
  %v3595 = vpack.c.b16 %v3275, %v3271
  %v3596 = vpack.c.b16 %v3276, %v3272
  %v3597 = vpack.c.b16 %v3277, %v3273
  %v3598 = vpack.c.b16 %v3278, %v3274
  %v3599 = vpack.c.b16 %v3283, %v3279
  %v3600 = vpack.c.b16 %v3284, %v3280
  %v3601 = vpack.c.b16 %v3285, %v3281
  %v3602 = vpack.c.b16 %v3286, %v3282
  %v3603 = vpack.c.b16 %v3291, %v3287
  %v3604 = vpack.c.b16 %v3292, %v3288
  %v3605 = vpack.c.b16 %v3293, %v3289
  %v3606 = vpack.c.b16 %v3294, %v3290
  %v3607 = vpack.c.b16 %v3299, %v3295
  %v3608 = vpack.c.b16 %v3300, %v3296
  %v3609 = vpack.c.b16 %v3301, %v3297
  %v3610 = vpack.c.b16 %v3302, %v3298
  %v3611 = vpack.c.b16 %v3307, %v3303
  %v3612 = vpack.c.b16 %v3308, %v3304
  %v3613 = vpack.c.b16 %v3309, %v3305
  %v3614 = vpack.c.b16 %v3310, %v3306
  %v3615 = vpack.c.b16 %v3315, %v3311
  %v3616 = vpack.c.b16 %v3316, %v3312
  %v3617 = vpack.c.b16 %v3317, %v3313
  %v3618 = vpack.c.b16 %v3318, %v3314
  %v3619 = vpack.c.b16 %v3323, %v3319
  %v3620 = vpack.c.b16 %v3324, %v3320
  %v3621 = vpack.c.b16 %v3325, %v3321
  %v3622 = vpack.c.b16 %v3326, %v3322
  %v3623 = vpack.c.b16 %v3331, %v3327
  %v3624 = vpack.c.b16 %v3332, %v3328
  %v3625 = vpack.c.b16 %v3333, %v3329
  %v3626 = vpack.c.b16 %v3334, %v3330
  %v3627 = vpack.c.b16 %v3339, %v3335
  %v3628 = vpack.c.b16 %v3340, %v3336
  %v3629 = vpack.c.b16 %v3341, %v3337
  %v3630 = vpack.c.b16 %v3342, %v3338
  %v3631 = vpack.c.b16 %v3347, %v3343
  %v3632 = vpack.c.b16 %v3348, %v3344
  %v3633 = vpack.c.b16 %v3349, %v3345
  %v3634 = vpack.c.b16 %v3350, %v3346
  %v3635 = vpack.c.b16 %v3355, %v3351
  %v3636 = vpack.c.b16 %v3356, %v3352
  %v3637 = vpack.c.b16 %v3357, %v3353
  %v3638 = vpack.c.b16 %v3358, %v3354
  %v3639 = vpack.c.b16 %v3363, %v3359
  %v3640 = vpack.c.b16 %v3364, %v3360
  %v3641 = vpack.c.b16 %v3365, %v3361
  %v3642 = vpack.c.b16 %v3366, %v3362
  %v3643 = vpack.c.b16 %v3371, %v3367
  %v3644 = vpack.c.b16 %v3372, %v3368
  %v3645 = vpack.c.b16 %v3373, %v3369
  %v3646 = vpack.c.b16 %v3374, %v3370
  %v3647 = vpack.c.b16 %v3379, %v3375
  %v3648 = vpack.c.b16 %v3380, %v3376
  %v3649 = vpack.c.b16 %v3381, %v3377
  %v3650 = vpack.c.b16 %v3382, %v3378
  %v3651 = vpack.c.b16 %v3387, %v3383
  %v3652 = vpack.c.b16 %v3388, %v3384
  %v3653 = vpack.c.b16 %v3389, %v3385
  %v3654 = vpack.c.b16 %v3390, %v3386
  %v3655 = vpack.c.b16 %v3395, %v3391
  %v3656 = vpack.c.b16 %v3396, %v3392
  %v3657 = vpack.c.b16 %v3397, %v3393
  %v3658 = vpack.c.b16 %v3398, %v3394
  %v3659 = vpack.c.b16 %v3403, %v3399
  %v3660 = vpack.c.b16 %v3404, %v3400
  %v3661 = vpack.c.b16 %v3405, %v3401
  %v3662 = vpack.c.b16 %v3406, %v3402
  %3919 = vmatprep.subr.bf16.mxu0 %v3408
  %3920 = vmatpush1.bf16.msra.mxu0 %v3407
  %3921 = vmatprep.subr.bf16.mxu0 %v3412
  %3922 = vmatpush1.bf16.msra.mxu0 %v3411
  %3923 = vmatprep.subr.bf16.mxu0 %v3416
  %3924 = vmatpush1.bf16.msra.mxu0 %v3415
  %3925 = vmatprep.subr.bf16.mxu0 %v3420
  %3926 = vmatpush1.bf16.msra.mxu0 %v3419
  %3927 = vmatprep.subr.bf16.mxu0 %v3424
  %3928 = vmatpush1.bf16.msra.mxu0 %v3423
  %3929 = vmatprep.subr.bf16.mxu0 %v3428
  %3930 = vmatpush1.bf16.msra.mxu0 %v3427
  %3931 = vmatprep.subr.bf16.mxu0 %v3432
  %3932 = vmatpush1.bf16.msra.mxu0 %v3431
  %3933 = vmatprep.subr.bf16.mxu0 %v3436
  %3934 = vmatpush1.bf16.msra.mxu0 %v3435
  %3935 = vmatprep.subr.bf16.mxu0 %v3440
  %3936 = vmatpush1.bf16.msra.mxu0 %v3439
  %3937 = vmatprep.subr.bf16.mxu0 %v3444
  %3938 = vmatpush1.bf16.msra.mxu0 %v3443
  %3939 = vmatprep.subr.bf16.mxu0 %v3448
  %3940 = vmatpush1.bf16.msra.mxu0 %v3447
  %3941 = vmatprep.subr.bf16.mxu0 %v3452
  %3942 = vmatpush1.bf16.msra.mxu0 %v3451
  %3943 = vmatprep.subr.bf16.mxu0 %v3456
  %3944 = vmatpush1.bf16.msra.mxu0 %v3455
  %3945 = vmatprep.subr.bf16.mxu0 %v3460
  %3946 = vmatpush1.bf16.msra.mxu0 %v3459
  %3947 = vmatprep.subr.bf16.mxu0 %v3464
  %3948 = vmatpush1.bf16.msra.mxu0 %v3463
  %3949 = vmatprep.subr.bf16.mxu0 %v3468
  %3950 = vmatpush1.bf16.msra.mxu0 %v3467
  %3951 = vmatprep.mubr.bf16.mxu0 %v2354
  %3952 = vmatmul.mubr.bf16.gmra.mrb[0].mxu0 %v2353
  %v3953 = vpop.f32.mrb[0].mxu0
  %v3954 = vadd.f32 %v2622, %v3953
  %v3955 = vpop.f32.mrb[0].mxu0
  %v3956 = vadd.f32 %v2626, %v3955
  %v3957 = vpop.f32.mrb[0].mxu0
  %v3958 = vpop.f32.mrb[0].mxu0
  %3959 = vdwg.mxu0
  %3960 = vmatprep.subr.bf16.mxu0 %v3472
  %3961 = vmatpush1.bf16.msra.mxu0 %v3471
  %3962 = vmatprep.subr.bf16.mxu0 %v3476
  %3963 = vmatpush1.bf16.msra.mxu0 %v3475
  %3964 = vmatprep.subr.bf16.mxu0 %v3480
  %3965 = vmatpush1.bf16.msra.mxu0 %v3479
  %3966 = vmatprep.subr.bf16.mxu0 %v3484
  %3967 = vmatpush1.bf16.msra.mxu0 %v3483
  %3968 = vmatprep.subr.bf16.mxu0 %v3488
  %3969 = vmatpush1.bf16.msra.mxu0 %v3487
  %3970 = vmatprep.subr.bf16.mxu0 %v3492
  %3971 = vmatpush1.bf16.msra.mxu0 %v3491
  %3972 = vmatprep.subr.bf16.mxu0 %v3496
  %3973 = vmatpush1.bf16.msra.mxu0 %v3495
  %3974 = vmatprep.subr.bf16.mxu0 %v3500
  %3975 = vmatpush1.bf16.msra.mxu0 %v3499
  %3976 = vmatprep.subr.bf16.mxu0 %v3504
  %3977 = vmatpush1.bf16.msra.mxu0 %v3503
  %3978 = vmatprep.subr.bf16.mxu0 %v3508
  %3979 = vmatpush1.bf16.msra.mxu0 %v3507
  %3980 = vmatprep.subr.bf16.mxu0 %v3512
  %3981 = vmatpush1.bf16.msra.mxu0 %v3511
  %3982 = vmatprep.subr.bf16.mxu0 %v3516
  %3983 = vmatpush1.bf16.msra.mxu0 %v3515
  %3984 = vmatprep.subr.bf16.mxu0 %v3520
  %3985 = vmatpush1.bf16.msra.mxu0 %v3519
  %3986 = vmatprep.subr.bf16.mxu0 %v3524
  %3987 = vmatpush1.bf16.msra.mxu0 %v3523
  %3988 = vmatprep.subr.bf16.mxu0 %v3528
  %3989 = vmatpush1.bf16.msra.mxu0 %v3527
  %3990 = vmatprep.subr.bf16.mxu0 %v3532
  %3991 = vmatpush1.bf16.msra.mxu0 %v3531
  %3992 = vmatprep.mubr.bf16.mxu0 %v2356
  %3993 = vmatmul.mubr.bf16.gmra.mrb[0].mxu0 %v2355
  %v3994 = vpop.f32.mrb[0].mxu0
  %v3995 = vadd.f32 %v3954, %v3994
  %v3996 = vpop.f32.mrb[0].mxu0
  %v3997 = vadd.f32 %v3956, %v3996
  %v3998 = vpop.f32.mrb[0].mxu0
  %v3999 = vpop.f32.mrb[0].mxu0
  %4000 = vdwg.mxu0
  %4001 = vmatprep.subr.bf16.mxu0 %v3536
  %4002 = vmatpush1.bf16.msra.mxu0 %v3535
  %4003 = vmatprep.subr.bf16.mxu0 %v3540
  %4004 = vmatpush1.bf16.msra.mxu0 %v3539
  %4005 = vmatprep.subr.bf16.mxu0 %v3544
  %4006 = vmatpush1.bf16.msra.mxu0 %v3543
  %4007 = vmatprep.subr.bf16.mxu0 %v3548
  %4008 = vmatpush1.bf16.msra.mxu0 %v3547
  %4009 = vmatprep.subr.bf16.mxu0 %v3552
  %4010 = vmatpush1.bf16.msra.mxu0 %v3551
  %4011 = vmatprep.subr.bf16.mxu0 %v3556
  %4012 = vmatpush1.bf16.msra.mxu0 %v3555
  %4013 = vmatprep.subr.bf16.mxu0 %v3560
  %4014 = vmatpush1.bf16.msra.mxu0 %v3559
  %4015 = vmatprep.subr.bf16.mxu0 %v3564
  %4016 = vmatpush1.bf16.msra.mxu0 %v3563
  %4017 = vmatprep.subr.bf16.mxu0 %v3568
  %4018 = vmatpush1.bf16.msra.mxu0 %v3567
  %4019 = vmatprep.subr.bf16.mxu0 %v3572
  %4020 = vmatpush1.bf16.msra.mxu0 %v3571
  %4021 = vmatprep.subr.bf16.mxu0 %v3576
  %4022 = vmatpush1.bf16.msra.mxu0 %v3575
  %4023 = vmatprep.subr.bf16.mxu0 %v3580
  %4024 = vmatpush1.bf16.msra.mxu0 %v3579
  %4025 = vmatprep.subr.bf16.mxu0 %v3584
  %4026 = vmatpush1.bf16.msra.mxu0 %v3583
  %4027 = vmatprep.subr.bf16.mxu0 %v3588
  %4028 = vmatpush1.bf16.msra.mxu0 %v3587
  %4029 = vmatprep.subr.bf16.mxu0 %v3592
  %4030 = vmatpush1.bf16.msra.mxu0 %v3591
  %4031 = vmatprep.subr.bf16.mxu0 %v3596
  %4032 = vmatpush1.bf16.msra.mxu0 %v3595
  %4033 = vmatprep.mubr.bf16.mxu0 %v2358
  %4034 = vmatmul.mubr.bf16.gmra.mrb[0].mxu0 %v2357
  %v4035 = vpop.f32.mrb[0].mxu0
  %v4036 = vadd.f32 %v3995, %v4035
  %v4037 = vpop.f32.mrb[0].mxu0
  %v4038 = vadd.f32 %v3997, %v4037
  %v4039 = vpop.f32.mrb[0].mxu0
  %v4040 = vpop.f32.mrb[0].mxu0
  %4041 = vdwg.mxu0
  %4042 = vmatprep.subr.bf16.mxu0 %v3600
  %4043 = vmatpush1.bf16.msra.mxu0 %v3599
  %4044 = vmatprep.subr.bf16.mxu0 %v3604
  %4045 = vmatpush1.bf16.msra.mxu0 %v3603
  %4046 = vmatprep.subr.bf16.mxu0 %v3608
  %4047 = vmatpush1.bf16.msra.mxu0 %v3607
  %4048 = vmatprep.subr.bf16.mxu0 %v3612
  %4049 = vmatpush1.bf16.msra.mxu0 %v3611
  %4050 = vmatprep.subr.bf16.mxu0 %v3616
  %4051 = vmatpush1.bf16.msra.mxu0 %v3615
  %4052 = vmatprep.subr.bf16.mxu0 %v3620
  %4053 = vmatpush1.bf16.msra.mxu0 %v3619
  %4054 = vmatprep.subr.bf16.mxu0 %v3624
  %4055 = vmatpush1.bf16.msra.mxu0 %v3623
  %4056 = vmatprep.subr.bf16.mxu0 %v3628
  %4057 = vmatpush1.bf16.msra.mxu0 %v3627
  %4058 = vmatprep.subr.bf16.mxu0 %v3632
  %4059 = vmatpush1.bf16.msra.mxu0 %v3631
  %4060 = vmatprep.subr.bf16.mxu0 %v3636
  %4061 = vmatpush1.bf16.msra.mxu0 %v3635
  %4062 = vmatprep.subr.bf16.mxu0 %v3640
  %4063 = vmatpush1.bf16.msra.mxu0 %v3639
  %4064 = vmatprep.subr.bf16.mxu0 %v3644
  %4065 = vmatpush1.bf16.msra.mxu0 %v3643
  %4066 = vmatprep.subr.bf16.mxu0 %v3648
  %4067 = vmatpush1.bf16.msra.mxu0 %v3647
  %4068 = vmatprep.subr.bf16.mxu0 %v3652
  %4069 = vmatpush1.bf16.msra.mxu0 %v3651
  %4070 = vmatprep.subr.bf16.mxu0 %v3656
  %4071 = vmatpush1.bf16.msra.mxu0 %v3655
  %4072 = vmatprep.subr.bf16.mxu0 %v3660
  %4073 = vmatpush1.bf16.msra.mxu0 %v3659
  %4074 = vmatprep.mubr.bf16.mxu0 %v2360
  %4075 = vmatmul.mubr.bf16.gmra.mrb[0].mxu0 %v2359
  %v4076 = vpop.f32.mrb[0].mxu0
  %v4077 = vadd.f32 %v4036, %v4076
  %v4078 = vpop.f32.mrb[0].mxu0
  %v4079 = vadd.f32 %v4038, %v4078
  %v4080 = vpop.f32.mrb[0].mxu0
  %v4081 = vpop.f32.mrb[0].mxu0
  %4082 = vdwg.mxu0
  %4083 = vmatprep.subr.bf16.mxu0 %v3410
  %4084 = vmatpush1.bf16.msra.mxu0 %v3409
  %4085 = vmatprep.subr.bf16.mxu0 %v3414
  %4086 = vmatpush1.bf16.msra.mxu0 %v3413
  %4087 = vmatprep.subr.bf16.mxu0 %v3418
  %4088 = vmatpush1.bf16.msra.mxu0 %v3417
  %4089 = vmatprep.subr.bf16.mxu0 %v3422
  %4090 = vmatpush1.bf16.msra.mxu0 %v3421
  %4091 = vmatprep.subr.bf16.mxu0 %v3426
  %4092 = vmatpush1.bf16.msra.mxu0 %v3425
  %4093 = vmatprep.subr.bf16.mxu0 %v3430
  %4094 = vmatpush1.bf16.msra.mxu0 %v3429
  %4095 = vmatprep.subr.bf16.mxu0 %v3434
  %4096 = vmatpush1.bf16.msra.mxu0 %v3433
  %4097 = vmatprep.subr.bf16.mxu0 %v3438
  %4098 = vmatpush1.bf16.msra.mxu0 %v3437
  %4099 = vmatprep.subr.bf16.mxu0 %v3442
  %4100 = vmatpush1.bf16.msra.mxu0 %v3441
  %4101 = vmatprep.subr.bf16.mxu0 %v3446
  %4102 = vmatpush1.bf16.msra.mxu0 %v3445
  %4103 = vmatprep.subr.bf16.mxu0 %v3450
  %4104 = vmatpush1.bf16.msra.mxu0 %v3449
  %4105 = vmatprep.subr.bf16.mxu0 %v3454
  %4106 = vmatpush1.bf16.msra.mxu0 %v3453
  %4107 = vmatprep.subr.bf16.mxu0 %v3458
  %4108 = vmatpush1.bf16.msra.mxu0 %v3457
  %4109 = vmatprep.subr.bf16.mxu0 %v3462
  %4110 = vmatpush1.bf16.msra.mxu0 %v3461
  %4111 = vmatprep.subr.bf16.mxu0 %v3466
  %4112 = vmatpush1.bf16.msra.mxu0 %v3465
  %4113 = vmatprep.subr.bf16.mxu0 %v3470
  %4114 = vmatpush1.bf16.msra.mxu0 %v3469
  %4115 = vmatprep.mubr.bf16.mxu0 %v2354
  %4116 = vmatmul.mubr.bf16.gmra.mrb[0].mxu0 %v2353
  %v4117 = vpop.f32.mrb[0].mxu0
  %v4118 = vadd.f32 %v2630, %v4117
  %v4119 = vpop.f32.mrb[0].mxu0
  %v4120 = vadd.f32 %v2634, %v4119
  %v4121 = vpop.f32.mrb[0].mxu0
  %v4122 = vpop.f32.mrb[0].mxu0
  %4123 = vdwg.mxu0
  %4124 = vmatprep.subr.bf16.mxu0 %v3474
  %4125 = vmatpush1.bf16.msra.mxu0 %v3473
  %4126 = vmatprep.subr.bf16.mxu0 %v3478
  %4127 = vmatpush1.bf16.msra.mxu0 %v3477
  %4128 = vmatprep.subr.bf16.mxu0 %v3482
  %4129 = vmatpush1.bf16.msra.mxu0 %v3481
  %4130 = vmatprep.subr.bf16.mxu0 %v3486
  %4131 = vmatpush1.bf16.msra.mxu0 %v3485
  %4132 = vmatprep.subr.bf16.mxu0 %v3490
  %4133 = vmatpush1.bf16.msra.mxu0 %v3489
  %4134 = vmatprep.subr.bf16.mxu0 %v3494
  %4135 = vmatpush1.bf16.msra.mxu0 %v3493
  %4136 = vmatprep.subr.bf16.mxu0 %v3498
  %4137 = vmatpush1.bf16.msra.mxu0 %v3497
  %4138 = vmatprep.subr.bf16.mxu0 %v3502
  %4139 = vmatpush1.bf16.msra.mxu0 %v3501
  %4140 = vmatprep.subr.bf16.mxu0 %v3506
  %4141 = vmatpush1.bf16.msra.mxu0 %v3505
  %4142 = vmatprep.subr.bf16.mxu0 %v3510
  %4143 = vmatpush1.bf16.msra.mxu0 %v3509
  %4144 = vmatprep.subr.bf16.mxu0 %v3514
  %4145 = vmatpush1.bf16.msra.mxu0 %v3513
  %4146 = vmatprep.subr.bf16.mxu0 %v3518
  %4147 = vmatpush1.bf16.msra.mxu0 %v3517
  %4148 = vmatprep.subr.bf16.mxu0 %v3522
  %4149 = vmatpush1.bf16.msra.mxu0 %v3521
  %4150 = vmatprep.subr.bf16.mxu0 %v3526
  %4151 = vmatpush1.bf16.msra.mxu0 %v3525
  %4152 = vmatprep.subr.bf16.mxu0 %v3530
  %4153 = vmatpush1.bf16.msra.mxu0 %v3529
  %4154 = vmatprep.subr.bf16.mxu0 %v3534
  %4155 = vmatpush1.bf16.msra.mxu0 %v3533
  %4156 = vmatprep.mubr.bf16.mxu0 %v2356
  %4157 = vmatmul.mubr.bf16.gmra.mrb[0].mxu0 %v2355
  %v4158 = vpop.f32.mrb[0].mxu0
  %v4159 = vadd.f32 %v4118, %v4158
  %v4160 = vpop.f32.mrb[0].mxu0
  %v4161 = vadd.f32 %v4120, %v4160
  %v4162 = vpop.f32.mrb[0].mxu0
  %v4163 = vpop.f32.mrb[0].mxu0
  %4164 = vdwg.mxu0
  %4165 = vmatprep.subr.bf16.mxu0 %v3538
  %4166 = vmatpush1.bf16.msra.mxu0 %v3537
  %4167 = vmatprep.subr.bf16.mxu0 %v3542
  %4168 = vmatpush1.bf16.msra.mxu0 %v3541
  %4169 = vmatprep.subr.bf16.mxu0 %v3546
  %4170 = vmatpush1.bf16.msra.mxu0 %v3545
  %4171 = vmatprep.subr.bf16.mxu0 %v3550
  %4172 = vmatpush1.bf16.msra.mxu0 %v3549
  %4173 = vmatprep.subr.bf16.mxu0 %v3554
  %4174 = vmatpush1.bf16.msra.mxu0 %v3553
  %4175 = vmatprep.subr.bf16.mxu0 %v3558
  %4176 = vmatpush1.bf16.msra.mxu0 %v3557
  %4177 = vmatprep.subr.bf16.mxu0 %v3562
  %4178 = vmatpush1.bf16.msra.mxu0 %v3561
  %4179 = vmatprep.subr.bf16.mxu0 %v3566
  %4180 = vmatpush1.bf16.msra.mxu0 %v3565
  %4181 = vmatprep.subr.bf16.mxu0 %v3570
  %4182 = vmatpush1.bf16.msra.mxu0 %v3569
  %4183 = vmatprep.subr.bf16.mxu0 %v3574
  %4184 = vmatpush1.bf16.msra.mxu0 %v3573
  %4185 = vmatprep.subr.bf16.mxu0 %v3578
  %4186 = vmatpush1.bf16.msra.mxu0 %v3577
  %4187 = vmatprep.subr.bf16.mxu0 %v3582
  %4188 = vmatpush1.bf16.msra.mxu0 %v3581
  %4189 = vmatprep.subr.bf16.mxu0 %v3586
  %4190 = vmatpush1.bf16.msra.mxu0 %v3585
  %4191 = vmatprep.subr.bf16.mxu0 %v3590
  %4192 = vmatpush1.bf16.msra.mxu0 %v3589
  %4193 = vmatprep.subr.bf16.mxu0 %v3594
  %4194 = vmatpush1.bf16.msra.mxu0 %v3593
  %4195 = vmatprep.subr.bf16.mxu0 %v3598
  %4196 = vmatpush1.bf16.msra.mxu0 %v3597
  %4197 = vmatprep.mubr.bf16.mxu0 %v2358
  %4198 = vmatmul.mubr.bf16.gmra.mrb[0].mxu0 %v2357
  %v4199 = vpop.f32.mrb[0].mxu0
  %v4200 = vadd.f32 %v4159, %v4199
  %v4201 = vpop.f32.mrb[0].mxu0
  %v4202 = vadd.f32 %v4161, %v4201
  %v4203 = vpop.f32.mrb[0].mxu0
  %v4204 = vpop.f32.mrb[0].mxu0
  %4205 = vdwg.mxu0
  %4206 = vmatprep.subr.bf16.mxu0 %v3602
  %4207 = vmatpush1.bf16.msra.mxu0 %v3601
  %4208 = vmatprep.subr.bf16.mxu0 %v3606
  %4209 = vmatpush1.bf16.msra.mxu0 %v3605
  %4210 = vmatprep.subr.bf16.mxu0 %v3610
  %4211 = vmatpush1.bf16.msra.mxu0 %v3609
  %4212 = vmatprep.subr.bf16.mxu0 %v3614
  %4213 = vmatpush1.bf16.msra.mxu0 %v3613
  %4214 = vmatprep.subr.bf16.mxu0 %v3618
  %4215 = vmatpush1.bf16.msra.mxu0 %v3617
  %4216 = vmatprep.subr.bf16.mxu0 %v3622
  %4217 = vmatpush1.bf16.msra.mxu0 %v3621
  %4218 = vmatprep.subr.bf16.mxu0 %v3626
  %4219 = vmatpush1.bf16.msra.mxu0 %v3625
  %4220 = vmatprep.subr.bf16.mxu0 %v3630
  %4221 = vmatpush1.bf16.msra.mxu0 %v3629
  %4222 = vmatprep.subr.bf16.mxu0 %v3634
  %4223 = vmatpush1.bf16.msra.mxu0 %v3633
  %4224 = vmatprep.subr.bf16.mxu0 %v3638
  %4225 = vmatpush1.bf16.msra.mxu0 %v3637
  %4226 = vmatprep.subr.bf16.mxu0 %v3642
  %4227 = vmatpush1.bf16.msra.mxu0 %v3641
  %4228 = vmatprep.subr.bf16.mxu0 %v3646
  %4229 = vmatpush1.bf16.msra.mxu0 %v3645
  %4230 = vmatprep.subr.bf16.mxu0 %v3650
  %4231 = vmatpush1.bf16.msra.mxu0 %v3649
  %4232 = vmatprep.subr.bf16.mxu0 %v3654
  %4233 = vmatpush1.bf16.msra.mxu0 %v3653
  %4234 = vmatprep.subr.bf16.mxu0 %v3658
  %4235 = vmatpush1.bf16.msra.mxu0 %v3657
  %4236 = vmatprep.subr.bf16.mxu0 %v3662
  %4237 = vmatpush1.bf16.msra.mxu0 %v3661
  %4238 = vmatprep.mubr.bf16.mxu0 %v2360
  %4239 = vmatmul.mubr.bf16.gmra.mrb[0].mxu0 %v2359
  %v4240 = vpop.f32.mrb[0].mxu0
  %v4241 = vadd.f32 %v4200, %v4240
  %v4242 = vpop.f32.mrb[0].mxu0
  %v4243 = vadd.f32 %v4202, %v4242
  %v4244 = vpop.f32.mrb[0].mxu0
  %v4245 = vpop.f32.mrb[0].mxu0
  %4246 = vdwg.mxu0
  %v4247 = vmax.f32 %v4077, 0.0
  %v4248 = vmax.f32 %v4079, 0.0
  %v4249 = vmax.f32 %v4241, 0.0
  %v4250 = vmax.f32 %v4243, 0.0
  %v4251 = vpack.c.bf16 %v4247, %v4247
  %v4252 = vpack.c.bf16 %v4248, %v4248
  %v4253 = vpack.c.bf16 %v4249, %v4249
  %v4254 = vpack.c.bf16 %v4250, %v4250
  %v4255 = vld [vmem:[%s5] sm:$0xff]
  %v4256 = vld [vmem:[%s5 + $0x8] sm:$0xff]
  %v4257 = vld [vmem:[%s5 + $0x10] sm:$0xff]
  %v4258 = vld [vmem:[%s5 + $0x18] sm:$0xff]
  %v4259 = vld [vmem:[%s5 + $0x20] sm:$0xff]
  %v4260 = vld [vmem:[%s5 + $0x28] sm:$0xff]
  %v4261 = vld [vmem:[%s5 + $0x30] sm:$0xff]
  %v4262 = vld [vmem:[%s5 + $0x38] sm:$0xff]
  %v4263 = vld [vmem:[%s5 + $0x40] sm:$0xff]
  %v4264 = vld [vmem:[%s5 + $0x48] sm:$0xff]
  %v4265 = vld [vmem:[%s5 + $0x50] sm:$0xff]
  %v4266 = vld [vmem:[%s5 + $0x58] sm:$0xff]
  %v4267 = vld [vmem:[%s5 + $0x60] sm:$0xff]
  %v4268 = vld [vmem:[%s5 + $0x68] sm:$0xff]
  %v4269 = vld [vmem:[%s5 + $0x70] sm:$0xff]
  %v4270 = vld [vmem:[%s5 + $0x78] sm:$0xff]
  %v4271 = vld [vmem:[%s5 + $0x80] sm:$0xff]
  %v4272 = vld [vmem:[%s5 + $0x88] sm:$0xff]
  %v4273 = vld [vmem:[%s5 + $0x90] sm:$0xff]
  %v4274 = vld [vmem:[%s5 + $0x98] sm:$0xff]
  %v4275 = vld [vmem:[%s5 + $0xa0] sm:$0xff]
  %v4276 = vld [vmem:[%s5 + $0xa8] sm:$0xff]
  %v4277 = vld [vmem:[%s5 + $0xb0] sm:$0xff]
  %v4278 = vld [vmem:[%s5 + $0xb8] sm:$0xff]
  %v4279 = vld [vmem:[%s5 + $0xc0] sm:$0xff]
  %v4280 = vld [vmem:[%s5 + $0xc8] sm:$0xff]
  %v4281 = vld [vmem:[%s5 + $0xd0] sm:$0xff]
  %v4282 = vld [vmem:[%s5 + $0xd8] sm:$0xff]
  %v4283 = vld [vmem:[%s5 + $0xe0] sm:$0xff]
  %v4284 = vld [vmem:[%s5 + $0xe8] sm:$0xff]
  %v4285 = vld [vmem:[%s5 + $0xf0] sm:$0xff]
  %v4286 = vld [vmem:[%s5 + $0xf8] sm:$0xff]
  %v4287 = vld [vmem:[%s5 + $0x100] sm:$0xff]
  %v4288 = vld [vmem:[%s5 + $0x108] sm:$0xff]
  %v4289 = vld [vmem:[%s5 + $0x110] sm:$0xff]
  %v4290 = vld [vmem:[%s5 + $0x118] sm:$0xff]
  %v4291 = vld [vmem:[%s5 + $0x120] sm:$0xff]
  %v4292 = vld [vmem:[%s5 + $0x128] sm:$0xff]
  %v4293 = vld [vmem:[%s5 + $0x130] sm:$0xff]
  %v4294 = vld [vmem:[%s5 + $0x138] sm:$0xff]
  %v4295 = vld [vmem:[%s5 + $0x140] sm:$0xff]
  %v4296 = vld [vmem:[%s5 + $0x148] sm:$0xff]
  %v4297 = vld [vmem:[%s5 + $0x150] sm:$0xff]
  %v4298 = vld [vmem:[%s5 + $0x158] sm:$0xff]
  %v4299 = vld [vmem:[%s5 + $0x160] sm:$0xff]
  %v4300 = vld [vmem:[%s5 + $0x168] sm:$0xff]
  %v4301 = vld [vmem:[%s5 + $0x170] sm:$0xff]
  %v4302 = vld [vmem:[%s5 + $0x178] sm:$0xff]
  %v4303 = vld [vmem:[%s5 + $0x180] sm:$0xff]
  %v4304 = vld [vmem:[%s5 + $0x188] sm:$0xff]
  %v4305 = vld [vmem:[%s5 + $0x190] sm:$0xff]
  %v4306 = vld [vmem:[%s5 + $0x198] sm:$0xff]
  %v4307 = vld [vmem:[%s5 + $0x1a0] sm:$0xff]
  %v4308 = vld [vmem:[%s5 + $0x1a8] sm:$0xff]
  %v4309 = vld [vmem:[%s5 + $0x1b0] sm:$0xff]
  %v4310 = vld [vmem:[%s5 + $0x1b8] sm:$0xff]
  %v4311 = vld [vmem:[%s5 + $0x1c0] sm:$0xff]
  %v4312 = vld [vmem:[%s5 + $0x1c8] sm:$0xff]
  %v4313 = vld [vmem:[%s5 + $0x1d0] sm:$0xff]
  %v4314 = vld [vmem:[%s5 + $0x1d8] sm:$0xff]
  %v4315 = vld [vmem:[%s5 + $0x1e0] sm:$0xff]
  %v4316 = vld [vmem:[%s5 + $0x1e8] sm:$0xff]
  %v4317 = vld [vmem:[%s5 + $0x1f0] sm:$0xff]
  %v4318 = vld [vmem:[%s5 + $0x1f8] sm:$0xff]
  %v4383 = vunpack.c.l.b16 %v4255
  %v4384 = vunpack.c.h.b16 %v4255
  %v4385 = vunpack.c.l.b16 %v4256
  %v4386 = vunpack.c.h.b16 %v4256
  %v4387 = vunpack.c.l.b16 %v4257
  %v4388 = vunpack.c.h.b16 %v4257
  %v4389 = vunpack.c.l.b16 %v4258
  %v4390 = vunpack.c.h.b16 %v4258
  %v4391 = vunpack.c.l.b16 %v4259
  %v4392 = vunpack.c.h.b16 %v4259
  %v4393 = vunpack.c.l.b16 %v4260
  %v4394 = vunpack.c.h.b16 %v4260
  %v4395 = vunpack.c.l.b16 %v4261
  %v4396 = vunpack.c.h.b16 %v4261
  %v4397 = vunpack.c.l.b16 %v4262
  %v4398 = vunpack.c.h.b16 %v4262
  %v4399 = vunpack.c.l.b16 %v4263
  %v4400 = vunpack.c.h.b16 %v4263
  %v4401 = vunpack.c.l.b16 %v4264
  %v4402 = vunpack.c.h.b16 %v4264
  %v4403 = vunpack.c.l.b16 %v4265
  %v4404 = vunpack.c.h.b16 %v4265
  %v4405 = vunpack.c.l.b16 %v4266
  %v4406 = vunpack.c.h.b16 %v4266
  %v4407 = vunpack.c.l.b16 %v4267
  %v4408 = vunpack.c.h.b16 %v4267
  %v4409 = vunpack.c.l.b16 %v4268
  %v4410 = vunpack.c.h.b16 %v4268
  %v4411 = vunpack.c.l.b16 %v4269
  %v4412 = vunpack.c.h.b16 %v4269
  %v4413 = vunpack.c.l.b16 %v4270
  %v4414 = vunpack.c.h.b16 %v4270
  %v4415 = vunpack.c.l.b16 %v4271
  %v4416 = vunpack.c.h.b16 %v4271
  %v4417 = vunpack.c.l.b16 %v4272
  %v4418 = vunpack.c.h.b16 %v4272
  %v4419 = vunpack.c.l.b16 %v4273
  %v4420 = vunpack.c.h.b16 %v4273
  %v4421 = vunpack.c.l.b16 %v4274
  %v4422 = vunpack.c.h.b16 %v4274
  %v4423 = vunpack.c.l.b16 %v4275
  %v4424 = vunpack.c.h.b16 %v4275
  %v4425 = vunpack.c.l.b16 %v4276
  %v4426 = vunpack.c.h.b16 %v4276
  %v4427 = vunpack.c.l.b16 %v4277
  %v4428 = vunpack.c.h.b16 %v4277
  %v4429 = vunpack.c.l.b16 %v4278
  %v4430 = vunpack.c.h.b16 %v4278
  %v4431 = vunpack.c.l.b16 %v4279
  %v4432 = vunpack.c.h.b16 %v4279
  %v4433 = vunpack.c.l.b16 %v4280
  %v4434 = vunpack.c.h.b16 %v4280
  %v4435 = vunpack.c.l.b16 %v4281
  %v4436 = vunpack.c.h.b16 %v4281
  %v4437 = vunpack.c.l.b16 %v4282
  %v4438 = vunpack.c.h.b16 %v4282
  %v4439 = vunpack.c.l.b16 %v4283
  %v4440 = vunpack.c.h.b16 %v4283
  %v4441 = vunpack.c.l.b16 %v4284
  %v4442 = vunpack.c.h.b16 %v4284
  %v4443 = vunpack.c.l.b16 %v4285
  %v4444 = vunpack.c.h.b16 %v4285
  %v4445 = vunpack.c.l.b16 %v4286
  %v4446 = vunpack.c.h.b16 %v4286
  %v4447 = vunpack.c.l.b16 %v4287
  %v4448 = vunpack.c.h.b16 %v4287
  %v4449 = vunpack.c.l.b16 %v4288
  %v4450 = vunpack.c.h.b16 %v4288
  %v4451 = vunpack.c.l.b16 %v4289
  %v4452 = vunpack.c.h.b16 %v4289
  %v4453 = vunpack.c.l.b16 %v4290
  %v4454 = vunpack.c.h.b16 %v4290
  %v4455 = vunpack.c.l.b16 %v4291
  %v4456 = vunpack.c.h.b16 %v4291
  %v4457 = vunpack.c.l.b16 %v4292
  %v4458 = vunpack.c.h.b16 %v4292
  %v4459 = vunpack.c.l.b16 %v4293
  %v4460 = vunpack.c.h.b16 %v4293
  %v4461 = vunpack.c.l.b16 %v4294
  %v4462 = vunpack.c.h.b16 %v4294
  %v4463 = vunpack.c.l.b16 %v4295
  %v4464 = vunpack.c.h.b16 %v4295
  %v4465 = vunpack.c.l.b16 %v4296
  %v4466 = vunpack.c.h.b16 %v4296
  %v4467 = vunpack.c.l.b16 %v4297
  %v4468 = vunpack.c.h.b16 %v4297
  %v4469 = vunpack.c.l.b16 %v4298
  %v4470 = vunpack.c.h.b16 %v4298
  %v4471 = vunpack.c.l.b16 %v4299
  %v4472 = vunpack.c.h.b16 %v4299
  %v4473 = vunpack.c.l.b16 %v4300
  %v4474 = vunpack.c.h.b16 %v4300
  %v4475 = vunpack.c.l.b16 %v4301
  %v4476 = vunpack.c.h.b16 %v4301
  %v4477 = vunpack.c.l.b16 %v4302
  %v4478 = vunpack.c.h.b16 %v4302
  %v4479 = vunpack.c.l.b16 %v4303
  %v4480 = vunpack.c.h.b16 %v4303
  %v4481 = vunpack.c.l.b16 %v4304
  %v4482 = vunpack.c.h.b16 %v4304
  %v4483 = vunpack.c.l.b16 %v4305
  %v4484 = vunpack.c.h.b16 %v4305
  %v4485 = vunpack.c.l.b16 %v4306
  %v4486 = vunpack.c.h.b16 %v4306
  %v4487 = vunpack.c.l.b16 %v4307
  %v4488 = vunpack.c.h.b16 %v4307
  %v4489 = vunpack.c.l.b16 %v4308
  %v4490 = vunpack.c.h.b16 %v4308
  %v4491 = vunpack.c.l.b16 %v4309
  %v4492 = vunpack.c.h.b16 %v4309
  %v4493 = vunpack.c.l.b16 %v4310
  %v4494 = vunpack.c.h.b16 %v4310
  %v4495 = vunpack.c.l.b16 %v4311
  %v4496 = vunpack.c.h.b16 %v4311
  %v4497 = vunpack.c.l.b16 %v4312
  %v4498 = vunpack.c.h.b16 %v4312
  %v4499 = vunpack.c.l.b16 %v4313
  %v4500 = vunpack.c.h.b16 %v4313
  %v4501 = vunpack.c.l.b16 %v4314
  %v4502 = vunpack.c.h.b16 %v4314
  %v4503 = vunpack.c.l.b16 %v4315
  %v4504 = vunpack.c.h.b16 %v4315
  %v4505 = vunpack.c.l.b16 %v4316
  %v4506 = vunpack.c.h.b16 %v4316
  %v4507 = vunpack.c.l.b16 %v4317
  %v4508 = vunpack.c.h.b16 %v4317
  %v4509 = vunpack.c.l.b16 %v4318
  %v4510 = vunpack.c.h.b16 %v4318
  %v4511 = vpack.c.b16 %v4385, %v4383
  %v4512 = vpack.c.b16 %v4386, %v4384
  %v4513 = vpack.c.b16 %v4389, %v4387
  %v4514 = vpack.c.b16 %v4390, %v4388
  %v4515 = vpack.c.b16 %v4393, %v4391
  %v4516 = vpack.c.b16 %v4394, %v4392
  %v4517 = vpack.c.b16 %v4397, %v4395
  %v4518 = vpack.c.b16 %v4398, %v4396
  %v4519 = vpack.c.b16 %v4401, %v4399
  %v4520 = vpack.c.b16 %v4402, %v4400
  %v4521 = vpack.c.b16 %v4405, %v4403
  %v4522 = vpack.c.b16 %v4406, %v4404
  %v4523 = vpack.c.b16 %v4409, %v4407
  %v4524 = vpack.c.b16 %v4410, %v4408
  %v4525 = vpack.c.b16 %v4413, %v4411
  %v4526 = vpack.c.b16 %v4414, %v4412
  %v4527 = vpack.c.b16 %v4417, %v4415
  %v4528 = vpack.c.b16 %v4418, %v4416
  %v4529 = vpack.c.b16 %v4421, %v4419
  %v4530 = vpack.c.b16 %v4422, %v4420
  %v4531 = vpack.c.b16 %v4425, %v4423
  %v4532 = vpack.c.b16 %v4426, %v4424
  %v4533 = vpack.c.b16 %v4429, %v4427
  %v4534 = vpack.c.b16 %v4430, %v4428
  %v4535 = vpack.c.b16 %v4433, %v4431
  %v4536 = vpack.c.b16 %v4434, %v4432
  %v4537 = vpack.c.b16 %v4437, %v4435
  %v4538 = vpack.c.b16 %v4438, %v4436
  %v4539 = vpack.c.b16 %v4441, %v4439
  %v4540 = vpack.c.b16 %v4442, %v4440
  %v4541 = vpack.c.b16 %v4445, %v4443
  %v4542 = vpack.c.b16 %v4446, %v4444
  %v4543 = vpack.c.b16 %v4449, %v4447
  %v4544 = vpack.c.b16 %v4450, %v4448
  %v4545 = vpack.c.b16 %v4453, %v4451
  %v4546 = vpack.c.b16 %v4454, %v4452
  %v4547 = vpack.c.b16 %v4457, %v4455
  %v4548 = vpack.c.b16 %v4458, %v4456
  %v4549 = vpack.c.b16 %v4461, %v4459
  %v4550 = vpack.c.b16 %v4462, %v4460
  %v4551 = vpack.c.b16 %v4465, %v4463
  %v4552 = vpack.c.b16 %v4466, %v4464
  %v4553 = vpack.c.b16 %v4469, %v4467
  %v4554 = vpack.c.b16 %v4470, %v4468
  %v4555 = vpack.c.b16 %v4473, %v4471
  %v4556 = vpack.c.b16 %v4474, %v4472
  %v4557 = vpack.c.b16 %v4477, %v4475
  %v4558 = vpack.c.b16 %v4478, %v4476
  %v4559 = vpack.c.b16 %v4481, %v4479
  %v4560 = vpack.c.b16 %v4482, %v4480
  %v4561 = vpack.c.b16 %v4485, %v4483
  %v4562 = vpack.c.b16 %v4486, %v4484
  %v4563 = vpack.c.b16 %v4489, %v4487
  %v4564 = vpack.c.b16 %v4490, %v4488
  %v4565 = vpack.c.b16 %v4493, %v4491
  %v4566 = vpack.c.b16 %v4494, %v4492
  %v4567 = vpack.c.b16 %v4497, %v4495
  %v4568 = vpack.c.b16 %v4498, %v4496
  %v4569 = vpack.c.b16 %v4501, %v4499
  %v4570 = vpack.c.b16 %v4502, %v4500
  %v4571 = vpack.c.b16 %v4505, %v4503
  %v4572 = vpack.c.b16 %v4506, %v4504
  %v4573 = vpack.c.b16 %v4509, %v4507
  %v4574 = vpack.c.b16 %v4510, %v4508
  %4639 = vmatprep.subr.bf16.mxu0 %v4512
  %4640 = vmatpush1.bf16.msra.mxu0 %v4511
  %4641 = vmatprep.subr.bf16.mxu0 %v4514
  %4642 = vmatpush1.bf16.msra.mxu0 %v4513
  %4643 = vmatprep.subr.bf16.mxu0 %v4516
  %4644 = vmatpush1.bf16.msra.mxu0 %v4515
  %4645 = vmatprep.subr.bf16.mxu0 %v4518
  %4646 = vmatpush1.bf16.msra.mxu0 %v4517
  %4647 = vmatprep.subr.bf16.mxu0 %v4520
  %4648 = vmatpush1.bf16.msra.mxu0 %v4519
  %4649 = vmatprep.subr.bf16.mxu0 %v4522
  %4650 = vmatpush1.bf16.msra.mxu0 %v4521
  %4651 = vmatprep.subr.bf16.mxu0 %v4524
  %4652 = vmatpush1.bf16.msra.mxu0 %v4523
  %4653 = vmatprep.subr.bf16.mxu0 %v4526
  %4654 = vmatpush1.bf16.msra.mxu0 %v4525
  %4655 = vmatprep.subr.bf16.mxu0 %v4528
  %4656 = vmatpush1.bf16.msra.mxu0 %v4527
  %4657 = vmatprep.subr.bf16.mxu0 %v4530
  %4658 = vmatpush1.bf16.msra.mxu0 %v4529
  %4659 = vmatprep.subr.bf16.mxu0 %v4532
  %4660 = vmatpush1.bf16.msra.mxu0 %v4531
  %4661 = vmatprep.subr.bf16.mxu0 %v4534
  %4662 = vmatpush1.bf16.msra.mxu0 %v4533
  %4663 = vmatprep.subr.bf16.mxu0 %v4536
  %4664 = vmatpush1.bf16.msra.mxu0 %v4535
  %4665 = vmatprep.subr.bf16.mxu0 %v4538
  %4666 = vmatpush1.bf16.msra.mxu0 %v4537
  %4667 = vmatprep.subr.bf16.mxu0 %v4540
  %4668 = vmatpush1.bf16.msra.mxu0 %v4539
  %4669 = vmatprep.subr.bf16.mxu0 %v4542
  %4670 = vmatpush1.bf16.msra.mxu0 %v4541
  %4671 = vmatprep.mubr.bf16.mxu0 %v4252
  %4672 = vmatmul.mubr.bf16.gmra.mrb[0].mxu0 %v4251
  %v4673 = vpop.f32.mrb[0].mxu0
  %v4674 = vadd.f32 0.0, %v4673
  %v4675 = vpop.f32.mrb[0].mxu0
  %v4676 = vadd.f32 0.0, %v4675
  %v4677 = vpop.f32.mrb[0].mxu0
  %v4678 = vpop.f32.mrb[0].mxu0
  %4679 = vdwg.mxu0
  %4680 = vmatprep.subr.bf16.mxu0 %v4544
  %4681 = vmatpush1.bf16.msra.mxu0 %v4543
  %4682 = vmatprep.subr.bf16.mxu0 %v4546
  %4683 = vmatpush1.bf16.msra.mxu0 %v4545
  %4684 = vmatprep.subr.bf16.mxu0 %v4548
  %4685 = vmatpush1.bf16.msra.mxu0 %v4547
  %4686 = vmatprep.subr.bf16.mxu0 %v4550
  %4687 = vmatpush1.bf16.msra.mxu0 %v4549
  %4688 = vmatprep.subr.bf16.mxu0 %v4552
  %4689 = vmatpush1.bf16.msra.mxu0 %v4551
  %4690 = vmatprep.subr.bf16.mxu0 %v4554
  %4691 = vmatpush1.bf16.msra.mxu0 %v4553
  %4692 = vmatprep.subr.bf16.mxu0 %v4556
  %4693 = vmatpush1.bf16.msra.mxu0 %v4555
  %4694 = vmatprep.subr.bf16.mxu0 %v4558
  %4695 = vmatpush1.bf16.msra.mxu0 %v4557
  %4696 = vmatprep.subr.bf16.mxu0 %v4560
  %4697 = vmatpush1.bf16.msra.mxu0 %v4559
  %4698 = vmatprep.subr.bf16.mxu0 %v4562
  %4699 = vmatpush1.bf16.msra.mxu0 %v4561
  %4700 = vmatprep.subr.bf16.mxu0 %v4564
  %4701 = vmatpush1.bf16.msra.mxu0 %v4563
  %4702 = vmatprep.subr.bf16.mxu0 %v4566
  %4703 = vmatpush1.bf16.msra.mxu0 %v4565
  %4704 = vmatprep.subr.bf16.mxu0 %v4568
  %4705 = vmatpush1.bf16.msra.mxu0 %v4567
  %4706 = vmatprep.subr.bf16.mxu0 %v4570
  %4707 = vmatpush1.bf16.msra.mxu0 %v4569
  %4708 = vmatprep.subr.bf16.mxu0 %v4572
  %4709 = vmatpush1.bf16.msra.mxu0 %v4571
  %4710 = vmatprep.subr.bf16.mxu0 %v4574
  %4711 = vmatpush1.bf16.msra.mxu0 %v4573
  %4712 = vmatprep.mubr.bf16.mxu0 %v4254
  %4713 = vmatmul.mubr.bf16.gmra.mrb[0].mxu0 %v4253
  %v4714 = vpop.f32.mrb[0].mxu0
  %v4715 = vadd.f32 %v4674, %v4714
  %v4716 = vpop.f32.mrb[0].mxu0
  %v4717 = vadd.f32 %v4676, %v4716
  %v4718 = vpop.f32.mrb[0].mxu0
  %v4719 = vpop.f32.mrb[0].mxu0
  %4720 = vdwg.mxu0
  %v4721 = vxor.u32 %v4715, 2147483648
  %v4722 = vmul.f32 %v4721, 1.442695
  %v4723 = vpow.pop %v4722
  %v4724 = vadd.f32 %v4723, 1.0
  %v4725 = vrcp.pop %v4724
  %v4726 = vmul.f32 1.0, %v4725
  %v4727 = vtanh.pop %v4717
  %v4728 = vmul.f32 %v4726, %v4727
  %v4729 = vld [vmem:[%s6] sm:$0xff]
  %v4730 = vld [vmem:[%s6 + $0x8] sm:$0xff]
  %v4731 = vld [vmem:[%s6 + $0x10] sm:$0xff]
  %v4732 = vld [vmem:[%s6 + $0x18] sm:$0xff]
  %v4733 = vld [vmem:[%s6 + $0x20] sm:$0xff]
  %v4734 = vld [vmem:[%s6 + $0x28] sm:$0xff]
  %v4735 = vld [vmem:[%s6 + $0x30] sm:$0xff]
  %v4736 = vld [vmem:[%s6 + $0x38] sm:$0xff]
  %v4737 = vld [vmem:[%s6 + $0x40] sm:$0xff]
  %v4738 = vld [vmem:[%s6 + $0x48] sm:$0xff]
  %v4739 = vld [vmem:[%s6 + $0x50] sm:$0xff]
  %v4740 = vld [vmem:[%s6 + $0x58] sm:$0xff]
  %v4741 = vld [vmem:[%s6 + $0x60] sm:$0xff]
  %v4742 = vld [vmem:[%s6 + $0x68] sm:$0xff]
  %v4743 = vld [vmem:[%s6 + $0x70] sm:$0xff]
  %v4744 = vld [vmem:[%s6 + $0x78] sm:$0xff]
  %4745 = vmatprep.subr.mxu0 0.0
  %4746 = vmatpush1.msra.mxu0 %v4729
  %4747 = vmatprep.subr.mxu0 0.0
  %4748 = vmatpush1.msra.mxu0 %v4730
  %4749 = vmatprep.subr.mxu0 0.0
  %4750 = vmatpush1.msra.mxu0 %v4731
  %4751 = vmatprep.subr.mxu0 0.0
  %4752 = vmatpush1.msra.mxu0 %v4732
  %4753 = vmatprep.subr.mxu0 0.0
  %4754 = vmatpush1.msra.mxu0 %v4733
  %4755 = vmatprep.subr.mxu0 0.0
  %4756 = vmatpush1.msra.mxu0 %v4734
  %4757 = vmatprep.subr.mxu0 0.0
  %4758 = vmatpush1.msra.mxu0 %v4735
  %4759 = vmatprep.subr.mxu0 0.0
  %4760 = vmatpush1.msra.mxu0 %v4736
  %4761 = vmatprep.subr.mxu0 0.0
  %4762 = vmatpush1.msra.mxu0 %v4737
  %4763 = vmatprep.subr.mxu0 0.0
  %4764 = vmatpush1.msra.mxu0 %v4738
  %4765 = vmatprep.subr.mxu0 0.0
  %4766 = vmatpush1.msra.mxu0 %v4739
  %4767 = vmatprep.subr.mxu0 0.0
  %4768 = vmatpush1.msra.mxu0 %v4740
  %4769 = vmatprep.subr.mxu0 0.0
  %4770 = vmatpush1.msra.mxu0 %v4741
  %4771 = vmatprep.subr.mxu0 0.0
  %4772 = vmatpush1.msra.mxu0 %v4742
  %4773 = vmatprep.subr.mxu0 0.0
  %4774 = vmatpush1.msra.mxu0 %v4743
  %4775 = vmatprep.subr.mxu0 0.0
  %4776 = vmatpush1.msra.mxu0 %v4744
  %4777 = vmatprep.subr.mxu0 0.0
  %4778 = vmatpush1.msra.mxu0 0.0
  %4779 = vmatprep.subr.mxu0 0.0
  %4780 = vmatpush1.msra.mxu0 0.0
  %4781 = vmatprep.subr.mxu0 0.0
  %4782 = vmatpush1.msra.mxu0 0.0
  %4783 = vmatprep.subr.mxu0 0.0
  %4784 = vmatpush1.msra.mxu0 0.0
  %4785 = vmatprep.subr.mxu0 0.0
  %4786 = vmatpush1.msra.mxu0 0.0
  %4787 = vmatprep.subr.mxu0 0.0
  %4788 = vmatpush1.msra.mxu0 0.0
  %4789 = vmatprep.subr.mxu0 0.0
  %4790 = vmatpush1.msra.mxu0 0.0
  %4791 = vmatprep.subr.mxu0 0.0
  %4792 = vmatpush1.msra.mxu0 0.0
  %4793 = vmatprep.subr.mxu0 0.0
  %4794 = vmatpush1.msra.mxu0 0.0
  %4795 = vmatprep.subr.mxu0 0.0
  %4796 = vmatpush1.msra.mxu0 0.0
  %4797 = vmatprep.subr.mxu0 0.0
  %4798 = vmatpush1.msra.mxu0 0.0
  %4799 = vmatprep.subr.mxu0 0.0
  %4800 = vmatpush1.msra.mxu0 0.0
  %4801 = vmatprep.subr.mxu0 0.0
  %4802 = vmatpush1.msra.mxu0 0.0
  %4803 = vmatprep.subr.mxu0 0.0
  %4804 = vmatpush1.msra.mxu0 0.0
  %4805 = vmatprep.subr.mxu0 0.0
  %4806 = vmatpush1.msra.mxu0 0.0
  %4807 = vmatprep.subr.mxu0 0.0
  %4808 = vmatpush1.msra.mxu0 0.0
  %4809 = vmatprep.mubr.f32.mxu0 0.0
  %4810 = vmatmul.mubr.f32.gmra.mrb[0].mxu0 %v4728
  %v4811 = vpop.f32.mrb[0].mxu0
  %v4812 = vadd.f32 0.0, %v4811
  %v4813 = vpop.f32.mrb[0].mxu0
  %4814 = vdwg.mxu0
  %vm4815 = vcmask 3072
  %v4816 = vsel %vm4815, %v4812, -inf
  %v4817 = vrot.slane %v4816, 4
  %v4818 = vmax.f32 %v4816, %v4817
  %v4819 = vrot.slane %v4818, 2
  %v4820 = vmax.f32 %v4818, %v4819
  %v4821 = vrot.slane %v4820, 1
  %v4822 = vmax.f32 %v4820, %v4821
  %v4823 = vsub.f32 %v4812, %v4822
  %v4824 = vmul.f32 %v4823, 1.442695
  %v4825 = vpow.pop %v4824
  %v4826 = vld [vmem:[%s7] sm:$0x3]
  %vm4827 = vcmask 31744
  %v4829 = vsel %vm4827, %v4826, 0
  %vm4831 = vcmask 1043456
  %v4833 = vsel %vm4831, %v4825, 0
  %4835 = vmatprep.subr.mxu0 0.0
  %4836 = vmatpush1.msra.mxu0 %v4833
  %4837 = vmatprep.subr.mxu0 0.0
  %4838 = vmatpush1.msra.mxu0 0.0
  %4839 = vmatprep.subr.mxu0 0.0
  %4840 = vmatpush1.msra.mxu0 0.0
  %4841 = vmatprep.subr.mxu0 0.0
  %4842 = vmatpush1.msra.mxu0 0.0
  %4843 = vmatprep.subr.mxu0 0.0
  %4844 = vmatpush1.msra.mxu0 0.0
  %4845 = vmatprep.subr.mxu0 0.0
  %4846 = vmatpush1.msra.mxu0 0.0
  %4847 = vmatprep.subr.mxu0 0.0
  %4848 = vmatpush1.msra.mxu0 0.0
  %4849 = vmatprep.subr.mxu0 0.0
  %4850 = vmatpush1.msra.mxu0 0.0
  %4851 = vmatprep.subr.mxu0 0.0
  %4852 = vmatpush1.msra.mxu0 0.0
  %4853 = vmatprep.subr.mxu0 0.0
  %4854 = vmatpush1.msra.mxu0 0.0
  %4855 = vmatprep.subr.mxu0 0.0
  %4856 = vmatpush1.msra.mxu0 0.0
  %4857 = vmatprep.subr.mxu0 0.0
  %4858 = vmatpush1.msra.mxu0 0.0
  %4859 = vmatprep.subr.mxu0 0.0
  %4860 = vmatpush1.msra.mxu0 0.0
  %4861 = vmatprep.subr.mxu0 0.0
  %4862 = vmatpush1.msra.mxu0 0.0
  %4863 = vmatprep.subr.mxu0 0.0
  %4864 = vmatpush1.msra.mxu0 0.0
  %4865 = vmatprep.subr.mxu0 0.0
  %4866 = vmatpush1.msra.mxu0 0.0
  %4867 = vmatprep.subr.mxu0 0.0
  %4868 = vmatpush1.msra.mxu0 0.0
  %4869 = vmatprep.subr.mxu0 0.0
  %4870 = vmatpush1.msra.mxu0 0.0
  %4871 = vmatprep.subr.mxu0 0.0
  %4872 = vmatpush1.msra.mxu0 0.0
  %4873 = vmatprep.subr.mxu0 0.0
  %4874 = vmatpush1.msra.mxu0 0.0
  %4875 = vmatprep.subr.mxu0 0.0
  %4876 = vmatpush1.msra.mxu0 0.0
  %4877 = vmatprep.subr.mxu0 0.0
  %4878 = vmatpush1.msra.mxu0 0.0
  %4879 = vmatprep.subr.mxu0 0.0
  %4880 = vmatpush1.msra.mxu0 0.0
  %4881 = vmatprep.subr.mxu0 0.0
  %4882 = vmatpush1.msra.mxu0 0.0
  %4883 = vmatprep.subr.mxu0 0.0
  %4884 = vmatpush1.msra.mxu0 0.0
  %4885 = vmatprep.subr.mxu0 0.0
  %4886 = vmatpush1.msra.mxu0 0.0
  %4887 = vmatprep.subr.mxu0 0.0
  %4888 = vmatpush1.msra.mxu0 0.0
  %4889 = vmatprep.subr.mxu0 0.0
  %4890 = vmatpush1.msra.mxu0 0.0
  %4891 = vmatprep.subr.mxu0 0.0
  %4892 = vmatpush1.msra.mxu0 0.0
  %4893 = vmatprep.subr.mxu0 0.0
  %4894 = vmatpush1.msra.mxu0 0.0
  %4895 = vmatprep.subr.mxu0 0.0
  %4896 = vmatpush1.msra.mxu0 0.0
  %4897 = vmatprep.subr.mxu0 0.0
  %4898 = vmatpush1.msra.mxu0 0.0
  %4899 = vmatprep.mubr.f32.mxu0 0.0
  %4900 = vmatmul.mubr.f32.gmra.mrb[0].mxu0 %v4829
  %v4901 = vpop.f32.mrb[0].mxu0
  %v4902 = vadd.f32 0.0, %v4901
  %v4903 = vpop.f32.mrb[0].mxu0
  %4904 = vdwg.mxu0
  %v4905 = vrcp.pop %v4902
  %v4906 = vmul.f32 1.0, %v4905
  %v4907 = vld [vmem:[%s8] sm:$0xf]
  %vm4908 = vcmask 15360
  %v4910 = vsel %vm4908, %v4907, 0
  %vm4912 = vcmask 1041408
  %v4914 = vsel %vm4912, %v4906, 0
  %4916 = vmatprep.subr.mxu0 0.0
  %4917 = vmatpush1.msra.mxu0 %v4914
  %4918 = vmatprep.subr.mxu0 0.0
  %4919 = vmatpush1.msra.mxu0 0.0
  %4920 = vmatprep.subr.mxu0 0.0
  %4921 = vmatpush1.msra.mxu0 0.0
  %4922 = vmatprep.subr.mxu0 0.0
  %4923 = vmatpush1.msra.mxu0 0.0
  %4924 = vmatprep.subr.mxu0 0.0
  %4925 = vmatpush1.msra.mxu0 0.0
  %4926 = vmatprep.subr.mxu0 0.0
  %4927 = vmatpush1.msra.mxu0 0.0
  %4928 = vmatprep.subr.mxu0 0.0
  %4929 = vmatpush1.msra.mxu0 0.0
  %4930 = vmatprep.subr.mxu0 0.0
  %4931 = vmatpush1.msra.mxu0 0.0
  %4932 = vmatprep.subr.mxu0 0.0
  %4933 = vmatpush1.msra.mxu0 0.0
  %4934 = vmatprep.subr.mxu0 0.0
  %4935 = vmatpush1.msra.mxu0 0.0
  %4936 = vmatprep.subr.mxu0 0.0
  %4937 = vmatpush1.msra.mxu0 0.0
  %4938 = vmatprep.subr.mxu0 0.0
  %4939 = vmatpush1.msra.mxu0 0.0
  %4940 = vmatprep.subr.mxu0 0.0
  %4941 = vmatpush1.msra.mxu0 0.0
  %4942 = vmatprep.subr.mxu0 0.0
  %4943 = vmatpush1.msra.mxu0 0.0
  %4944 = vmatprep.subr.mxu0 0.0
  %4945 = vmatpush1.msra.mxu0 0.0
  %4946 = vmatprep.subr.mxu0 0.0
  %4947 = vmatpush1.msra.mxu0 0.0
  %4948 = vmatprep.subr.mxu0 0.0
  %4949 = vmatpush1.msra.mxu0 0.0
  %4950 = vmatprep.subr.mxu0 0.0
  %4951 = vmatpush1.msra.mxu0 0.0
  %4952 = vmatprep.subr.mxu0 0.0
  %4953 = vmatpush1.msra.mxu0 0.0
  %4954 = vmatprep.subr.mxu0 0.0
  %4955 = vmatpush1.msra.mxu0 0.0
  %4956 = vmatprep.subr.mxu0 0.0
  %4957 = vmatpush1.msra.mxu0 0.0
  %4958 = vmatprep.subr.mxu0 0.0
  %4959 = vmatpush1.msra.mxu0 0.0
  %4960 = vmatprep.subr.mxu0 0.0
  %4961 = vmatpush1.msra.mxu0 0.0
  %4962 = vmatprep.subr.mxu0 0.0
  %4963 = vmatpush1.msra.mxu0 0.0
  %4964 = vmatprep.subr.mxu0 0.0
  %4965 = vmatpush1.msra.mxu0 0.0
  %4966 = vmatprep.subr.mxu0 0.0
  %4967 = vmatpush1.msra.mxu0 0.0
  %4968 = vmatprep.subr.mxu0 0.0
  %4969 = vmatpush1.msra.mxu0 0.0
  %4970 = vmatprep.subr.mxu0 0.0
  %4971 = vmatpush1.msra.mxu0 0.0
  %4972 = vmatprep.subr.mxu0 0.0
  %4973 = vmatpush1.msra.mxu0 0.0
  %4974 = vmatprep.subr.mxu0 0.0
  %4975 = vmatpush1.msra.mxu0 0.0
  %4976 = vmatprep.subr.mxu0 0.0
  %4977 = vmatpush1.msra.mxu0 0.0
  %4978 = vmatprep.subr.mxu0 0.0
  %4979 = vmatpush1.msra.mxu0 0.0
  %4980 = vmatprep.mubr.f32.mxu0 0.0
  %4981 = vmatmul.mubr.f32.gmra.mrb[0].mxu0 %v4910
  %v4982 = vpop.f32.mrb[0].mxu0
  %v4983 = vadd.f32 0.0, %v4982
  %v4984 = vpop.f32.mrb[0].mxu0
  %4985 = vdwg.mxu0
  %v4986 = vmul.f32 %v4825, %v4983
  %4987 = vst.msk [vmem:[%s14] sm:$0xf] %vm4815, %v4986
  %v4988 = vld [vmem:[%s7] sm:$0x3]
  %4990 = vset.pattern.permute.xlu0 0
  %4991 = vperm.xlu0 %4990, %v4986
  %v4992 = vpop.permute.xlu0 %4991
  %v4994 = vmul.f32 %v4992, %v4247
  %v4995 = vmul.f32 %v4992, %v4248
  %v4996 = vmul.f32 %v4992, %v4249
  %v4997 = vmul.f32 %v4992, %v4250
  %v4999 = vsel %vm4827, %v4988, 0
  %v5002 = vsel %vm4831, %v4994, 0
  %v5005 = vsel %vm4831, %v4995, 0
  %v5008 = vsel %vm4831, %v4996, 0
  %v5011 = vsel %vm4831, %v4997, 0
  %5013 = vmatprep.subr.mxu0 %v5005
  %5014 = vmatpush1.msra.mxu0 %v5002
  %5015 = vmatprep.subr.mxu0 0.0
  %5016 = vmatpush1.msra.mxu0 0.0
  %5017 = vmatprep.subr.mxu0 0.0
  %5018 = vmatpush1.msra.mxu0 0.0
  %5019 = vmatprep.subr.mxu0 0.0
  %5020 = vmatpush1.msra.mxu0 0.0
  %5021 = vmatprep.subr.mxu0 0.0
  %5022 = vmatpush1.msra.mxu0 0.0
  %5023 = vmatprep.subr.mxu0 0.0
  %5024 = vmatpush1.msra.mxu0 0.0
  %5025 = vmatprep.subr.mxu0 0.0
  %5026 = vmatpush1.msra.mxu0 0.0
  %5027 = vmatprep.subr.mxu0 0.0
  %5028 = vmatpush1.msra.mxu0 0.0
  %5029 = vmatprep.subr.mxu0 0.0
  %5030 = vmatpush1.msra.mxu0 0.0
  %5031 = vmatprep.subr.mxu0 0.0
  %5032 = vmatpush1.msra.mxu0 0.0
  %5033 = vmatprep.subr.mxu0 0.0
  %5034 = vmatpush1.msra.mxu0 0.0
  %5035 = vmatprep.subr.mxu0 0.0
  %5036 = vmatpush1.msra.mxu0 0.0
  %5037 = vmatprep.subr.mxu0 0.0
  %5038 = vmatpush1.msra.mxu0 0.0
  %5039 = vmatprep.subr.mxu0 0.0
  %5040 = vmatpush1.msra.mxu0 0.0
  %5041 = vmatprep.subr.mxu0 0.0
  %5042 = vmatpush1.msra.mxu0 0.0
  %5043 = vmatprep.subr.mxu0 0.0
  %5044 = vmatpush1.msra.mxu0 0.0
  %5045 = vmatprep.subr.mxu0 0.0
  %5046 = vmatpush1.msra.mxu0 0.0
  %5047 = vmatprep.subr.mxu0 0.0
  %5048 = vmatpush1.msra.mxu0 0.0
  %5049 = vmatprep.subr.mxu0 0.0
  %5050 = vmatpush1.msra.mxu0 0.0
  %5051 = vmatprep.subr.mxu0 0.0
  %5052 = vmatpush1.msra.mxu0 0.0
  %5053 = vmatprep.subr.mxu0 0.0
  %5054 = vmatpush1.msra.mxu0 0.0
  %5055 = vmatprep.subr.mxu0 0.0
  %5056 = vmatpush1.msra.mxu0 0.0
  %5057 = vmatprep.subr.mxu0 0.0
  %5058 = vmatpush1.msra.mxu0 0.0
  %5059 = vmatprep.subr.mxu0 0.0
  %5060 = vmatpush1.msra.mxu0 0.0
  %5061 = vmatprep.subr.mxu0 0.0
  %5062 = vmatpush1.msra.mxu0 0.0
  %5063 = vmatprep.subr.mxu0 0.0
  %5064 = vmatpush1.msra.mxu0 0.0
  %5065 = vmatprep.subr.mxu0 0.0
  %5066 = vmatpush1.msra.mxu0 0.0
  %5067 = vmatprep.subr.mxu0 0.0
  %5068 = vmatpush1.msra.mxu0 0.0
  %5069 = vmatprep.subr.mxu0 0.0
  %5070 = vmatpush1.msra.mxu0 0.0
  %5071 = vmatprep.subr.mxu0 0.0
  %5072 = vmatpush1.msra.mxu0 0.0
  %5073 = vmatprep.subr.mxu0 0.0
  %5074 = vmatpush1.msra.mxu0 0.0
  %5075 = vmatprep.subr.mxu0 0.0
  %5076 = vmatpush1.msra.mxu0 0.0
  %5077 = vmatprep.mubr.f32.mxu0 0.0
  %5078 = vmatmul.mubr.f32.gmra.mrb[0].mxu0 %v4999
  %v5079 = vpop.f32.mrb[0].mxu0
  %v5080 = vadd.f32 0.0, %v5079
  %v5081 = vpop.f32.mrb[0].mxu0
  %v5082 = vadd.f32 0.0, %v5081
  %5083 = vdwg.mxu0
  %5084 = vmatprep.subr.mxu0 %v5011
  %5085 = vmatpush1.msra.mxu0 %v5008
  %5086 = vmatprep.subr.mxu0 0.0
  %5087 = vmatpush1.msra.mxu0 0.0
  %5088 = vmatprep.subr.mxu0 0.0
  %5089 = vmatpush1.msra.mxu0 0.0
  %5090 = vmatprep.subr.mxu0 0.0
  %5091 = vmatpush1.msra.mxu0 0.0
  %5092 = vmatprep.subr.mxu0 0.0
  %5093 = vmatpush1.msra.mxu0 0.0
  %5094 = vmatprep.subr.mxu0 0.0
  %5095 = vmatpush1.msra.mxu0 0.0
  %5096 = vmatprep.subr.mxu0 0.0
  %5097 = vmatpush1.msra.mxu0 0.0
  %5098 = vmatprep.subr.mxu0 0.0
  %5099 = vmatpush1.msra.mxu0 0.0
  %5100 = vmatprep.subr.mxu0 0.0
  %5101 = vmatpush1.msra.mxu0 0.0
  %5102 = vmatprep.subr.mxu0 0.0
  %5103 = vmatpush1.msra.mxu0 0.0
  %5104 = vmatprep.subr.mxu0 0.0
  %5105 = vmatpush1.msra.mxu0 0.0
  %5106 = vmatprep.subr.mxu0 0.0
  %5107 = vmatpush1.msra.mxu0 0.0
  %5108 = vmatprep.subr.mxu0 0.0
  %5109 = vmatpush1.msra.mxu0 0.0
  %5110 = vmatprep.subr.mxu0 0.0
  %5111 = vmatpush1.msra.mxu0 0.0
  %5112 = vmatprep.subr.mxu0 0.0
  %5113 = vmatpush1.msra.mxu0 0.0
  %5114 = vmatprep.subr.mxu0 0.0
  %5115 = vmatpush1.msra.mxu0 0.0
  %5116 = vmatprep.subr.mxu0 0.0
  %5117 = vmatpush1.msra.mxu0 0.0
  %5118 = vmatprep.subr.mxu0 0.0
  %5119 = vmatpush1.msra.mxu0 0.0
  %5120 = vmatprep.subr.mxu0 0.0
  %5121 = vmatpush1.msra.mxu0 0.0
  %5122 = vmatprep.subr.mxu0 0.0
  %5123 = vmatpush1.msra.mxu0 0.0
  %5124 = vmatprep.subr.mxu0 0.0
  %5125 = vmatpush1.msra.mxu0 0.0
  %5126 = vmatprep.subr.mxu0 0.0
  %5127 = vmatpush1.msra.mxu0 0.0
  %5128 = vmatprep.subr.mxu0 0.0
  %5129 = vmatpush1.msra.mxu0 0.0
  %5130 = vmatprep.subr.mxu0 0.0
  %5131 = vmatpush1.msra.mxu0 0.0
  %5132 = vmatprep.subr.mxu0 0.0
  %5133 = vmatpush1.msra.mxu0 0.0
  %5134 = vmatprep.subr.mxu0 0.0
  %5135 = vmatpush1.msra.mxu0 0.0
  %5136 = vmatprep.subr.mxu0 0.0
  %5137 = vmatpush1.msra.mxu0 0.0
  %5138 = vmatprep.subr.mxu0 0.0
  %5139 = vmatpush1.msra.mxu0 0.0
  %5140 = vmatprep.subr.mxu0 0.0
  %5141 = vmatpush1.msra.mxu0 0.0
  %5142 = vmatprep.subr.mxu0 0.0
  %5143 = vmatpush1.msra.mxu0 0.0
  %5144 = vmatprep.subr.mxu0 0.0
  %5145 = vmatpush1.msra.mxu0 0.0
  %5146 = vmatprep.subr.mxu0 0.0
  %5147 = vmatpush1.msra.mxu0 0.0
  %5148 = vmatprep.mubr.f32.mxu0 0.0
  %5149 = vmatmul.mubr.f32.gmra.mrb[0].mxu0 %v4999
  %v5150 = vpop.f32.mrb[0].mxu0
  %v5151 = vadd.f32 0.0, %v5150
  %v5152 = vpop.f32.mrb[0].mxu0
  %v5153 = vadd.f32 0.0, %v5152
  %5154 = vdwg.mxu0
  %v5155 = vld [vmem:[%s9] sm:$0x3]
  %v5156 = vld [vmem:[%s10] sm:$0xff]
  %v5157 = vld [vmem:[%s10 + $0x8] sm:$0xff]
  %v5158 = vld [vmem:[%s10 + $0x10] sm:$0xff]
  %v5159 = vld [vmem:[%s10 + $0x18] sm:$0xff]
  %v5160 = vpack.c.bf16 %v5080, %v5080
  %v5161 = vpack.c.bf16 %v5082, %v5082
  %v5162 = vpack.c.bf16 %v5151, %v5151
  %v5163 = vpack.c.bf16 %v5153, %v5153
  %v5164 = vld [vmem:[%s11] sm:$0xf]
  %v5165 = vld [vmem:[%s11 + $0x4] sm:$0xf]
  %v5166 = vld [vmem:[%s11 + $0x8] sm:$0xf]
  %v5167 = vld [vmem:[%s11 + $0xc] sm:$0xf]
  %v5168 = vld [vmem:[%s11 + $0x10] sm:$0xf]
  %v5169 = vld [vmem:[%s11 + $0x14] sm:$0xf]
  %v5170 = vld [vmem:[%s11 + $0x18] sm:$0xf]
  %v5171 = vld [vmem:[%s11 + $0x1c] sm:$0xf]
  %v5172 = vld [vmem:[%s11 + $0x20] sm:$0xf]
  %v5173 = vld [vmem:[%s11 + $0x24] sm:$0xf]
  %v5174 = vld [vmem:[%s11 + $0x28] sm:$0xf]
  %v5175 = vld [vmem:[%s11 + $0x2c] sm:$0xf]
  %v5176 = vld [vmem:[%s11 + $0x30] sm:$0xf]
  %v5177 = vld [vmem:[%s11 + $0x34] sm:$0xf]
  %v5178 = vld [vmem:[%s11 + $0x38] sm:$0xf]
  %v5179 = vld [vmem:[%s11 + $0x3c] sm:$0xf]
  %v5180 = vld [vmem:[%s11 + $0x40] sm:$0xf]
  %v5181 = vld [vmem:[%s11 + $0x44] sm:$0xf]
  %v5182 = vld [vmem:[%s11 + $0x48] sm:$0xf]
  %v5183 = vld [vmem:[%s11 + $0x4c] sm:$0xf]
  %v5184 = vld [vmem:[%s11 + $0x50] sm:$0xf]
  %v5185 = vld [vmem:[%s11 + $0x54] sm:$0xf]
  %v5186 = vld [vmem:[%s11 + $0x58] sm:$0xf]
  %v5187 = vld [vmem:[%s11 + $0x5c] sm:$0xf]
  %v5188 = vld [vmem:[%s11 + $0x60] sm:$0xf]
  %v5189 = vld [vmem:[%s11 + $0x64] sm:$0xf]
  %v5190 = vld [vmem:[%s11 + $0x68] sm:$0xf]
  %v5191 = vld [vmem:[%s11 + $0x6c] sm:$0xf]
  %v5192 = vld [vmem:[%s11 + $0x70] sm:$0xf]
  %v5193 = vld [vmem:[%s11 + $0x74] sm:$0xf]
  %v5194 = vld [vmem:[%s11 + $0x78] sm:$0xf]
  %v5195 = vld [vmem:[%s11 + $0x7c] sm:$0xf]
  %v5196 = vld [vmem:[%s11 + $0x80] sm:$0xf]
  %v5197 = vld [vmem:[%s11 + $0x84] sm:$0xf]
  %v5198 = vld [vmem:[%s11 + $0x88] sm:$0xf]
  %v5199 = vld [vmem:[%s11 + $0x8c] sm:$0xf]
  %v5200 = vld [vmem:[%s11 + $0x90] sm:$0xf]
  %v5201 = vld [vmem:[%s11 + $0x94] sm:$0xf]
  %v5202 = vld [vmem:[%s11 + $0x98] sm:$0xf]
  %v5203 = vld [vmem:[%s11 + $0x9c] sm:$0xf]
  %v5204 = vld [vmem:[%s11 + $0xa0] sm:$0xf]
  %v5205 = vld [vmem:[%s11 + $0xa4] sm:$0xf]
  %v5206 = vld [vmem:[%s11 + $0xa8] sm:$0xf]
  %v5207 = vld [vmem:[%s11 + $0xac] sm:$0xf]
  %v5208 = vld [vmem:[%s11 + $0xb0] sm:$0xf]
  %v5209 = vld [vmem:[%s11 + $0xb4] sm:$0xf]
  %v5210 = vld [vmem:[%s11 + $0xb8] sm:$0xf]
  %v5211 = vld [vmem:[%s11 + $0xbc] sm:$0xf]
  %v5212 = vld [vmem:[%s11 + $0xc0] sm:$0xf]
  %v5213 = vld [vmem:[%s11 + $0xc4] sm:$0xf]
  %v5214 = vld [vmem:[%s11 + $0xc8] sm:$0xf]
  %v5215 = vld [vmem:[%s11 + $0xcc] sm:$0xf]
  %v5216 = vld [vmem:[%s11 + $0xd0] sm:$0xf]
  %v5217 = vld [vmem:[%s11 + $0xd4] sm:$0xf]
  %v5218 = vld [vmem:[%s11 + $0xd8] sm:$0xf]
  %v5219 = vld [vmem:[%s11 + $0xdc] sm:$0xf]
  %v5220 = vld [vmem:[%s11 + $0xe0] sm:$0xf]
  %v5221 = vld [vmem:[%s11 + $0xe4] sm:$0xf]
  %v5222 = vld [vmem:[%s11 + $0xe8] sm:$0xf]
  %v5223 = vld [vmem:[%s11 + $0xec] sm:$0xf]
  %v5224 = vld [vmem:[%s11 + $0xf0] sm:$0xf]
  %v5225 = vld [vmem:[%s11 + $0xf4] sm:$0xf]
  %v5226 = vld [vmem:[%s11 + $0xf8] sm:$0xf]
  %v5227 = vld [vmem:[%s11 + $0xfc] sm:$0xf]
  %v5292 = vunpack.c.l.b16 %v5164
  %v5293 = vunpack.c.l.b16 %v5165
  %v5294 = vunpack.c.l.b16 %v5166
  %v5295 = vunpack.c.l.b16 %v5167
  %v5296 = vunpack.c.l.b16 %v5168
  %v5297 = vunpack.c.l.b16 %v5169
  %v5298 = vunpack.c.l.b16 %v5170
  %v5299 = vunpack.c.l.b16 %v5171
  %v5300 = vunpack.c.l.b16 %v5172
  %v5301 = vunpack.c.l.b16 %v5173
  %v5302 = vunpack.c.l.b16 %v5174
  %v5303 = vunpack.c.l.b16 %v5175
  %v5304 = vunpack.c.l.b16 %v5176
  %v5305 = vunpack.c.l.b16 %v5177
  %v5306 = vunpack.c.l.b16 %v5178
  %v5307 = vunpack.c.l.b16 %v5179
  %v5308 = vunpack.c.l.b16 %v5180
  %v5309 = vunpack.c.l.b16 %v5181
  %v5310 = vunpack.c.l.b16 %v5182
  %v5311 = vunpack.c.l.b16 %v5183
  %v5312 = vunpack.c.l.b16 %v5184
  %v5313 = vunpack.c.l.b16 %v5185
  %v5314 = vunpack.c.l.b16 %v5186
  %v5315 = vunpack.c.l.b16 %v5187
  %v5316 = vunpack.c.l.b16 %v5188
  %v5317 = vunpack.c.l.b16 %v5189
  %v5318 = vunpack.c.l.b16 %v5190
  %v5319 = vunpack.c.l.b16 %v5191
  %v5320 = vunpack.c.l.b16 %v5192
  %v5321 = vunpack.c.l.b16 %v5193
  %v5322 = vunpack.c.l.b16 %v5194
  %v5323 = vunpack.c.l.b16 %v5195
  %v5324 = vunpack.c.l.b16 %v5196
  %v5325 = vunpack.c.l.b16 %v5197
  %v5326 = vunpack.c.l.b16 %v5198
  %v5327 = vunpack.c.l.b16 %v5199
  %v5328 = vunpack.c.l.b16 %v5200
  %v5329 = vunpack.c.l.b16 %v5201
  %v5330 = vunpack.c.l.b16 %v5202
  %v5331 = vunpack.c.l.b16 %v5203
  %v5332 = vunpack.c.l.b16 %v5204
  %v5333 = vunpack.c.l.b16 %v5205
  %v5334 = vunpack.c.l.b16 %v5206
  %v5335 = vunpack.c.l.b16 %v5207
  %v5336 = vunpack.c.l.b16 %v5208
  %v5337 = vunpack.c.l.b16 %v5209
  %v5338 = vunpack.c.l.b16 %v5210
  %v5339 = vunpack.c.l.b16 %v5211
  %v5340 = vunpack.c.l.b16 %v5212
  %v5341 = vunpack.c.l.b16 %v5213
  %v5342 = vunpack.c.l.b16 %v5214
  %v5343 = vunpack.c.l.b16 %v5215
  %v5344 = vunpack.c.l.b16 %v5216
  %v5345 = vunpack.c.l.b16 %v5217
  %v5346 = vunpack.c.l.b16 %v5218
  %v5347 = vunpack.c.l.b16 %v5219
  %v5348 = vunpack.c.l.b16 %v5220
  %v5349 = vunpack.c.l.b16 %v5221
  %v5350 = vunpack.c.l.b16 %v5222
  %v5351 = vunpack.c.l.b16 %v5223
  %v5352 = vunpack.c.l.b16 %v5224
  %v5353 = vunpack.c.l.b16 %v5225
  %v5354 = vunpack.c.l.b16 %v5226
  %v5355 = vunpack.c.l.b16 %v5227
  %v5356 = vpack.c.b16 %v5293, %v5292
  %v5357 = vpack.c.b16 %v5295, %v5294
  %v5358 = vpack.c.b16 %v5297, %v5296
  %v5359 = vpack.c.b16 %v5299, %v5298
  %v5360 = vpack.c.b16 %v5301, %v5300
  %v5361 = vpack.c.b16 %v5303, %v5302
  %v5362 = vpack.c.b16 %v5305, %v5304
  %v5363 = vpack.c.b16 %v5307, %v5306
  %v5364 = vpack.c.b16 %v5309, %v5308
  %v5365 = vpack.c.b16 %v5311, %v5310
  %v5366 = vpack.c.b16 %v5313, %v5312
  %v5367 = vpack.c.b16 %v5315, %v5314
  %v5368 = vpack.c.b16 %v5317, %v5316
  %v5369 = vpack.c.b16 %v5319, %v5318
  %v5370 = vpack.c.b16 %v5321, %v5320
  %v5371 = vpack.c.b16 %v5323, %v5322
  %v5372 = vpack.c.b16 %v5325, %v5324
  %v5373 = vpack.c.b16 %v5327, %v5326
  %v5374 = vpack.c.b16 %v5329, %v5328
  %v5375 = vpack.c.b16 %v5331, %v5330
  %v5376 = vpack.c.b16 %v5333, %v5332
  %v5377 = vpack.c.b16 %v5335, %v5334
  %v5378 = vpack.c.b16 %v5337, %v5336
  %v5379 = vpack.c.b16 %v5339, %v5338
  %v5380 = vpack.c.b16 %v5341, %v5340
  %v5381 = vpack.c.b16 %v5343, %v5342
  %v5382 = vpack.c.b16 %v5345, %v5344
  %v5383 = vpack.c.b16 %v5347, %v5346
  %v5384 = vpack.c.b16 %v5349, %v5348
  %v5385 = vpack.c.b16 %v5351, %v5350
  %v5386 = vpack.c.b16 %v5353, %v5352
  %v5387 = vpack.c.b16 %v5355, %v5354
  %5420 = vmatprep.subr.bf16.mxu0 0
  %5421 = vmatpush1.bf16.msra.mxu0 %v5356
  %5422 = vmatprep.subr.bf16.mxu0 0
  %5423 = vmatpush1.bf16.msra.mxu0 %v5357
  %5424 = vmatprep.subr.bf16.mxu0 0
  %5425 = vmatpush1.bf16.msra.mxu0 %v5358
  %5426 = vmatprep.subr.bf16.mxu0 0
  %5427 = vmatpush1.bf16.msra.mxu0 %v5359
  %5428 = vmatprep.subr.bf16.mxu0 0
  %5429 = vmatpush1.bf16.msra.mxu0 %v5360
  %5430 = vmatprep.subr.bf16.mxu0 0
  %5431 = vmatpush1.bf16.msra.mxu0 %v5361
  %5432 = vmatprep.subr.bf16.mxu0 0
  %5433 = vmatpush1.bf16.msra.mxu0 %v5362
  %5434 = vmatprep.subr.bf16.mxu0 0
  %5435 = vmatpush1.bf16.msra.mxu0 %v5363
  %5436 = vmatprep.subr.bf16.mxu0 0
  %5437 = vmatpush1.bf16.msra.mxu0 %v5364
  %5438 = vmatprep.subr.bf16.mxu0 0
  %5439 = vmatpush1.bf16.msra.mxu0 %v5365
  %5440 = vmatprep.subr.bf16.mxu0 0
  %5441 = vmatpush1.bf16.msra.mxu0 %v5366
  %5442 = vmatprep.subr.bf16.mxu0 0
  %5443 = vmatpush1.bf16.msra.mxu0 %v5367
  %5444 = vmatprep.subr.bf16.mxu0 0
  %5445 = vmatpush1.bf16.msra.mxu0 %v5368
  %5446 = vmatprep.subr.bf16.mxu0 0
  %5447 = vmatpush1.bf16.msra.mxu0 %v5369
  %5448 = vmatprep.subr.bf16.mxu0 0
  %5449 = vmatpush1.bf16.msra.mxu0 %v5370
  %5450 = vmatprep.subr.bf16.mxu0 0
  %5451 = vmatpush1.bf16.msra.mxu0 %v5371
  %5452 = vmatprep.mubr.bf16.mxu0 %v5161
  %5453 = vmatmul.mubr.bf16.gmra.mrb[0].mxu0 %v5160
  %v5454 = vpop.f32.mrb[0].mxu0
  %v5455 = vadd.f32 0.0, %v5454
  %v5456 = vpop.f32.mrb[0].mxu0
  %v5457 = vpop.f32.mrb[0].mxu0
  %v5458 = vpop.f32.mrb[0].mxu0
  %5459 = vdwg.mxu0
  %5460 = vmatprep.subr.bf16.mxu0 0
  %5461 = vmatpush1.bf16.msra.mxu0 %v5372
  %5462 = vmatprep.subr.bf16.mxu0 0
  %5463 = vmatpush1.bf16.msra.mxu0 %v5373
  %5464 = vmatprep.subr.bf16.mxu0 0
  %5465 = vmatpush1.bf16.msra.mxu0 %v5374
  %5466 = vmatprep.subr.bf16.mxu0 0
  %5467 = vmatpush1.bf16.msra.mxu0 %v5375
  %5468 = vmatprep.subr.bf16.mxu0 0
  %5469 = vmatpush1.bf16.msra.mxu0 %v5376
  %5470 = vmatprep.subr.bf16.mxu0 0
  %5471 = vmatpush1.bf16.msra.mxu0 %v5377
  %5472 = vmatprep.subr.bf16.mxu0 0
  %5473 = vmatpush1.bf16.msra.mxu0 %v5378
  %5474 = vmatprep.subr.bf16.mxu0 0
  %5475 = vmatpush1.bf16.msra.mxu0 %v5379
  %5476 = vmatprep.subr.bf16.mxu0 0
  %5477 = vmatpush1.bf16.msra.mxu0 %v5380
  %5478 = vmatprep.subr.bf16.mxu0 0
  %5479 = vmatpush1.bf16.msra.mxu0 %v5381
  %5480 = vmatprep.subr.bf16.mxu0 0
  %5481 = vmatpush1.bf16.msra.mxu0 %v5382
  %5482 = vmatprep.subr.bf16.mxu0 0
  %5483 = vmatpush1.bf16.msra.mxu0 %v5383
  %5484 = vmatprep.subr.bf16.mxu0 0
  %5485 = vmatpush1.bf16.msra.mxu0 %v5384
  %5486 = vmatprep.subr.bf16.mxu0 0
  %5487 = vmatpush1.bf16.msra.mxu0 %v5385
  %5488 = vmatprep.subr.bf16.mxu0 0
  %5489 = vmatpush1.bf16.msra.mxu0 %v5386
  %5490 = vmatprep.subr.bf16.mxu0 0
  %5491 = vmatpush1.bf16.msra.mxu0 %v5387
  %5492 = vmatprep.mubr.bf16.mxu0 %v5163
  %5493 = vmatmul.mubr.bf16.gmra.mrb[0].mxu0 %v5162
  %v5494 = vpop.f32.mrb[0].mxu0
  %v5495 = vadd.f32 %v5455, %v5494
  %v5496 = vpop.f32.mrb[0].mxu0
  %v5497 = vpop.f32.mrb[0].mxu0
  %v5498 = vpop.f32.mrb[0].mxu0
  %5499 = vdwg.mxu0
  %vm5500 = vcmask 261120
  %v5502 = vsel %vm5500, %v5155, 0
  %5504 = vmatprep.subr.mxu0 0.0
  %5505 = vmatpush1.msra.mxu0 %v5156
  %5506 = vmatprep.subr.mxu0 0.0
  %5507 = vmatpush1.msra.mxu0 %v5157
  %5508 = vmatprep.subr.mxu0 0.0
  %5509 = vmatpush1.msra.mxu0 %v5158
  %5510 = vmatprep.subr.mxu0 0.0
  %5511 = vmatpush1.msra.mxu0 %v5159
  %5512 = vmatprep.subr.mxu0 0.0
  %5513 = vmatpush1.msra.mxu0 0.0
  %5514 = vmatprep.subr.mxu0 0.0
  %5515 = vmatpush1.msra.mxu0 0.0
  %5516 = vmatprep.subr.mxu0 0.0
  %5517 = vmatpush1.msra.mxu0 0.0
  %5518 = vmatprep.subr.mxu0 0.0
  %5519 = vmatpush1.msra.mxu0 0.0
  %5520 = vmatprep.subr.mxu0 0.0
  %5521 = vmatpush1.msra.mxu0 0.0
  %5522 = vmatprep.subr.mxu0 0.0
  %5523 = vmatpush1.msra.mxu0 0.0
  %5524 = vmatprep.subr.mxu0 0.0
  %5525 = vmatpush1.msra.mxu0 0.0
  %5526 = vmatprep.subr.mxu0 0.0
  %5527 = vmatpush1.msra.mxu0 0.0
  %5528 = vmatprep.subr.mxu0 0.0
  %5529 = vmatpush1.msra.mxu0 0.0
  %5530 = vmatprep.subr.mxu0 0.0
  %5531 = vmatpush1.msra.mxu0 0.0
  %5532 = vmatprep.subr.mxu0 0.0
  %5533 = vmatpush1.msra.mxu0 0.0
  %5534 = vmatprep.subr.mxu0 0.0
  %5535 = vmatpush1.msra.mxu0 0.0
  %5536 = vmatprep.subr.mxu0 0.0
  %5537 = vmatpush1.msra.mxu0 0.0
  %5538 = vmatprep.subr.mxu0 0.0
  %5539 = vmatpush1.msra.mxu0 0.0
  %5540 = vmatprep.subr.mxu0 0.0
  %5541 = vmatpush1.msra.mxu0 0.0
  %5542 = vmatprep.subr.mxu0 0.0
  %5543 = vmatpush1.msra.mxu0 0.0
  %5544 = vmatprep.subr.mxu0 0.0
  %5545 = vmatpush1.msra.mxu0 0.0
  %5546 = vmatprep.subr.mxu0 0.0
  %5547 = vmatpush1.msra.mxu0 0.0
  %5548 = vmatprep.subr.mxu0 0.0
  %5549 = vmatpush1.msra.mxu0 0.0
  %5550 = vmatprep.subr.mxu0 0.0
  %5551 = vmatpush1.msra.mxu0 0.0
  %5552 = vmatprep.subr.mxu0 0.0
  %5553 = vmatpush1.msra.mxu0 0.0
  %5554 = vmatprep.subr.mxu0 0.0
  %5555 = vmatpush1.msra.mxu0 0.0
  %5556 = vmatprep.subr.mxu0 0.0
  %5557 = vmatpush1.msra.mxu0 0.0
  %5558 = vmatprep.subr.mxu0 0.0
  %5559 = vmatpush1.msra.mxu0 0.0
  %5560 = vmatprep.subr.mxu0 0.0
  %5561 = vmatpush1.msra.mxu0 0.0
  %5562 = vmatprep.subr.mxu0 0.0
  %5563 = vmatpush1.msra.mxu0 0.0
  %5564 = vmatprep.subr.mxu0 0.0
  %5565 = vmatpush1.msra.mxu0 0.0
  %5566 = vmatprep.subr.mxu0 0.0
  %5567 = vmatpush1.msra.mxu0 0.0
  %5568 = vmatprep.mubr.f32.mxu0 0.0
  %5569 = vmatmul.mubr.f32.gmra.mrb[0].mxu0 %v5502
  %v5570 = vpop.f32.mrb[0].mxu0
  %v5571 = vadd.f32 %v5495, %v5570
  %v5572 = vpop.f32.mrb[0].mxu0
  %5573 = vdwg.mxu0
  %v5574 = vld [vmem:[%s12] sm:$0x1]
  %v5576 = vlaneseq
  %v5577 = vshrl.u32 %v5576, 7
  %v5578 = vsub.s32 0, %v5577
  %v5579 = vrot.slane %v5574, %v5578
  %v5581 = vadd.f32 %v5571, %v5579
  %v5582 = vxor.u32 %v5581, 2147483648
  %v5583 = vmul.f32 %v5582, 1.442695
  %v5584 = vpow.pop %v5583
  %v5585 = vadd.f32 %v5584, 1.0
  %v5586 = vrcp.pop %v5585
  %v5587 = vmul.f32 1.0, %v5586
  %vm5588 = vcmask 41984
  %5589 = vst.msk [vmem:[%s13] sm:$0x3] %vm5588, %v5587
  // Predicated region
  $region54: #{run.3} parent=0 // pred_check
    _
  $region55: #{run.3} parent=0 // pred_check_branch
    %5591 = sbr.rel (0) target = $region57
  $region56: #{run.3} parent=0 // pred_region
    _
  $region57: #{run.3} parent=0 // pred_fallthru
    _
  // Predicated region
  $region58: #{run.3} parent=0 // pred_check
    _
  $region59: #{run.3} parent=0 // pred_check_branch
    %5593 = sbr.rel (0) target = $region61
  $region60: #{run.3} parent=0 // pred_region
    _
  $region61: #{run.3} parent=0 // pred_fallthru
    _
  // Predicated region
  $region62: #{run.3} parent=0 // pred_check
    _
  $region63: #{run.3} parent=0 // pred_check_branch
    %5595 = sbr.rel (0) target = $region65
  $region64: #{run.3} parent=0 // pred_region
    _
  $region65: #{run.3} parent=0 // pred_fallthru
    _
  // Predicated region
  $region66: #{run.3} parent=0 // pred_check
    _
  $region67: #{run.3} parent=0 // pred_check_branch
    %5597 = sbr.rel (0) target = $region69
  $region68: #{run.3} parent=0 // pred_region
    _
  $region69: #{run.3} parent=0 // pred_fallthru
    _

</llo_original>
